<compile_context>
chip_gen: v7x
topology: tpu7x:2x2x1
jax: 0.10.0
libtpu: 0.0.40
codegen_flags: <defaults>
</compile_context>

<pallas_src>
import numpy as np
import jax
import jax.numpy as jnp
from jax import lax
from jax.experimental import pallas as pl
from jax.experimental.pallas import tpu as pltpu

SOS_TOKEN = 2


def _decoder_kernel(emb_ref, embT_ref, projw_ref, projb_ref, enc_ref,
                    w_rz_ref, w_n_ref, b_rz_ref, b_n_ref,
                    mem_ref, gp_ref,
                    vocab_out_ref, ptr_out_ref,
                    x_ref, h_ref):
    t_chunk, Bh, V = vocab_out_ref.shape
    E = emb_ref.shape[1]
    f32 = jnp.float32
    w_dt = emb_ref.dtype                      # parameter / MXU-operand dtype

    # loop-invariant iota (JAX does not CSE broadcasts -> hoist out of the loop)
    iota_v = lax.broadcasted_iota(jnp.int32, (Bh, V), 1)

    # ---- first T-chunk: initialize the carried decoder state -----------------
    @pl.when(pl.program_id(1) == 0)
    def _init():
        # hidden = relu(projector(encode_hidden))
        h0 = jnp.dot(enc_ref[...].astype(w_dt), projw_ref[...],
                     preferred_element_type=f32) + projb_ref[...]
        h_ref[...] = jnp.maximum(h0, 0.0)
        # decoder_input = SOS for every batch row -> x0 = emb[SOS] broadcast
        x_ref[...] = jnp.broadcast_to(
            emb_ref[pl.ds(SOS_TOKEN, 1), :].astype(f32), (Bh, E))

    # ---- greedy decode over this chunk (state carried in registers) ----------
    def step(tl, carry):
        x, h = carry
        xh = jnp.concatenate([x, h], axis=1).astype(w_dt)     # (Bh, 2E)
        xc = x.astype(w_dt)
        hc = h.astype(w_dt)

        # single-step GRU cell, PyTorch gate order (r, z, n); K-fused r/z dots.
        r = jax.nn.sigmoid(
            jnp.dot(xh, w_rz_ref[0], preferred_element_type=f32) + b_rz_ref[0])
        z = jax.nn.sigmoid(
            jnp.dot(xh, w_rz_ref[1], preferred_element_type=f32) + b_rz_ref[1])
        gi_n = jnp.dot(xc, w_n_ref[0], preferred_element_type=f32) + b_n_ref[0]
        gh_n = jnp.dot(hc, w_n_ref[1], preferred_element_type=f32) + b_n_ref[1]
        n = jnp.tanh(gi_n + r * gh_n)
        h_new = (1.0 - z) * n + z * h

        # extKnow global-pointer attention: mem is (Bh, E, M) so the reduce is a
        # sublane-axis sum and the (Bh, M) result is already lane-major; gp is
        # applied after the contraction (exact reassociation, no m_a tensor).
        prob_logits = jnp.sum(mem_ref[...] * h_new[:, :, None], axis=1) * gp_ref[...]
        ptr_out_ref[pl.ds(tl, 1)] = prob_logits[None].astype(ptr_out_ref.dtype)

        # attend_vocab: p_vocab = hidden @ emb^T via the pre-transposed emb_T.
        p_vocab = jnp.dot(h_new.astype(w_dt), embT_ref[...],
                          preferred_element_type=f32)          # (Bh, V)
        vocab_out_ref[pl.ds(tl, 1)] = p_vocab[None].astype(vocab_out_ref.dtype)

        # greedy topk(1) (first-occurrence tie-break, == argmax) + next-input
        # embedding lookup via one-hot matmul built directly in the weight dtype.
        mx = jnp.max(p_vocab, axis=-1, keepdims=True)
        cand = jnp.where(p_vocab == mx, iota_v, V)
        topvi = jnp.min(cand, axis=-1, keepdims=True)          # (Bh, 1) int32
        onehot = (iota_v == topvi).astype(w_dt)
        x_next = jnp.dot(onehot, emb_ref[...], preferred_element_type=f32)
        return (x_next, h_new)

    x_fin, h_fin = lax.fori_loop(0, t_chunk, step, (x_ref[...], h_ref[...]),
                                 unroll=True)
    # carry (x, h) to the next T-chunk
    x_ref[...] = x_fin
    h_ref[...] = h_fin


def local_memory_decoder(emb_w, proj_w_t, proj_b, enc_hidden,
                         w_ih_t, w_hh_t, b_ih, b_hh,
                         memory, global_pointer, max_target_length,
                         param_dtype=jnp.float32,
                         vocab_out_dtype=jnp.float32,
                         t_chunk=8, batch_shards=1):
    V, E = emb_w.shape
    B = enc_hidden.shape[0]
    M = memory.shape[1]
    T = int(max_target_length)
    f32 = jnp.float32

    assert B % batch_shards == 0, "batch_shards must divide the batch size"
    Bh = B // batch_shards

    # largest chunk <= requested that divides T: outputs stay exactly (T, ...)
    # (no padded writes, no post-kernel slice copy).
    t_chunk = max(d for d in range(1, min(int(t_chunk), T) + 1) if T % d == 0)
    n_chunks = T // t_chunk

    # ---- parameter packing (host side, once) ---------------------------------
    emb = emb_w.astype(param_dtype)
    embT = jnp.transpose(emb_w).astype(param_dtype)            # (E, V)
    projw = proj_w_t.astype(param_dtype)
    projb = proj_b.astype(f32)

    # PyTorch GRU weights (E, 3E) / biases (1, 3E), gate order r, z, n.
    wih3 = jnp.transpose(w_ih_t.reshape(E, 3, E), (1, 0, 2))   # (3, E, E)
    whh3 = jnp.transpose(w_hh_t.reshape(E, 3, E), (1, 0, 2))
    bih3 = jnp.transpose(b_ih.reshape(1, 3, E), (1, 0, 2))     # (3, 1, E)
    bhh3 = jnp.transpose(b_hh.reshape(1, 3, E), (1, 0, 2))
    # r/z gates: stack [W_ih_g ; W_hh_g] along K so [x ; h] @ W_g is one dot.
    w_rz = jnp.stack([jnp.concatenate([wih3[0], whh3[0]], axis=0),
                      jnp.concatenate([wih3[1], whh3[1]], axis=0)],
                     axis=0).astype(param_dtype)               # (2, 2E, E)
    b_rz = jnp.stack([bih3[0] + bhh3[0], bih3[1] + bhh3[1]],
                     axis=0).astype(f32)                       # (2, 1, E)
    w_n = jnp.stack([wih3[2], whh3[2]], axis=0).astype(param_dtype)   # (2, E, E)
    b_n = jnp.stack([bih3[2], bhh3[2]], axis=0).astype(f32)           # (2, 1, E)

    # extKnow memory transposed (B, E, M), unpadded; elementwise path stays f32.
    memT = jnp.transpose(memory, (0, 2, 1)).astype(f32)
    gp = global_pointer.astype(f32)
    enc = enc_hidden.astype(f32)

    # ---- VMEM budget (resident buffers * 2 for pipelining + headroom) --------
    def nbytes(shape, dt):
        n = 1
        for d in shape:
            n *= int(d)
        return n * jnp.dtype(dt).itemsize

    resident = (
        nbytes((V, E), param_dtype) + nbytes((E, V), param_dtype)
        + nbytes((2 * E, E), param_dtype) + nbytes((1, E), f32)
        + nbytes((Bh, 2 * E), f32)
        + nbytes((2, 2 * E, E), param_dtype) + nbytes((2, E, E), param_dtype)
        + 2 * nbytes((2, 1, E), f32)
        + nbytes((Bh, E, M), f32) + nbytes((Bh, M), f32)
        + nbytes((t_chunk, Bh, V), vocab_out_dtype) + nbytes((t_chunk, Bh, M), f32)
        + 2 * nbytes((Bh, E), f32))
    # Cap v7x-safe (64 MiB VMEM per core); on v5e/v6e (128 MiB) this can be raised
    # to ~100 MiB if bigger T-chunks are wanted.
    vmem_limit = min(max(2 * resident + (8 << 20), 32 << 20), 56 << 20)

    grid_spec = pltpu.PrefetchScalarGridSpec(
        num_scalar_prefetch=0,
        grid=(batch_shards, n_chunks),     # (parallel batch shards, T-chunks)
        in_specs=[
            pl.BlockSpec((V, E), lambda c, t: (0, 0)),            # emb
            pl.BlockSpec((E, V), lambda c, t: (0, 0)),            # emb^T
            pl.BlockSpec((2 * E, E), lambda c, t: (0, 0)),        # projector W^T
            pl.BlockSpec((1, E), lambda c, t: (0, 0)),            # projector b
            pl.BlockSpec((Bh, 2 * E), lambda c, t: (c, 0)),       # encode_hidden
            pl.BlockSpec((2, 2 * E, E), lambda c, t: (0, 0, 0)),  # fused r/z W
            pl.BlockSpec((2, E, E), lambda c, t: (0, 0, 0)),      # n-gate W
            pl.BlockSpec((2, 1, E), lambda c, t: (0, 0, 0)),      # fused r/z b
            pl.BlockSpec((2, 1, E), lambda c, t: (0, 0, 0)),      # n-gate b
            pl.BlockSpec((Bh, E, M), lambda c, t: (c, 0, 0)),     # memory (B,E,M)
            pl.BlockSpec((Bh, M), lambda c, t: (c, 0)),           # global pointer
        ],
        out_specs=[
            pl.BlockSpec((t_chunk, Bh, V), lambda c, t: (t, c, 0)),
            pl.BlockSpec((t_chunk, Bh, M), lambda c, t: (t, c, 0)),
        ],
        scratch_shapes=[
            pltpu.VMEM((Bh, E), f32),     # x  (next decoder-input embedding)
            pltpu.VMEM((Bh, E), f32),     # h  (GRU hidden state)
        ],
    )

    vocab_out, ptr_out = pl.pallas_call(
        _decoder_kernel,
        out_shape=(jax.ShapeDtypeStruct((T, B, V), vocab_out_dtype),
                   jax.ShapeDtypeStruct((T, B, M), f32)),
        grid_spec=grid_spec,
        compiler_params=pltpu.CompilerParams(
            dimension_semantics=("parallel", "arbitrary"),
            vmem_limit_bytes=int(vmem_limit)),
    )(emb, embT, projw, projb, enc, w_rz, w_n, b_rz, b_n, memT, gp)
    return vocab_out, ptr_out


def reference(emb_w, proj_w_t, proj_b, enc_hidden,
              w_ih_t, w_hh_t, b_ih, b_hh, memory, global_pointer, T):
    """Pure-JAX (f32) reference of the same forward semantics."""
    V, E = emb_w.shape
    B = enc_hidden.shape[0]
    h = jnp.maximum(enc_hidden @ proj_w_t + proj_b, 0.0)
    dec_in = jnp.full((B,), SOS_TOKEN, jnp.int32)
    vocab_out, ptr_out = [], []
    for _ in range(T):
        x = emb_w[dec_in]
        gi = x @ w_ih_t + b_ih
        gh = h @ w_hh_t + b_hh
        r = jax.nn.sigmoid(gi[:, 0:E] + gh[:, 0:E])
        z = jax.nn.sigmoid(gi[:, E:2 * E] + gh[:, E:2 * E])
        n = jnp.tanh(gi[:, 2 * E:3 * E] + r * gh[:, 2 * E:3 * E])
        h = (1.0 - z) * n + z * h
        m_a = memory * global_pointer[:, :, None]
        prob_logits = jnp.sum(m_a * h[:, None, :], axis=2)
        p_vocab = h @ emb_w.T
        ptr_out.append(prob_logits)
        vocab_out.append(p_vocab)
        dec_in = jnp.argmax(p_vocab, axis=-1).astype(jnp.int32)
    return jnp.stack(vocab_out), jnp.stack(ptr_out)


if __name__ == "__main__":
    E, V, M = 64, 128, 16
    key = jax.random.PRNGKey(0)
    ks = jax.random.split(key, 14)
    s = 0.3
    emb_w = jax.random.normal(ks[0], (V, E), jnp.float32) * 0.5
    proj_w_t = jax.random.normal(ks[1], (2 * E, E), jnp.float32) * s
    proj_b = jax.random.normal(ks[2], (1, E), jnp.float32) * s
    w_ih_t = jax.random.normal(ks[3], (E, 3 * E), jnp.float32) * s
    w_hh_t = jax.random.normal(ks[4], (E, 3 * E), jnp.float32) * s
    b_ih = jax.random.normal(ks[5], (1, 3 * E), jnp.float32) * s
    b_hh = jax.random.normal(ks[6], (1, 3 * E), jnp.float32) * s

    # ---- run 1: f32, B=8, T=6, two T-chunks of 3 (exercises cross-chunk carry)
    B1, T1 = 8, 6
    enc1 = jax.random.normal(ks[7], (B1, 2 * E), jnp.float32)
    mem1 = jax.random.normal(ks[8], (B1, M, E), jnp.float32) * 0.5
    gp1 = jax.nn.sigmoid(jax.random.normal(ks[9], (B1, M), jnp.float32))
    vk1, pk1 = local_memory_decoder(emb_w, proj_w_t, proj_b, enc1,
                                    w_ih_t, w_hh_t, b_ih, b_hh, mem1, gp1, T1,
                                    t_chunk=3)
    jax.block_until_ready((vk1, pk1))
    vr1, pr1 = reference(emb_w, proj_w_t, proj_b, enc1,
                         w_ih_t, w_hh_t, b_ih, b_hh, mem1, gp1, T1)
    np.testing.assert_allclose(np.asarray(vk1), np.asarray(vr1), rtol=2e-3, atol=2e-3)
    np.testing.assert_allclose(np.asarray(pk1), np.asarray(pr1), rtol=2e-3, atol=2e-3)

    # ---- run 2: batch split over 2 shards (v7x megacore path; exact on 1-TC too)
    B2, T2 = 16, 8
    enc2 = jax.random.normal(ks[10], (B2, 2 * E), jnp.float32)
    mem2 = jax.random.normal(ks[11], (B2, M, E), jnp.float32) * 0.5
    gp2 = jax.nn.sigmoid(jax.random.normal(ks[12], (B2, M), jnp.float32))
    vk2, pk2 = local_memory_decoder(emb_w, proj_w_t, proj_b, enc2,
                                    w_ih_t, w_hh_t, b_ih, b_hh, mem2, gp2, T2,
                                    t_chunk=4, batch_shards=2)
    jax.block_until_ready((vk2, pk2))
    vr2, pr2 = reference(emb_w, proj_w_t, proj_b, enc2,
                         w_ih_t, w_hh_t, b_ih, b_hh, mem2, gp2, T2)
    np.testing.assert_allclose(np.asarray(vk2), np.asarray(vr2), rtol=2e-3, atol=2e-3)
    np.testing.assert_allclose(np.asarray(pk2), np.asarray(pr2), rtol=2e-3, atol=2e-3)

    # ---- run 3: bf16 params + bf16 vocab logits (v6e/v7x MXU-native; halves the
    # dominant (T,B,V) writeback on v5e). Greedy argmax feedback makes elementwise
    # agreement with the f32 reference ill-conditioned -> finite check only.
    vb, pb = local_memory_decoder(emb_w, proj_w_t, proj_b, enc1,
                                  w_ih_t, w_hh_t, b_ih, b_hh, mem1, gp1, T1,
                                  param_dtype=jnp.bfloat16,
                                  vocab_out_dtype=jnp.bfloat16)
    jax.block_until_ready((vb, pb))
    assert np.isfinite(np.asarray(vb.astype(jnp.float32))).all()
    assert np.isfinite(np.asarray(pb)).all()

    print("KERNEL_OK")
</pallas_src>

<mosaic_0001>
module attributes {stable_mosaic.version = 11 : i64} {
  func.func @_decoder_kernel(%arg0: i32, %arg1: i32, %arg2: memref<128x64xf32, #tpu.memory_space<vmem>>, %arg3: memref<64x128xf32, #tpu.memory_space<vmem>>, %arg4: memref<128x64xf32, #tpu.memory_space<vmem>>, %arg5: memref<1x64xf32, #tpu.memory_space<vmem>>, %arg6: memref<8x128xf32, #tpu.memory_space<vmem>>, %arg7: memref<2x128x64xf32, #tpu.memory_space<vmem>>, %arg8: memref<2x64x64xf32, #tpu.memory_space<vmem>>, %arg9: memref<2x1x64xf32, #tpu.memory_space<vmem>>, %arg10: memref<2x1x64xf32, #tpu.memory_space<vmem>>, %arg11: memref<8x64x16xf32, #tpu.memory_space<vmem>>, %arg12: memref<8x16xf32, #tpu.memory_space<vmem>>, %arg13: memref<3x8x128xf32, #tpu.memory_space<vmem>>, %arg14: memref<3x8x16xf32, #tpu.memory_space<vmem>>, %arg15: memref<8x64xf32, #tpu.memory_space<vmem>>, %arg16: memref<8x64xf32, #tpu.memory_space<vmem>>) attributes {dimension_semantics = [#tpu.dimension_semantics<parallel>, #tpu.dimension_semantics<arbitrary>], iteration_bounds = array<i64: 1, 2>, scalar_prefetch = 0 : i64, scratch_operands = 2 : i64, tpu.core_type = #tpu.core_type<tc>, window_params = [{pipeline_mode = #tpu.pipeline_mode<synchronous>, transform_indices = @transform_0, window_bounds = array<i64: 128, 64>}, {pipeline_mode = #tpu.pipeline_mode<synchronous>, transform_indices = @transform_1, window_bounds = array<i64: 64, 128>}, {pipeline_mode = #tpu.pipeline_mode<synchronous>, transform_indices = @transform_2, window_bounds = array<i64: 128, 64>}, {pipeline_mode = #tpu.pipeline_mode<synchronous>, transform_indices = @transform_3, window_bounds = array<i64: 1, 64>}, {transform_indices = @transform_4, window_bounds = array<i64: 8, 128>}, {pipeline_mode = #tpu.pipeline_mode<synchronous>, transform_indices = @transform_5, window_bounds = array<i64: 2, 128, 64>}, {pipeline_mode = #tpu.pipeline_mode<synchronous>, transform_indices = @transform_6, window_bounds = array<i64: 2, 64, 64>}, {pipeline_mode = #tpu.pipeline_mode<synchronous>, transform_indices = @transform_7, window_bounds = array<i64: 2, 1, 64>}, {pipeline_mode = #tpu.pipeline_mode<synchronous>, transform_indices = @transform_8, window_bounds = array<i64: 2, 1, 64>}, {transform_indices = @transform_9, window_bounds = array<i64: 8, 64, 16>}, {transform_indices = @transform_10, window_bounds = array<i64: 8, 16>}, {transform_indices = @transform_11, window_bounds = array<i64: 3, 8, 128>}, {transform_indices = @transform_12, window_bounds = array<i64: 3, 8, 16>}]} {
    %0 = tpu.iota {dimensions = array<i32: 1>} : vector<8x128xi32>
    %c0_i32 = arith.constant 0 : i32
    %1 = arith.cmpi eq, %arg1, %c0_i32 : i32
    %2 = arith.extui %1 : i1 to i32
    %c0_i32_0 = arith.constant 0 : i32
    %3 = arith.cmpi ne, %2, %c0_i32_0 : i32
    scf.if %3 {
      %c0_156 = arith.constant 0 : index
      %c0_157 = arith.constant 0 : index
      %236 = vector.load %arg6[%c0_156, %c0_157] : memref<8x128xf32, #tpu.memory_space<vmem>>, vector<8x128xf32>
      %c0_158 = arith.constant 0 : index
      %c0_159 = arith.constant 0 : index
      %237 = vector.load %arg4[%c0_158, %c0_159] : memref<128x64xf32, #tpu.memory_space<vmem>>, vector<128x64xf32>
      %cst_160 = arith.constant dense<0.000000e+00> : vector<8x64xf32>
      %238 = tpu.matmul %236, %237, %cst_160 {dimension_numbers = #tpu.dot_dimension_numbers<[1], [0], [0], [1], [0, 0, 1, 1], [], []>} : vector<8x128xf32>, vector<128x64xf32>, vector<8x64xf32> -> vector<8x64xf32>
      %c0_161 = arith.constant 0 : index
      %c0_162 = arith.constant 0 : index
      %239 = vector.load %arg5[%c0_161, %c0_162] : memref<1x64xf32, #tpu.memory_space<vmem>>, vector<1x64xf32>
      %240 = vector.broadcast %239 : vector<1x64xf32> to vector<8x64xf32>
      %241 = arith.addf %238, %240 : vector<8x64xf32>
      %cst_163 = arith.constant 0.000000e+00 : f32
      %242 = vector.broadcast %cst_163 : f32 to vector<8x64xf32>
      %243 = arith.maximumf %241, %242 : vector<8x64xf32>
      %c0_164 = arith.constant 0 : index
      %c0_165 = arith.constant 0 : index
      %244 = vector.load %arg16[%c0_164, %c0_165] : memref<8x64xf32, #tpu.memory_space<vmem>>, vector<8x64xf32>
      tpu.vector_store %arg16[%c0_164, %c0_165], %243 {strides = array<i32>} : memref<8x64xf32, #tpu.memory_space<vmem>>, vector<8x64xf32>,
      %c2 = arith.constant 2 : index
      %c0_166 = arith.constant 0 : index
      %245 = vector.load %arg2[%c2, %c0_166] : memref<128x64xf32, #tpu.memory_space<vmem>>, vector<1x64xf32>
      %246 = vector.shape_cast %245 : vector<1x64xf32> to vector<1x64xf32>
      %247 = vector.broadcast %246 : vector<1x64xf32> to vector<8x64xf32>
      %c0_167 = arith.constant 0 : index
      %c0_168 = arith.constant 0 : index
      %248 = vector.load %arg15[%c0_167, %c0_168] : memref<8x64xf32, #tpu.memory_space<vmem>>, vector<8x64xf32>
      tpu.vector_store %arg15[%c0_167, %c0_168], %247 {strides = array<i32>} : memref<8x64xf32, #tpu.memory_space<vmem>>, vector<8x64xf32>,
    } else {
    }
    %c0 = arith.constant 0 : index
    %c0_1 = arith.constant 0 : index
    %4 = vector.load %arg15[%c0, %c0_1] : memref<8x64xf32, #tpu.memory_space<vmem>>, vector<8x64xf32>
    %c0_2 = arith.constant 0 : index
    %c0_3 = arith.constant 0 : index
    %5 = vector.load %arg16[%c0_2, %c0_3] : memref<8x64xf32, #tpu.memory_space<vmem>>, vector<8x64xf32>
    %c0_i32_4 = arith.constant 0 : i32
    %6 = tpu.concatenate %4, %5 in 1 : vector<8x64xf32>, vector<8x64xf32> -> vector<8x128xf32>
    %c0_5 = arith.constant 0 : index
    %c0_6 = arith.constant 0 : index
    %c0_7 = arith.constant 0 : index
    %7 = vector.load %arg7[%c0_5, %c0_6, %c0_7] : memref<2x128x64xf32, #tpu.memory_space<vmem>>, vector<1x128x64xf32>
    %8 = vector.shape_cast %7 : vector<1x128x64xf32> to vector<128x64xf32>
    %cst = arith.constant dense<0.000000e+00> : vector<8x64xf32>
    %9 = tpu.matmul %6, %8, %cst {dimension_numbers = #tpu.dot_dimension_numbers<[1], [0], [0], [1], [0, 0, 1, 1], [], []>} : vector<8x128xf32>, vector<128x64xf32>, vector<8x64xf32> -> vector<8x64xf32>
    %c0_8 = arith.constant 0 : index
    %c0_9 = arith.constant 0 : index
    %c0_10 = arith.constant 0 : index
    %10 = vector.load %arg9[%c0_8, %c0_9, %c0_10] : memref<2x1x64xf32, #tpu.memory_space<vmem>>, vector<1x1x64xf32>
    %11 = vector.shape_cast %10 : vector<1x1x64xf32> to vector<1x64xf32>
    %12 = vector.broadcast %11 : vector<1x64xf32> to vector<8x64xf32>
    %13 = arith.addf %9, %12 : vector<8x64xf32>
    %14 = arith.negf %13 : vector<8x64xf32>
    %15 = math.exp %14 : vector<8x64xf32>
    %cst_11 = arith.constant 1.000000e+00 : f32
    %16 = vector.broadcast %cst_11 : f32 to vector<8x64xf32>
    %17 = arith.addf %16, %15 : vector<8x64xf32>
    %18 = arith.divf %16, %17 : vector<8x64xf32>
    %c1 = arith.constant 1 : index
    %c0_12 = arith.constant 0 : index
    %c0_13 = arith.constant 0 : index
    %19 = vector.load %arg7[%c1, %c0_12, %c0_13] : memref<2x128x64xf32, #tpu.memory_space<vmem>>, vector<1x128x64xf32>
    %20 = vector.shape_cast %19 : vector<1x128x64xf32> to vector<128x64xf32>
    %cst_14 = arith.constant dense<0.000000e+00> : vector<8x64xf32>
    %21 = tpu.matmul %6, %20, %cst_14 {dimension_numbers = #tpu.dot_dimension_numbers<[1], [0], [0], [1], [0, 0, 1, 1], [], []>} : vector<8x128xf32>, vector<128x64xf32>, vector<8x64xf32> -> vector<8x64xf32>
    %c1_15 = arith.constant 1 : index
    %c0_16 = arith.constant 0 : index
    %c0_17 = arith.constant 0 : index
    %22 = vector.load %arg9[%c1_15, %c0_16, %c0_17] : memref<2x1x64xf32, #tpu.memory_space<vmem>>, vector<1x1x64xf32>
    %23 = vector.shape_cast %22 : vector<1x1x64xf32> to vector<1x64xf32>
    %24 = vector.broadcast %23 : vector<1x64xf32> to vector<8x64xf32>
    %25 = arith.addf %21, %24 : vector<8x64xf32>
    %26 = arith.negf %25 : vector<8x64xf32>
    %27 = math.exp %26 : vector<8x64xf32>
    %cst_18 = arith.constant 1.000000e+00 : f32
    %28 = vector.broadcast %cst_18 : f32 to vector<8x64xf32>
    %29 = arith.addf %28, %27 : vector<8x64xf32>
    %30 = arith.divf %28, %29 : vector<8x64xf32>
    %c0_19 = arith.constant 0 : index
    %c0_20 = arith.constant 0 : index
    %c0_21 = arith.constant 0 : index
    %31 = vector.load %arg8[%c0_19, %c0_20, %c0_21] : memref<2x64x64xf32, #tpu.memory_space<vmem>>, vector<1x64x64xf32>
    %32 = vector.shape_cast %31 : vector<1x64x64xf32> to vector<64x64xf32>
    %cst_22 = arith.constant dense<0.000000e+00> : vector<8x64xf32>
    %33 = tpu.matmul %4, %32, %cst_22 {dimension_numbers = #tpu.dot_dimension_numbers<[1], [0], [0], [1], [0, 0, 1, 1], [], []>} : vector<8x64xf32>, vector<64x64xf32>, vector<8x64xf32> -> vector<8x64xf32>
    %c0_23 = arith.constant 0 : index
    %c0_24 = arith.constant 0 : index
    %c0_25 = arith.constant 0 : index
    %34 = vector.load %arg10[%c0_23, %c0_24, %c0_25] : memref<2x1x64xf32, #tpu.memory_space<vmem>>, vector<1x1x64xf32>
    %35 = vector.shape_cast %34 : vector<1x1x64xf32> to vector<1x64xf32>
    %36 = vector.broadcast %35 : vector<1x64xf32> to vector<8x64xf32>
    %37 = arith.addf %33, %36 : vector<8x64xf32>
    %c1_26 = arith.constant 1 : index
    %c0_27 = arith.constant 0 : index
    %c0_28 = arith.constant 0 : index
    %38 = vector.load %arg8[%c1_26, %c0_27, %c0_28] : memref<2x64x64xf32, #tpu.memory_space<vmem>>, vector<1x64x64xf32>
    %39 = vector.shape_cast %38 : vector<1x64x64xf32> to vector<64x64xf32>
    %cst_29 = arith.constant dense<0.000000e+00> : vector<8x64xf32>
    %40 = tpu.matmul %5, %39, %cst_29 {dimension_numbers = #tpu.dot_dimension_numbers<[1], [0], [0], [1], [0, 0, 1, 1], [], []>} : vector<8x64xf32>, vector<64x64xf32>, vector<8x64xf32> -> vector<8x64xf32>
    %c1_30 = arith.constant 1 : index
    %c0_31 = arith.constant 0 : index
    %c0_32 = arith.constant 0 : index
    %41 = vector.load %arg10[%c1_30, %c0_31, %c0_32] : memref<2x1x64xf32, #tpu.memory_space<vmem>>, vector<1x1x64xf32>
    %42 = vector.shape_cast %41 : vector<1x1x64xf32> to vector<1x64xf32>
    %43 = vector.broadcast %42 : vector<1x64xf32> to vector<8x64xf32>
    %44 = arith.addf %40, %43 : vector<8x64xf32>
    %45 = arith.mulf %18, %44 : vector<8x64xf32>
    %46 = arith.addf %37, %45 : vector<8x64xf32>
    %47 = math.tanh %46 : vector<8x64xf32>
    %cst_33 = arith.constant 1.000000e+00 : f32
    %48 = vector.broadcast %cst_33 : f32 to vector<8x64xf32>
    %49 = arith.subf %48, %30 : vector<8x64xf32>
    %50 = arith.mulf %49, %47 : vector<8x64xf32>
    %51 = arith.mulf %30, %5 : vector<8x64xf32>
    %52 = arith.addf %50, %51 : vector<8x64xf32>
    %c0_34 = arith.constant 0 : index
    %c0_35 = arith.constant 0 : index
    %c0_36 = arith.constant 0 : index
    %53 = vector.load %arg11[%c0_34, %c0_35, %c0_36] : memref<8x64x16xf32, #tpu.memory_space<vmem>>, vector<8x64x16xf32>
    %54 = vector.shape_cast %52 : vector<8x64xf32> to vector<8x64x1xf32>
    %55 = vector.broadcast %54 : vector<8x64x1xf32> to vector<8x64x16xf32>
    %56 = arith.mulf %53, %55 : vector<8x64x16xf32>
    %cst_37 = arith.constant dense<0.000000e+00> : vector<8x16xf32>
    %57 = vector.multi_reduction <add>, %56, %cst_37 [1] : vector<8x64x16xf32> to vector<8x16xf32>
    %c0_38 = arith.constant 0 : index
    %c0_39 = arith.constant 0 : index
    %58 = vector.load %arg12[%c0_38, %c0_39] : memref<8x16xf32, #tpu.memory_space<vmem>>, vector<8x16xf32>
    %59 = arith.mulf %57, %58 : vector<8x16xf32>
    %60 = vector.shape_cast %59 : vector<8x16xf32> to vector<1x8x16xf32>
    %61 = arith.index_cast %c0_i32_4 : i32 to index
    %c0_40 = arith.constant 0 : index
    %c0_41 = arith.constant 0 : index
    %62 = vector.load %arg14[%61, %c0_40, %c0_41] : memref<3x8x16xf32, #tpu.memory_space<vmem>>, vector<1x8x16xf32>
    tpu.vector_store %arg14[%61, %c0_40, %c0_41], %60 {strides = array<i32>} : memref<3x8x16xf32, #tpu.memory_space<vmem>>, vector<1x8x16xf32>,
    %c0_42 = arith.constant 0 : index
    %c0_43 = arith.constant 0 : index
    %63 = vector.load %arg3[%c0_42, %c0_43] : memref<64x128xf32, #tpu.memory_space<vmem>>, vector<64x128xf32>
    %cst_44 = arith.constant dense<0.000000e+00> : vector<8x128xf32>
    %64 = tpu.matmul %52, %63, %cst_44 {dimension_numbers = #tpu.dot_dimension_numbers<[1], [0], [0], [1], [0, 0, 1, 1], [], []>} : vector<8x64xf32>, vector<64x128xf32>, vector<8x128xf32> -> vector<8x128xf32>
    %65 = vector.shape_cast %64 : vector<8x128xf32> to vector<1x8x128xf32>
    %66 = arith.index_cast %c0_i32_4 : i32 to index
    %c0_45 = arith.constant 0 : index
    %c0_46 = arith.constant 0 : index
    %67 = vector.load %arg13[%66, %c0_45, %c0_46] : memref<3x8x128xf32, #tpu.memory_space<vmem>>, vector<1x8x128xf32>
    tpu.vector_store %arg13[%66, %c0_45, %c0_46], %65 {strides = array<i32>} : memref<3x8x128xf32, #tpu.memory_space<vmem>>, vector<1x8x128xf32>,
    %cst_47 = arith.constant dense<0xFF800000> : vector<8xf32>
    %68 = vector.multi_reduction <maximumf>, %64, %cst_47 [1] : vector<8x128xf32> to vector<8xf32>
    %69 = vector.shape_cast %68 : vector<8xf32> to vector<8x1xf32>
    %70 = vector.broadcast %69 : vector<8x1xf32> to vector<8x128xf32>
    %71 = arith.cmpf oeq, %64, %70 : vector<8x128xf32>
    %c128_i32 = arith.constant 128 : i32
    %72 = vector.broadcast %c128_i32 : i32 to vector<8x128xi32>
    %73 = arith.select %71, %0, %72 : vector<8x128xi1>, vector<8x128xi32>
    %cst_48 = arith.constant dense<2147483647> : vector<8xi32>
    %74 = vector.multi_reduction <minsi>, %73, %cst_48 [1] : vector<8x128xi32> to vector<8xi32>
    %75 = vector.shape_cast %74 : vector<8xi32> to vector<8x1xi32>
    %76 = vector.broadcast %75 : vector<8x1xi32> to vector<8x128xi32>
    %77 = arith.cmpi eq, %0, %76 : vector<8x128xi32>
    %78 = arith.extui %77 : vector<8x128xi1> to vector<8x128xi32>
    %79 = arith.sitofp %78 : vector<8x128xi32> to vector<8x128xf32>
    %c0_49 = arith.constant 0 : index
    %c0_50 = arith.constant 0 : index
    %80 = vector.load %arg2[%c0_49, %c0_50] : memref<128x64xf32, #tpu.memory_space<vmem>>, vector<128x64xf32>
    %cst_51 = arith.constant dense<0.000000e+00> : vector<8x64xf32>
    %81 = tpu.matmul %79, %80, %cst_51 {dimension_numbers = #tpu.dot_dimension_numbers<[1], [0], [0], [1], [0, 0, 1, 1], [], []>} : vector<8x128xf32>, vector<128x64xf32>, vector<8x64xf32> -> vector<8x64xf32>
    %c1_i32 = arith.constant 1 : i32
    %82 = tpu.concatenate %81, %52 in 1 : vector<8x64xf32>, vector<8x64xf32> -> vector<8x128xf32>
    %c0_52 = arith.constant 0 : index
    %c0_53 = arith.constant 0 : index
    %c0_54 = arith.constant 0 : index
    %83 = vector.load %arg7[%c0_52, %c0_53, %c0_54] : memref<2x128x64xf32, #tpu.memory_space<vmem>>, vector<1x128x64xf32>
    %84 = vector.shape_cast %83 : vector<1x128x64xf32> to vector<128x64xf32>
    %cst_55 = arith.constant dense<0.000000e+00> : vector<8x64xf32>
    %85 = tpu.matmul %82, %84, %cst_55 {dimension_numbers = #tpu.dot_dimension_numbers<[1], [0], [0], [1], [0, 0, 1, 1], [], []>} : vector<8x128xf32>, vector<128x64xf32>, vector<8x64xf32> -> vector<8x64xf32>
    %c0_56 = arith.constant 0 : index
    %c0_57 = arith.constant 0 : index
    %c0_58 = arith.constant 0 : index
    %86 = vector.load %arg9[%c0_56, %c0_57, %c0_58] : memref<2x1x64xf32, #tpu.memory_space<vmem>>, vector<1x1x64xf32>
    %87 = vector.shape_cast %86 : vector<1x1x64xf32> to vector<1x64xf32>
    %88 = vector.broadcast %87 : vector<1x64xf32> to vector<8x64xf32>
    %89 = arith.addf %85, %88 : vector<8x64xf32>
    %90 = arith.negf %89 : vector<8x64xf32>
    %91 = math.exp %90 : vector<8x64xf32>
    %cst_59 = arith.constant 1.000000e+00 : f32
    %92 = vector.broadcast %cst_59 : f32 to vector<8x64xf32>
    %93 = arith.addf %92, %91 : vector<8x64xf32>
    %94 = arith.divf %92, %93 : vector<8x64xf32>
    %c1_60 = arith.constant 1 : index
    %c0_61 = arith.constant 0 : index
    %c0_62 = arith.constant 0 : index
    %95 = vector.load %arg7[%c1_60, %c0_61, %c0_62] : memref<2x128x64xf32, #tpu.memory_space<vmem>>, vector<1x128x64xf32>
    %96 = vector.shape_cast %95 : vector<1x128x64xf32> to vector<128x64xf32>
    %cst_63 = arith.constant dense<0.000000e+00> : vector<8x64xf32>
    %97 = tpu.matmul %82, %96, %cst_63 {dimension_numbers = #tpu.dot_dimension_numbers<[1], [0], [0], [1], [0, 0, 1, 1], [], []>} : vector<8x128xf32>, vector<128x64xf32>, vector<8x64xf32> -> vector<8x64xf32>
    %c1_64 = arith.constant 1 : index
    %c0_65 = arith.constant 0 : index
    %c0_66 = arith.constant 0 : index
    %98 = vector.load %arg9[%c1_64, %c0_65, %c0_66] : memref<2x1x64xf32, #tpu.memory_space<vmem>>, vector<1x1x64xf32>
    %99 = vector.shape_cast %98 : vector<1x1x64xf32> to vector<1x64xf32>
    %100 = vector.broadcast %99 : vector<1x64xf32> to vector<8x64xf32>
    %101 = arith.addf %97, %100 : vector<8x64xf32>
    %102 = arith.negf %101 : vector<8x64xf32>
    %103 = math.exp %102 : vector<8x64xf32>
    %cst_67 = arith.constant 1.000000e+00 : f32
    %104 = vector.broadcast %cst_67 : f32 to vector<8x64xf32>
    %105 = arith.addf %104, %103 : vector<8x64xf32>
    %106 = arith.divf %104, %105 : vector<8x64xf32>
    %c0_68 = arith.constant 0 : index
    %c0_69 = arith.constant 0 : index
    %c0_70 = arith.constant 0 : index
    %107 = vector.load %arg8[%c0_68, %c0_69, %c0_70] : memref<2x64x64xf32, #tpu.memory_space<vmem>>, vector<1x64x64xf32>
    %108 = vector.shape_cast %107 : vector<1x64x64xf32> to vector<64x64xf32>
    %cst_71 = arith.constant dense<0.000000e+00> : vector<8x64xf32>
    %109 = tpu.matmul %81, %108, %cst_71 {dimension_numbers = #tpu.dot_dimension_numbers<[1], [0], [0], [1], [0, 0, 1, 1], [], []>} : vector<8x64xf32>, vector<64x64xf32>, vector<8x64xf32> -> vector<8x64xf32>
    %c0_72 = arith.constant 0 : index
    %c0_73 = arith.constant 0 : index
    %c0_74 = arith.constant 0 : index
    %110 = vector.load %arg10[%c0_72, %c0_73, %c0_74] : memref<2x1x64xf32, #tpu.memory_space<vmem>>, vector<1x1x64xf32>
    %111 = vector.shape_cast %110 : vector<1x1x64xf32> to vector<1x64xf32>
    %112 = vector.broadcast %111 : vector<1x64xf32> to vector<8x64xf32>
    %113 = arith.addf %109, %112 : vector<8x64xf32>
    %c1_75 = arith.constant 1 : index
    %c0_76 = arith.constant 0 : index
    %c0_77 = arith.constant 0 : index
    %114 = vector.load %arg8[%c1_75, %c0_76, %c0_77] : memref<2x64x64xf32, #tpu.memory_space<vmem>>, vector<1x64x64xf32>
    %115 = vector.shape_cast %114 : vector<1x64x64xf32> to vector<64x64xf32>
    %cst_78 = arith.constant dense<0.000000e+00> : vector<8x64xf32>
    %116 = tpu.matmul %52, %115, %cst_78 {dimension_numbers = #tpu.dot_dimension_numbers<[1], [0], [0], [1], [0, 0, 1, 1], [], []>} : vector<8x64xf32>, vector<64x64xf32>, vector<8x64xf32> -> vector<8x64xf32>
    %c1_79 = arith.constant 1 : index
    %c0_80 = arith.constant 0 : index
    %c0_81 = arith.constant 0 : index
    %117 = vector.load %arg10[%c1_79, %c0_80, %c0_81] : memref<2x1x64xf32, #tpu.memory_space<vmem>>, vector<1x1x64xf32>
    %118 = vector.shape_cast %117 : vector<1x1x64xf32> to vector<1x64xf32>
    %119 = vector.broadcast %118 : vector<1x64xf32> to vector<8x64xf32>
    %120 = arith.addf %116, %119 : vector<8x64xf32>
    %121 = arith.mulf %94, %120 : vector<8x64xf32>
    %122 = arith.addf %113, %121 : vector<8x64xf32>
    %123 = math.tanh %122 : vector<8x64xf32>
    %cst_82 = arith.constant 1.000000e+00 : f32
    %124 = vector.broadcast %cst_82 : f32 to vector<8x64xf32>
    %125 = arith.subf %124, %106 : vector<8x64xf32>
    %126 = arith.mulf %125, %123 : vector<8x64xf32>
    %127 = arith.mulf %106, %52 : vector<8x64xf32>
    %128 = arith.addf %126, %127 : vector<8x64xf32>
    %c0_83 = arith.constant 0 : index
    %c0_84 = arith.constant 0 : index
    %c0_85 = arith.constant 0 : index
    %129 = vector.load %arg11[%c0_83, %c0_84, %c0_85] : memref<8x64x16xf32, #tpu.memory_space<vmem>>, vector<8x64x16xf32>
    %130 = vector.shape_cast %128 : vector<8x64xf32> to vector<8x64x1xf32>
    %131 = vector.broadcast %130 : vector<8x64x1xf32> to vector<8x64x16xf32>
    %132 = arith.mulf %129, %131 : vector<8x64x16xf32>
    %cst_86 = arith.constant dense<0.000000e+00> : vector<8x16xf32>
    %133 = vector.multi_reduction <add>, %132, %cst_86 [1] : vector<8x64x16xf32> to vector<8x16xf32>
    %c0_87 = arith.constant 0 : index
    %c0_88 = arith.constant 0 : index
    %134 = vector.load %arg12[%c0_87, %c0_88] : memref<8x16xf32, #tpu.memory_space<vmem>>, vector<8x16xf32>
    %135 = arith.mulf %133, %134 : vector<8x16xf32>
    %136 = vector.shape_cast %135 : vector<8x16xf32> to vector<1x8x16xf32>
    %137 = arith.index_cast %c1_i32 : i32 to index
    %c0_89 = arith.constant 0 : index
    %c0_90 = arith.constant 0 : index
    %138 = vector.load %arg14[%137, %c0_89, %c0_90] : memref<3x8x16xf32, #tpu.memory_space<vmem>>, vector<1x8x16xf32>
    tpu.vector_store %arg14[%137, %c0_89, %c0_90], %136 {strides = array<i32>} : memref<3x8x16xf32, #tpu.memory_space<vmem>>, vector<1x8x16xf32>,
    %c0_91 = arith.constant 0 : index
    %c0_92 = arith.constant 0 : index
    %139 = vector.load %arg3[%c0_91, %c0_92] : memref<64x128xf32, #tpu.memory_space<vmem>>, vector<64x128xf32>
    %cst_93 = arith.constant dense<0.000000e+00> : vector<8x128xf32>
    %140 = tpu.matmul %128, %139, %cst_93 {dimension_numbers = #tpu.dot_dimension_numbers<[1], [0], [0], [1], [0, 0, 1, 1], [], []>} : vector<8x64xf32>, vector<64x128xf32>, vector<8x128xf32> -> vector<8x128xf32>
    %141 = vector.shape_cast %140 : vector<8x128xf32> to vector<1x8x128xf32>
    %142 = arith.index_cast %c1_i32 : i32 to index
    %c0_94 = arith.constant 0 : index
    %c0_95 = arith.constant 0 : index
    %143 = vector.load %arg13[%142, %c0_94, %c0_95] : memref<3x8x128xf32, #tpu.memory_space<vmem>>, vector<1x8x128xf32>
    tpu.vector_store %arg13[%142, %c0_94, %c0_95], %141 {strides = array<i32>} : memref<3x8x128xf32, #tpu.memory_space<vmem>>, vector<1x8x128xf32>,
    %cst_96 = arith.constant dense<0xFF800000> : vector<8xf32>
    %144 = vector.multi_reduction <maximumf>, %140, %cst_96 [1] : vector<8x128xf32> to vector<8xf32>
    %145 = vector.shape_cast %144 : vector<8xf32> to vector<8x1xf32>
    %146 = vector.broadcast %145 : vector<8x1xf32> to vector<8x128xf32>
    %147 = arith.cmpf oeq, %140, %146 : vector<8x128xf32>
    %c128_i32_97 = arith.constant 128 : i32
    %148 = vector.broadcast %c128_i32_97 : i32 to vector<8x128xi32>
    %149 = arith.select %147, %0, %148 : vector<8x128xi1>, vector<8x128xi32>
    %cst_98 = arith.constant dense<2147483647> : vector<8xi32>
    %150 = vector.multi_reduction <minsi>, %149, %cst_98 [1] : vector<8x128xi32> to vector<8xi32>
    %151 = vector.shape_cast %150 : vector<8xi32> to vector<8x1xi32>
    %152 = vector.broadcast %151 : vector<8x1xi32> to vector<8x128xi32>
    %153 = arith.cmpi eq, %0, %152 : vector<8x128xi32>
    %154 = arith.extui %153 : vector<8x128xi1> to vector<8x128xi32>
    %155 = arith.sitofp %154 : vector<8x128xi32> to vector<8x128xf32>
    %c0_99 = arith.constant 0 : index
    %c0_100 = arith.constant 0 : index
    %156 = vector.load %arg2[%c0_99, %c0_100] : memref<128x64xf32, #tpu.memory_space<vmem>>, vector<128x64xf32>
    %cst_101 = arith.constant dense<0.000000e+00> : vector<8x64xf32>
    %157 = tpu.matmul %155, %156, %cst_101 {dimension_numbers = #tpu.dot_dimension_numbers<[1], [0], [0], [1], [0, 0, 1, 1], [], []>} : vector<8x128xf32>, vector<128x64xf32>, vector<8x64xf32> -> vector<8x64xf32>
    %c2_i32 = arith.constant 2 : i32
    %158 = tpu.concatenate %157, %128 in 1 : vector<8x64xf32>, vector<8x64xf32> -> vector<8x128xf32>
    %c0_102 = arith.constant 0 : index
    %c0_103 = arith.constant 0 : index
    %c0_104 = arith.constant 0 : index
    %159 = vector.load %arg7[%c0_102, %c0_103, %c0_104] : memref<2x128x64xf32, #tpu.memory_space<vmem>>, vector<1x128x64xf32>
    %160 = vector.shape_cast %159 : vector<1x128x64xf32> to vector<128x64xf32>
    %cst_105 = arith.constant dense<0.000000e+00> : vector<8x64xf32>
    %161 = tpu.matmul %158, %160, %cst_105 {dimension_numbers = #tpu.dot_dimension_numbers<[1], [0], [0], [1], [0, 0, 1, 1], [], []>} : vector<8x128xf32>, vector<128x64xf32>, vector<8x64xf32> -> vector<8x64xf32>
    %c0_106 = arith.constant 0 : index
    %c0_107 = arith.constant 0 : index
    %c0_108 = arith.constant 0 : index
    %162 = vector.load %arg9[%c0_106, %c0_107, %c0_108] : memref<2x1x64xf32, #tpu.memory_space<vmem>>, vector<1x1x64xf32>
    %163 = vector.shape_cast %162 : vector<1x1x64xf32> to vector<1x64xf32>
    %164 = vector.broadcast %163 : vector<1x64xf32> to vector<8x64xf32>
    %165 = arith.addf %161, %164 : vector<8x64xf32>
    %166 = arith.negf %165 : vector<8x64xf32>
    %167 = math.exp %166 : vector<8x64xf32>
    %cst_109 = arith.constant 1.000000e+00 : f32
    %168 = vector.broadcast %cst_109 : f32 to vector<8x64xf32>
    %169 = arith.addf %168, %167 : vector<8x64xf32>
    %170 = arith.divf %168, %169 : vector<8x64xf32>
    %c1_110 = arith.constant 1 : index
    %c0_111 = arith.constant 0 : index
    %c0_112 = arith.constant 0 : index
    %171 = vector.load %arg7[%c1_110, %c0_111, %c0_112] : memref<2x128x64xf32, #tpu.memory_space<vmem>>, vector<1x128x64xf32>
    %172 = vector.shape_cast %171 : vector<1x128x64xf32> to vector<128x64xf32>
    %cst_113 = arith.constant dense<0.000000e+00> : vector<8x64xf32>
    %173 = tpu.matmul %158, %172, %cst_113 {dimension_numbers = #tpu.dot_dimension_numbers<[1], [0], [0], [1], [0, 0, 1, 1], [], []>} : vector<8x128xf32>, vector<128x64xf32>, vector<8x64xf32> -> vector<8x64xf32>
    %c1_114 = arith.constant 1 : index
    %c0_115 = arith.constant 0 : index
    %c0_116 = arith.constant 0 : index
    %174 = vector.load %arg9[%c1_114, %c0_115, %c0_116] : memref<2x1x64xf32, #tpu.memory_space<vmem>>, vector<1x1x64xf32>
    %175 = vector.shape_cast %174 : vector<1x1x64xf32> to vector<1x64xf32>
    %176 = vector.broadcast %175 : vector<1x64xf32> to vector<8x64xf32>
    %177 = arith.addf %173, %176 : vector<8x64xf32>
    %178 = arith.negf %177 : vector<8x64xf32>
    %179 = math.exp %178 : vector<8x64xf32>
    %cst_117 = arith.constant 1.000000e+00 : f32
    %180 = vector.broadcast %cst_117 : f32 to vector<8x64xf32>
    %181 = arith.addf %180, %179 : vector<8x64xf32>
    %182 = arith.divf %180, %181 : vector<8x64xf32>
    %c0_118 = arith.constant 0 : index
    %c0_119 = arith.constant 0 : index
    %c0_120 = arith.constant 0 : index
    %183 = vector.load %arg8[%c0_118, %c0_119, %c0_120] : memref<2x64x64xf32, #tpu.memory_space<vmem>>, vector<1x64x64xf32>
    %184 = vector.shape_cast %183 : vector<1x64x64xf32> to vector<64x64xf32>
    %cst_121 = arith.constant dense<0.000000e+00> : vector<8x64xf32>
    %185 = tpu.matmul %157, %184, %cst_121 {dimension_numbers = #tpu.dot_dimension_numbers<[1], [0], [0], [1], [0, 0, 1, 1], [], []>} : vector<8x64xf32>, vector<64x64xf32>, vector<8x64xf32> -> vector<8x64xf32>
    %c0_122 = arith.constant 0 : index
    %c0_123 = arith.constant 0 : index
    %c0_124 = arith.constant 0 : index
    %186 = vector.load %arg10[%c0_122, %c0_123, %c0_124] : memref<2x1x64xf32, #tpu.memory_space<vmem>>, vector<1x1x64xf32>
    %187 = vector.shape_cast %186 : vector<1x1x64xf32> to vector<1x64xf32>
    %188 = vector.broadcast %187 : vector<1x64xf32> to vector<8x64xf32>
    %189 = arith.addf %185, %188 : vector<8x64xf32>
    %c1_125 = arith.constant 1 : index
    %c0_126 = arith.constant 0 : index
    %c0_127 = arith.constant 0 : index
    %190 = vector.load %arg8[%c1_125, %c0_126, %c0_127] : memref<2x64x64xf32, #tpu.memory_space<vmem>>, vector<1x64x64xf32>
    %191 = vector.shape_cast %190 : vector<1x64x64xf32> to vector<64x64xf32>
    %cst_128 = arith.constant dense<0.000000e+00> : vector<8x64xf32>
    %192 = tpu.matmul %128, %191, %cst_128 {dimension_numbers = #tpu.dot_dimension_numbers<[1], [0], [0], [1], [0, 0, 1, 1], [], []>} : vector<8x64xf32>, vector<64x64xf32>, vector<8x64xf32> -> vector<8x64xf32>
    %c1_129 = arith.constant 1 : index
    %c0_130 = arith.constant 0 : index
    %c0_131 = arith.constant 0 : index
    %193 = vector.load %arg10[%c1_129, %c0_130, %c0_131] : memref<2x1x64xf32, #tpu.memory_space<vmem>>, vector<1x1x64xf32>
    %194 = vector.shape_cast %193 : vector<1x1x64xf32> to vector<1x64xf32>
    %195 = vector.broadcast %194 : vector<1x64xf32> to vector<8x64xf32>
    %196 = arith.addf %192, %195 : vector<8x64xf32>
    %197 = arith.mulf %170, %196 : vector<8x64xf32>
    %198 = arith.addf %189, %197 : vector<8x64xf32>
    %199 = math.tanh %198 : vector<8x64xf32>
    %cst_132 = arith.constant 1.000000e+00 : f32
    %200 = vector.broadcast %cst_132 : f32 to vector<8x64xf32>
    %201 = arith.subf %200, %182 : vector<8x64xf32>
    %202 = arith.mulf %201, %199 : vector<8x64xf32>
    %203 = arith.mulf %182, %128 : vector<8x64xf32>
    %204 = arith.addf %202, %203 : vector<8x64xf32>
    %c0_133 = arith.constant 0 : index
    %c0_134 = arith.constant 0 : index
    %c0_135 = arith.constant 0 : index
    %205 = vector.load %arg11[%c0_133, %c0_134, %c0_135] : memref<8x64x16xf32, #tpu.memory_space<vmem>>, vector<8x64x16xf32>
    %206 = vector.shape_cast %204 : vector<8x64xf32> to vector<8x64x1xf32>
    %207 = vector.broadcast %206 : vector<8x64x1xf32> to vector<8x64x16xf32>
    %208 = arith.mulf %205, %207 : vector<8x64x16xf32>
    %cst_136 = arith.constant dense<0.000000e+00> : vector<8x16xf32>
    %209 = vector.multi_reduction <add>, %208, %cst_136 [1] : vector<8x64x16xf32> to vector<8x16xf32>
    %c0_137 = arith.constant 0 : index
    %c0_138 = arith.constant 0 : index
    %210 = vector.load %arg12[%c0_137, %c0_138] : memref<8x16xf32, #tpu.memory_space<vmem>>, vector<8x16xf32>
    %211 = arith.mulf %209, %210 : vector<8x16xf32>
    %212 = vector.shape_cast %211 : vector<8x16xf32> to vector<1x8x16xf32>
    %213 = arith.index_cast %c2_i32 : i32 to index
    %c0_139 = arith.constant 0 : index
    %c0_140 = arith.constant 0 : index
    %214 = vector.load %arg14[%213, %c0_139, %c0_140] : memref<3x8x16xf32, #tpu.memory_space<vmem>>, vector<1x8x16xf32>
    tpu.vector_store %arg14[%213, %c0_139, %c0_140], %212 {strides = array<i32>} : memref<3x8x16xf32, #tpu.memory_space<vmem>>, vector<1x8x16xf32>,
    %c0_141 = arith.constant 0 : index
    %c0_142 = arith.constant 0 : index
    %215 = vector.load %arg3[%c0_141, %c0_142] : memref<64x128xf32, #tpu.memory_space<vmem>>, vector<64x128xf32>
    %cst_143 = arith.constant dense<0.000000e+00> : vector<8x128xf32>
    %216 = tpu.matmul %204, %215, %cst_143 {dimension_numbers = #tpu.dot_dimension_numbers<[1], [0], [0], [1], [0, 0, 1, 1], [], []>} : vector<8x64xf32>, vector<64x128xf32>, vector<8x128xf32> -> vector<8x128xf32>
    %217 = vector.shape_cast %216 : vector<8x128xf32> to vector<1x8x128xf32>
    %218 = arith.index_cast %c2_i32 : i32 to index
    %c0_144 = arith.constant 0 : index
    %c0_145 = arith.constant 0 : index
    %219 = vector.load %arg13[%218, %c0_144, %c0_145] : memref<3x8x128xf32, #tpu.memory_space<vmem>>, vector<1x8x128xf32>
    tpu.vector_store %arg13[%218, %c0_144, %c0_145], %217 {strides = array<i32>} : memref<3x8x128xf32, #tpu.memory_space<vmem>>, vector<1x8x128xf32>,
    %cst_146 = arith.constant dense<0xFF800000> : vector<8xf32>
    %220 = vector.multi_reduction <maximumf>, %216, %cst_146 [1] : vector<8x128xf32> to vector<8xf32>
    %221 = vector.shape_cast %220 : vector<8xf32> to vector<8x1xf32>
    %222 = vector.broadcast %221 : vector<8x1xf32> to vector<8x128xf32>
    %223 = arith.cmpf oeq, %216, %222 : vector<8x128xf32>
    %c128_i32_147 = arith.constant 128 : i32
    %224 = vector.broadcast %c128_i32_147 : i32 to vector<8x128xi32>
    %225 = arith.select %223, %0, %224 : vector<8x128xi1>, vector<8x128xi32>
    %cst_148 = arith.constant dense<2147483647> : vector<8xi32>
    %226 = vector.multi_reduction <minsi>, %225, %cst_148 [1] : vector<8x128xi32> to vector<8xi32>
    %227 = vector.shape_cast %226 : vector<8xi32> to vector<8x1xi32>
    %228 = vector.broadcast %227 : vector<8x1xi32> to vector<8x128xi32>
    %229 = arith.cmpi eq, %0, %228 : vector<8x128xi32>
    %230 = arith.extui %229 : vector<8x128xi1> to vector<8x128xi32>
    %231 = arith.sitofp %230 : vector<8x128xi32> to vector<8x128xf32>
    %c0_149 = arith.constant 0 : index
    %c0_150 = arith.constant 0 : index
    %232 = vector.load %arg2[%c0_149, %c0_150] : memref<128x64xf32, #tpu.memory_space<vmem>>, vector<128x64xf32>
    %cst_151 = arith.constant dense<0.000000e+00> : vector<8x64xf32>
    %233 = tpu.matmul %231, %232, %cst_151 {dimension_numbers = #tpu.dot_dimension_numbers<[1], [0], [0], [1], [0, 0, 1, 1], [], []>} : vector<8x128xf32>, vector<128x64xf32>, vector<8x64xf32> -> vector<8x64xf32>
    %c3_i32 = arith.constant 3 : i32
    %c0_152 = arith.constant 0 : index
    %c0_153 = arith.constant 0 : index
    %234 = vector.load %arg15[%c0_152, %c0_153] : memref<8x64xf32, #tpu.memory_space<vmem>>, vector<8x64xf32>
    tpu.vector_store %arg15[%c0_152, %c0_153], %233 {strides = array<i32>} : memref<8x64xf32, #tpu.memory_space<vmem>>, vector<8x64xf32>,
    %c0_154 = arith.constant 0 : index
    %c0_155 = arith.constant 0 : index
    %235 = vector.load %arg16[%c0_154, %c0_155] : memref<8x64xf32, #tpu.memory_space<vmem>>, vector<8x64xf32>
    tpu.vector_store %arg16[%c0_154, %c0_155], %204 {strides = array<i32>} : memref<8x64xf32, #tpu.memory_space<vmem>>, vector<8x64xf32>,
    return
  }
  func.func @transform_0(%arg0: i32, %arg1: i32) -> (i32, i32) {
    %c0_i32 = arith.constant 0 : i32
    %c0_i32_0 = arith.constant 0 : i32
    %c0_i32_1 = arith.constant 0 : i32
    return %c0_i32, %c0_i32_0 : i32, i32
  }
  func.func @transform_1(%arg0: i32, %arg1: i32) -> (i32, i32) {
    %c0_i32 = arith.constant 0 : i32
    %c0_i32_0 = arith.constant 0 : i32
    %c0_i32_1 = arith.constant 0 : i32
    return %c0_i32, %c0_i32_0 : i32, i32
  }
  func.func @transform_2(%arg0: i32, %arg1: i32) -> (i32, i32) {
    %c0_i32 = arith.constant 0 : i32
    %c0_i32_0 = arith.constant 0 : i32
    %c0_i32_1 = arith.constant 0 : i32
    return %c0_i32, %c0_i32_0 : i32, i32
  }
  func.func @transform_3(%arg0: i32, %arg1: i32) -> (i32, i32) {
    %c0_i32 = arith.constant 0 : i32
    %c0_i32_0 = arith.constant 0 : i32
    %c0_i32_1 = arith.constant 0 : i32
    return %c0_i32, %c0_i32_0 : i32, i32
  }
  func.func @transform_4(%arg0: i32, %arg1: i32) -> (i32, i32) {
    %c0_i32 = arith.constant 0 : i32
    %c0_i32_0 = arith.constant 0 : i32
    return %arg0, %c0_i32 : i32, i32
  }
  func.func @transform_5(%arg0: i32, %arg1: i32) -> (i32, i32, i32) {
    %c0_i32 = arith.constant 0 : i32
    %c0_i32_0 = arith.constant 0 : i32
    %c0_i32_1 = arith.constant 0 : i32
    %c0_i32_2 = arith.constant 0 : i32
    return %c0_i32, %c0_i32_0, %c0_i32_1 : i32, i32, i32
  }
  func.func @transform_6(%arg0: i32, %arg1: i32) -> (i32, i32, i32) {
    %c0_i32 = arith.constant 0 : i32
    %c0_i32_0 = arith.constant 0 : i32
    %c0_i32_1 = arith.constant 0 : i32
    %c0_i32_2 = arith.constant 0 : i32
    return %c0_i32, %c0_i32_0, %c0_i32_1 : i32, i32, i32
  }
  func.func @transform_7(%arg0: i32, %arg1: i32) -> (i32, i32, i32) {
    %c0_i32 = arith.constant 0 : i32
    %c0_i32_0 = arith.constant 0 : i32
    %c0_i32_1 = arith.constant 0 : i32
    %c0_i32_2 = arith.constant 0 : i32
    return %c0_i32, %c0_i32_0, %c0_i32_1 : i32, i32, i32
  }
  func.func @transform_8(%arg0: i32, %arg1: i32) -> (i32, i32, i32) {
    %c0_i32 = arith.constant 0 : i32
    %c0_i32_0 = arith.constant 0 : i32
    %c0_i32_1 = arith.constant 0 : i32
    %c0_i32_2 = arith.constant 0 : i32
    return %c0_i32, %c0_i32_0, %c0_i32_1 : i32, i32, i32
  }
  func.func @transform_9(%arg0: i32, %arg1: i32) -> (i32, i32, i32) {
    %c0_i32 = arith.constant 0 : i32
    %c0_i32_0 = arith.constant 0 : i32
    %c0_i32_1 = arith.constant 0 : i32
    return %arg0, %c0_i32, %c0_i32_0 : i32, i32, i32
  }
  func.func @transform_10(%arg0: i32, %arg1: i32) -> (i32, i32) {
    %c0_i32 = arith.constant 0 : i32
    %c0_i32_0 = arith.constant 0 : i32
    return %arg0, %c0_i32 : i32, i32
  }
  func.func @transform_11(%arg0: i32, %arg1: i32) -> (i32, i32, i32) {
    %c0_i32 = arith.constant 0 : i32
    %c0_i32_0 = arith.constant 0 : i32
    return %arg1, %arg0, %c0_i32 : i32, i32, i32
  }
  func.func @transform_12(%arg0: i32, %arg1: i32) -> (i32, i32, i32) {
    %c0_i32 = arith.constant 0 : i32
    %c0_i32_0 = arith.constant 0 : i32
    return %arg1, %arg0, %c0_i32 : i32, i32, i32
  }
}

</mosaic_0001>

<llo_original>
// kernel: tpu_custom_call.1
$region0: #{tpu_custom_call.1}
  #allocation0 [shape = 'u32[]', space=smem, size = 0x4, offset = 0x4, fixed_abs, tag = 'smem constant byte address 0x4 - core index']
  #allocation1 [shape = 'u32[144,128]{1,0:T(1,128)}', space=vmem, size = 0x12000, scoped, tag = 'internal scratch']
  #allocation2 [shape = 'f32[8,64]{1,0:T(8,128)}', space=vmem, size = 0x1000, scoped, tag = 'scratch operand']
  #allocation3 [shape = 'f32[8,64]{1,0:T(8,128)}', space=vmem, size = 0x1000, scoped, tag = 'scratch operand']
  %s0 = inlined_call_operand.vmem [shape: f32[128,64], index: 0, kind: input, shape index: {}]
  %s1 = inlined_call_operand.vmem [shape: f32[64,128], index: 1, kind: input, shape index: {}]
  %s2 = inlined_call_operand.vmem [shape: f32[128,64], index: 2, kind: input, shape index: {}]
  %s3 = inlined_call_operand.vmem [shape: f32[1,64], index: 3, kind: input, shape index: {}]
  %s4 = inlined_call_operand.vmem [shape: f32[8,128], index: 4, kind: input, shape index: {}]
  %s5 = inlined_call_operand.vmem [shape: f32[2,128,64], index: 5, kind: input, shape index: {}]
  %s6 = inlined_call_operand.vmem [shape: f32[2,64,64], index: 6, kind: input, shape index: {}]
  %s7 = inlined_call_operand.vmem [shape: f32[2,1,64], index: 7, kind: input, shape index: {}]
  %s8 = inlined_call_operand.vmem [shape: f32[2,1,64], index: 8, kind: input, shape index: {}]
  %s9 = inlined_call_operand.vmem [shape: f32[8,64,16], index: 9, kind: input, shape index: {}]
  %s10 = inlined_call_operand.vmem [shape: f32[8,16], index: 10, kind: input, shape index: {}]
  %s11 = inlined_call_operand.hbm [shape: f32[6,8,128], index: 11, kind: output, shape index: {0}]
  %s12 = inlined_call_operand.hbm [shape: f32[6,8,16], index: 12, kind: output, shape index: {1}]
  %13 = xla_tuple %s11, %s12
  %s14 = sld [smem:[#allocation0]]
  $region89: #{tpu_custom_call.1} parent=0
    _
  %s16 = ssub.s32 1, %s14
  %s17 = scalar_select 0, %s16, %s14
  $region1: #{tpu_custom_call.1} parent=0
    #allocation4 [shape = 'u8[24576]{0}', space=vmem, size = 0x6000, scoped, tag = 'output window, operand 0']
    #allocation5 [shape = 's32[2]{0}', space=sflag, size = 0x8, scoped, tag = 'scoped memory for tpu_custom_call.1']
    #allocation6 [shape = 'u8[24576]{0}', space=vmem, size = 0x6000, scoped, tag = 'output window, operand 1']
    #allocation7 [shape = 's32[2]{0}', space=sflag, size = 0x8, scoped, tag = 'scoped memory for tpu_custom_call.1']
    %18 = vsyncpa [#allocation5], 0
    %s19 = scalar_lea.sflag [#allocation5], 1
    %20 = vsyncpa %s19, 0
    %21 = vsyncpa [#allocation7], 0
    %s22 = scalar_lea.sflag [#allocation7], 1
    %23 = vsyncpa %s22, 0
    loop: start=0, step=1, limit=4
    $region2: #{tpu_custom_call.1} parent=1 // loop_pre_header
      _
    $region3: #{tpu_custom_call.1} parent=1 // loop_header
      %s25 = sphi 0, %s29
      %p26 = scmp.ge.s32.totalorder %s25, 4
      %s32 = sphi 0, %s44
      %s33 = sphi 0, %s40
      %s34 = sphi 0, %s32
      %s35 = sphi 0, %s33
      %s36 = sphi 0, %s34
      %s37 = sphi 0, %s35
      %s45 = sphi 0, %s45
      %s47 = sphi 0, %s45
      %s48 = sphi 0, %s47
      %s62 = sphi 0, %s48
      %s66 = sphi 0, %s66
      %s68 = sphi 0, %s66
      %s69 = sphi 0, %s68
      %s83 = sphi 0, %s69
      %s87 = sphi 0, %s87
      %s89 = sphi 0, %s87
      %s90 = sphi 0, %s89
      %s104 = sphi 0, %s90
      %s108 = sphi 0, %s108
      %s110 = sphi 0, %s108
      %s111 = sphi 0, %s110
      %s125 = sphi 0, %s111
      %s131 = sphi 0, %s133
      %s134 = sphi 0, %s131
      %s135 = sphi 0, %s134
      %s151 = sphi 0, %s135
      %s155 = sphi 0, %s155
      %s157 = sphi 0, %s155
      %s158 = sphi 0, %s157
      %s172 = sphi 0, %s158
      %s176 = sphi 0, %s176
      %s178 = sphi 0, %s176
      %s179 = sphi 0, %s178
      %s193 = sphi 0, %s179
      %s197 = sphi 0, %s197
      %s199 = sphi 0, %s197
      %s200 = sphi 0, %s199
      %s214 = sphi 0, %s200
      %s218 = sphi 0, %s218
      %s220 = sphi 0, %s218
      %s221 = sphi 0, %s220
      %s235 = sphi 0, %s221
      %s241 = sphi 0, %s243
      %s244 = sphi 0, %s241
      %s245 = sphi 0, %s244
      %s261 = sphi 0, %s245
      %s267 = sphi 0, %s269
      %s270 = sphi 0, %s267
      %s271 = sphi 0, %s270
      %s287 = sphi 0, %s271
      %s295 = sphi 0, %s297
      %s298 = sphi 0, %s295
      %s299 = sphi 0, %s298
      %s315 = sphi 0, %s299
      %s323 = sphi 0, %s325
      %s326 = sphi 0, %s323
      %s327 = sphi 0, %s326
      %s343 = sphi 0, %s327
    $region4: #{tpu_custom_call.1} parent=1 // loop_header_branch
      %28 = sbr.rel (%p26) target = $region8
    $region5: #{tpu_custom_call.1} parent=1 // loop_body
      %s30 = ssub.s32 %s25, 1
      %s31 = ssub.s32 %s25, 2
      %s38 = sadd.s32 1, %s33
      %p39 = scmp.ge.s32.totalorder %s38, 2
      %s40 = scalar_select %p39, 0, %s38
      %s41 = sadd.s32 1, %s32
      %s42 = scalar_select %p39, %s41, %s32
      %p43 = scmp.ge.s32.totalorder %s42, 1
      %s44 = scalar_select %p43, 0, %s42
      %s46 = sadd.s32 %s45, 1
      %p49 = scmp.eq.s32.totalorder %s25, 1
      %p50 = scmp.ne.s32.totalorder %s45, %s47
      %p51 = scmp.eq.s32.totalorder %s25, 0
      %p52 = por %p50, %p51
      %p53 = scmp.ne.s32.totalorder %s45, %s47
      %p54 = scmp.eq.s32.totalorder %s30, 1
      %p55 = por %p53, %p54
      %p56 = scmp.ne.s32.totalorder %s47, %s48
      %p57 = scmp.eq.s32.totalorder %s30, 0
      %p58 = por %p56, %p57
      %p59 = scmp.ne.s32.totalorder %s47, %s48
      %p60 = scmp.eq.s32.totalorder %s31, 1
      %p61 = por %p59, %p60
      %p63 = scmp.ne.s32.totalorder %s48, %s62
      %p64 = scmp.eq.s32.totalorder %s31, 0
      %p65 = por %p63, %p64
      %s67 = sadd.s32 %s66, 1
      %p70 = scmp.eq.s32.totalorder %s25, 1
      %p71 = scmp.ne.s32.totalorder %s66, %s68
      %p72 = scmp.eq.s32.totalorder %s25, 0
      %p73 = por %p71, %p72
      %p74 = scmp.ne.s32.totalorder %s66, %s68
      %p75 = scmp.eq.s32.totalorder %s30, 1
      %p76 = por %p74, %p75
      %p77 = scmp.ne.s32.totalorder %s68, %s69
      %p78 = scmp.eq.s32.totalorder %s30, 0
      %p79 = por %p77, %p78
      %p80 = scmp.ne.s32.totalorder %s68, %s69
      %p81 = scmp.eq.s32.totalorder %s31, 1
      %p82 = por %p80, %p81
      %p84 = scmp.ne.s32.totalorder %s69, %s83
      %p85 = scmp.eq.s32.totalorder %s31, 0
      %p86 = por %p84, %p85
      %s88 = sadd.s32 %s87, 1
      %p91 = scmp.eq.s32.totalorder %s25, 1
      %p92 = scmp.ne.s32.totalorder %s87, %s89
      %p93 = scmp.eq.s32.totalorder %s25, 0
      %p94 = por %p92, %p93
      %p95 = scmp.ne.s32.totalorder %s87, %s89
      %p96 = scmp.eq.s32.totalorder %s30, 1
      %p97 = por %p95, %p96
      %p98 = scmp.ne.s32.totalorder %s89, %s90
      %p99 = scmp.eq.s32.totalorder %s30, 0
      %p100 = por %p98, %p99
      %p101 = scmp.ne.s32.totalorder %s89, %s90
      %p102 = scmp.eq.s32.totalorder %s31, 1
      %p103 = por %p101, %p102
      %p105 = scmp.ne.s32.totalorder %s90, %s104
      %p106 = scmp.eq.s32.totalorder %s31, 0
      %p107 = por %p105, %p106
      %s109 = sadd.s32 %s108, 1
      %p112 = scmp.eq.s32.totalorder %s25, 1
      %p113 = scmp.ne.s32.totalorder %s108, %s110
      %p114 = scmp.eq.s32.totalorder %s25, 0
      %p115 = por %p113, %p114
      %p116 = scmp.ne.s32.totalorder %s108, %s110
      %p117 = scmp.eq.s32.totalorder %s30, 1
      %p118 = por %p116, %p117
      %p119 = scmp.ne.s32.totalorder %s110, %s111
      %p120 = scmp.eq.s32.totalorder %s30, 0
      %p121 = por %p119, %p120
      %p122 = scmp.ne.s32.totalorder %s110, %s111
      %p123 = scmp.eq.s32.totalorder %s31, 1
      %p124 = por %p122, %p123
      %p126 = scmp.ne.s32.totalorder %s111, %s125
      %p127 = scmp.eq.s32.totalorder %s31, 0
      %p128 = por %p126, %p127
      %s129 = ssub.s32 %s32, %s44
      %p130 = scmp.eq.s32.totalorder %s129, 0
      %s132 = sadd.s32 %s131, 1
      %s133 = scalar_select %p130, %s131, %s132
      %p136 = pneg %p130
      %p137 = scmp.eq.s32.totalorder %s25, 1
      %p138 = por %p136, %p137
      %p139 = scmp.ne.s32.totalorder %s131, %s134
      %p140 = scmp.eq.s32.totalorder %s25, 0
      %p141 = por %p139, %p140
      %p142 = scmp.ne.s32.totalorder %s131, %s134
      %p143 = scmp.eq.s32.totalorder %s30, 1
      %p144 = por %p142, %p143
      %p145 = scmp.ne.s32.totalorder %s134, %s135
      %p146 = scmp.eq.s32.totalorder %s30, 0
      %p147 = por %p145, %p146
      %p148 = scmp.ne.s32.totalorder %s134, %s135
      %p149 = scmp.eq.s32.totalorder %s31, 1
      %p150 = por %p148, %p149
      %p152 = scmp.ne.s32.totalorder %s135, %s151
      %p153 = scmp.eq.s32.totalorder %s31, 0
      %p154 = por %p152, %p153
      %s156 = sadd.s32 %s155, 1
      %p159 = scmp.eq.s32.totalorder %s25, 1
      %p160 = scmp.ne.s32.totalorder %s155, %s157
      %p161 = scmp.eq.s32.totalorder %s25, 0
      %p162 = por %p160, %p161
      %p163 = scmp.ne.s32.totalorder %s155, %s157
      %p164 = scmp.eq.s32.totalorder %s30, 1
      %p165 = por %p163, %p164
      %p166 = scmp.ne.s32.totalorder %s157, %s158
      %p167 = scmp.eq.s32.totalorder %s30, 0
      %p168 = por %p166, %p167
      %p169 = scmp.ne.s32.totalorder %s157, %s158
      %p170 = scmp.eq.s32.totalorder %s31, 1
      %p171 = por %p169, %p170
      %p173 = scmp.ne.s32.totalorder %s158, %s172
      %p174 = scmp.eq.s32.totalorder %s31, 0
      %p175 = por %p173, %p174
      %s177 = sadd.s32 %s176, 1
      %p180 = scmp.eq.s32.totalorder %s25, 1
      %p181 = scmp.ne.s32.totalorder %s176, %s178
      %p182 = scmp.eq.s32.totalorder %s25, 0
      %p183 = por %p181, %p182
      %p184 = scmp.ne.s32.totalorder %s176, %s178
      %p185 = scmp.eq.s32.totalorder %s30, 1
      %p186 = por %p184, %p185
      %p187 = scmp.ne.s32.totalorder %s178, %s179
      %p188 = scmp.eq.s32.totalorder %s30, 0
      %p189 = por %p187, %p188
      %p190 = scmp.ne.s32.totalorder %s178, %s179
      %p191 = scmp.eq.s32.totalorder %s31, 1
      %p192 = por %p190, %p191
      %p194 = scmp.ne.s32.totalorder %s179, %s193
      %p195 = scmp.eq.s32.totalorder %s31, 0
      %p196 = por %p194, %p195
      %s198 = sadd.s32 %s197, 1
      %p201 = scmp.eq.s32.totalorder %s25, 1
      %p202 = scmp.ne.s32.totalorder %s197, %s199
      %p203 = scmp.eq.s32.totalorder %s25, 0
      %p204 = por %p202, %p203
      %p205 = scmp.ne.s32.totalorder %s197, %s199
      %p206 = scmp.eq.s32.totalorder %s30, 1
      %p207 = por %p205, %p206
      %p208 = scmp.ne.s32.totalorder %s199, %s200
      %p209 = scmp.eq.s32.totalorder %s30, 0
      %p210 = por %p208, %p209
      %p211 = scmp.ne.s32.totalorder %s199, %s200
      %p212 = scmp.eq.s32.totalorder %s31, 1
      %p213 = por %p211, %p212
      %p215 = scmp.ne.s32.totalorder %s200, %s214
      %p216 = scmp.eq.s32.totalorder %s31, 0
      %p217 = por %p215, %p216
      %s219 = sadd.s32 %s218, 1
      %p222 = scmp.eq.s32.totalorder %s25, 1
      %p223 = scmp.ne.s32.totalorder %s218, %s220
      %p224 = scmp.eq.s32.totalorder %s25, 0
      %p225 = por %p223, %p224
      %p226 = scmp.ne.s32.totalorder %s218, %s220
      %p227 = scmp.eq.s32.totalorder %s30, 1
      %p228 = por %p226, %p227
      %p229 = scmp.ne.s32.totalorder %s220, %s221
      %p230 = scmp.eq.s32.totalorder %s30, 0
      %p231 = por %p229, %p230
      %p232 = scmp.ne.s32.totalorder %s220, %s221
      %p233 = scmp.eq.s32.totalorder %s31, 1
      %p234 = por %p232, %p233
      %p236 = scmp.ne.s32.totalorder %s221, %s235
      %p237 = scmp.eq.s32.totalorder %s31, 0
      %p238 = por %p236, %p237
      %s239 = ssub.s32 %s32, %s44
      %p240 = scmp.eq.s32.totalorder %s239, 0
      %s242 = sadd.s32 %s241, 1
      %s243 = scalar_select %p240, %s241, %s242
      %p246 = pneg %p240
      %p247 = scmp.eq.s32.totalorder %s25, 1
      %p248 = por %p246, %p247
      %p249 = scmp.ne.s32.totalorder %s241, %s244
      %p250 = scmp.eq.s32.totalorder %s25, 0
      %p251 = por %p249, %p250
      %p252 = scmp.ne.s32.totalorder %s241, %s244
      %p253 = scmp.eq.s32.totalorder %s30, 1
      %p254 = por %p252, %p253
      %p255 = scmp.ne.s32.totalorder %s244, %s245
      %p256 = scmp.eq.s32.totalorder %s30, 0
      %p257 = por %p255, %p256
      %p258 = scmp.ne.s32.totalorder %s244, %s245
      %p259 = scmp.eq.s32.totalorder %s31, 1
      %p260 = por %p258, %p259
      %p262 = scmp.ne.s32.totalorder %s245, %s261
      %p263 = scmp.eq.s32.totalorder %s31, 0
      %p264 = por %p262, %p263
      %s265 = ssub.s32 %s32, %s44
      %p266 = scmp.eq.s32.totalorder %s265, 0
      %s268 = sadd.s32 %s267, 1
      %s269 = scalar_select %p266, %s267, %s268
      %p272 = pneg %p266
      %p273 = scmp.eq.s32.totalorder %s25, 1
      %p274 = por %p272, %p273
      %p275 = scmp.ne.s32.totalorder %s267, %s270
      %p276 = scmp.eq.s32.totalorder %s25, 0
      %p277 = por %p275, %p276
      %p278 = scmp.ne.s32.totalorder %s267, %s270
      %p279 = scmp.eq.s32.totalorder %s30, 1
      %p280 = por %p278, %p279
      %p281 = scmp.ne.s32.totalorder %s270, %s271
      %p282 = scmp.eq.s32.totalorder %s30, 0
      %p283 = por %p281, %p282
      %p284 = scmp.ne.s32.totalorder %s270, %s271
      %p285 = scmp.eq.s32.totalorder %s31, 1
      %p286 = por %p284, %p285
      %p288 = scmp.ne.s32.totalorder %s271, %s287
      %p289 = scmp.eq.s32.totalorder %s31, 0
      %p290 = por %p288, %p289
      %s291 = ssub.s32 %s33, %s40
      %s292 = ssub.s32 %s32, %s44
      %s293 = sor.u32 %s291, %s292
      %p294 = scmp.eq.s32.totalorder %s293, 0
      %s296 = sadd.s32 %s295, 1
      %s297 = scalar_select %p294, %s295, %s296
      %p300 = pneg %p294
      %p301 = scmp.eq.s32.totalorder %s25, 1
      %p302 = por %p300, %p301
      %p303 = scmp.ne.s32.totalorder %s295, %s298
      %p304 = scmp.eq.s32.totalorder %s25, 0
      %p305 = por %p303, %p304
      %p306 = scmp.ne.s32.totalorder %s295, %s298
      %p307 = scmp.eq.s32.totalorder %s30, 1
      %p308 = por %p306, %p307
      %p309 = scmp.ne.s32.totalorder %s298, %s299
      %p310 = scmp.eq.s32.totalorder %s30, 0
      %p311 = por %p309, %p310
      %p312 = scmp.ne.s32.totalorder %s298, %s299
      %p313 = scmp.eq.s32.totalorder %s31, 1
      %p314 = por %p312, %p313
      %p316 = scmp.ne.s32.totalorder %s299, %s315
      %p317 = scmp.eq.s32.totalorder %s31, 0
      %p318 = por %p316, %p317
      %s319 = ssub.s32 %s33, %s40
      %s320 = ssub.s32 %s32, %s44
      %s321 = sor.u32 %s319, %s320
      %p322 = scmp.eq.s32.totalorder %s321, 0
      %s324 = sadd.s32 %s323, 1
      %s325 = scalar_select %p322, %s323, %s324
      %p328 = pneg %p322
      %p329 = scmp.eq.s32.totalorder %s25, 1
      %p330 = por %p328, %p329
      %p331 = scmp.ne.s32.totalorder %s323, %s326
      %p332 = scmp.eq.s32.totalorder %s25, 0
      %p333 = por %p331, %p332
      %p334 = scmp.ne.s32.totalorder %s323, %s326
      %p335 = scmp.eq.s32.totalorder %s30, 1
      %p336 = por %p334, %p335
      %p337 = scmp.ne.s32.totalorder %s326, %s327
      %p338 = scmp.eq.s32.totalorder %s30, 0
      %p339 = por %p337, %p338
      %p340 = scmp.ne.s32.totalorder %s326, %s327
      %p341 = scmp.eq.s32.totalorder %s31, 1
      %p342 = por %p340, %p341
      %p344 = scmp.ne.s32.totalorder %s327, %s343
      %p345 = scmp.eq.s32.totalorder %s31, 0
      %p346 = por %p344, %p345
      %p347 = scmp.le.s32.totalorder 1, %s25
      %p348 = scmp.lt.s32.totalorder %s25, 3
      %p349 = pnand %p347, %p348
      %p350 = pneg %p349
      // Predicated region
      $region9: #{tpu_custom_call.1} parent=5 // pred_check
        _
      $region10: #{tpu_custom_call.1} parent=5 // pred_check_branch
        %352 = sbr.rel (%p349) target = $region12
      $region11: #{tpu_custom_call.1} parent=5 // pred_region
        %s353 = ssub.s32 %s25, 1
        // Predicated region
        $region13: #{tpu_custom_call.1} parent=11 // pred_check
          %p354 = pneg %p58
        $region14: #{tpu_custom_call.1} parent=11 // pred_check_branch
          %356 = sbr.rel (%p354) target = $region16
        $region15: #{tpu_custom_call.1} parent=11 // pred_region
          _
        $region16: #{tpu_custom_call.1} parent=11 // pred_fallthru
          _
        // Predicated region
        $region17: #{tpu_custom_call.1} parent=11 // pred_check
          %p357 = pneg %p79
        $region18: #{tpu_custom_call.1} parent=11 // pred_check_branch
          %359 = sbr.rel (%p357) target = $region20
        $region19: #{tpu_custom_call.1} parent=11 // pred_region
          _
        $region20: #{tpu_custom_call.1} parent=11 // pred_fallthru
          _
        // Predicated region
        $region21: #{tpu_custom_call.1} parent=11 // pred_check
          %p360 = pneg %p100
        $region22: #{tpu_custom_call.1} parent=11 // pred_check_branch
          %362 = sbr.rel (%p360) target = $region24
        $region23: #{tpu_custom_call.1} parent=11 // pred_region
          _
        $region24: #{tpu_custom_call.1} parent=11 // pred_fallthru
          _
        // Predicated region
        $region25: #{tpu_custom_call.1} parent=11 // pred_check
          %p363 = pneg %p121
        $region26: #{tpu_custom_call.1} parent=11 // pred_check_branch
          %365 = sbr.rel (%p363) target = $region28
        $region27: #{tpu_custom_call.1} parent=11 // pred_region
          _
        $region28: #{tpu_custom_call.1} parent=11 // pred_fallthru
          _
        // Predicated region
        $region29: #{tpu_custom_call.1} parent=11 // pred_check
          %p366 = pneg %p147
        $region30: #{tpu_custom_call.1} parent=11 // pred_check_branch
          %368 = sbr.rel (%p366) target = $region32
        $region31: #{tpu_custom_call.1} parent=11 // pred_region
          %p369 = scmp.lt.s32.totalorder %s34, 0
          %s370 = scalar_select %p369, %s34, 0
          %s371 = smul.addr %s370, 8
          %s372 = scalar_lea.vmem %s4, %s371
        $region32: #{tpu_custom_call.1} parent=11 // pred_fallthru
          _
        // Predicated region
        $region33: #{tpu_custom_call.1} parent=11 // pred_check
          %p373 = pneg %p168
        $region34: #{tpu_custom_call.1} parent=11 // pred_check_branch
          %375 = sbr.rel (%p373) target = $region36
        $region35: #{tpu_custom_call.1} parent=11 // pred_region
          _
        $region36: #{tpu_custom_call.1} parent=11 // pred_fallthru
          _
        // Predicated region
        $region37: #{tpu_custom_call.1} parent=11 // pred_check
          %p376 = pneg %p189
        $region38: #{tpu_custom_call.1} parent=11 // pred_check_branch
          %378 = sbr.rel (%p376) target = $region40
        $region39: #{tpu_custom_call.1} parent=11 // pred_region
          _
        $region40: #{tpu_custom_call.1} parent=11 // pred_fallthru
          _
        // Predicated region
        $region41: #{tpu_custom_call.1} parent=11 // pred_check
          %p379 = pneg %p210
        $region42: #{tpu_custom_call.1} parent=11 // pred_check_branch
          %381 = sbr.rel (%p379) target = $region44
        $region43: #{tpu_custom_call.1} parent=11 // pred_region
          _
        $region44: #{tpu_custom_call.1} parent=11 // pred_fallthru
          _
        // Predicated region
        $region45: #{tpu_custom_call.1} parent=11 // pred_check
          %p382 = pneg %p231
        $region46: #{tpu_custom_call.1} parent=11 // pred_check_branch
          %384 = sbr.rel (%p382) target = $region48
        $region47: #{tpu_custom_call.1} parent=11 // pred_region
          _
        $region48: #{tpu_custom_call.1} parent=11 // pred_fallthru
          _
        // Predicated region
        $region49: #{tpu_custom_call.1} parent=11 // pred_check
          %p385 = pneg %p257
        $region50: #{tpu_custom_call.1} parent=11 // pred_check_branch
          %387 = sbr.rel (%p385) target = $region52
        $region51: #{tpu_custom_call.1} parent=11 // pred_region
          %s388 = smul.u32 8, %s34
          %p389 = scmp.lt.s32.totalorder %s388, 7
          %s390 = scalar_select %p389, %s388, 7
          %s391 = smul.addr %s390, 8
          %s392 = smul.addr %s391, 8
          %s393 = scalar_lea.vmem %s9, %s392
          %s394 = smul.u32 8, %s34
        $region52: #{tpu_custom_call.1} parent=11 // pred_fallthru
          _
        // Predicated region
        $region53: #{tpu_custom_call.1} parent=11 // pred_check
          %p395 = pneg %p283
        $region54: #{tpu_custom_call.1} parent=11 // pred_check_branch
          %397 = sbr.rel (%p395) target = $region56
        $region55: #{tpu_custom_call.1} parent=11 // pred_region
          %p398 = scmp.lt.s32.totalorder %s34, 0
          %s399 = scalar_select %p398, %s34, 0
          %s400 = smul.addr %s399, 8
          %s401 = scalar_lea.vmem %s10, %s400
        $region56: #{tpu_custom_call.1} parent=11 // pred_fallthru
          _
      $region12: #{tpu_custom_call.1} parent=5 // pred_fallthru
        _
      %p402 = scmp.lt.s32.totalorder %s25, 2
      // Predicated region
      $region57: #{tpu_custom_call.1} parent=5 // pred_check
        %p403 = pneg %p402
      $region58: #{tpu_custom_call.1} parent=5 // pred_check_branch
        %405 = sbr.rel (%p403) target = $region60
      $region59: #{tpu_custom_call.1} parent=5 // pred_region
        _
      $region60: #{tpu_custom_call.1} parent=5 // pred_fallthru
        _
      %p406 = scmp.le.s32.totalorder 1, %s25
      %p407 = scmp.lt.s32.totalorder %s25, 3
      %p408 = pnand %p406, %p407
      %p409 = pneg %p408
      // Predicated region
      $region61: #{tpu_custom_call.1} parent=5 // pred_check
        _
      $region62: #{tpu_custom_call.1} parent=5 // pred_check_branch
        %411 = sbr.rel (%p408) target = $region64
      $region63: #{tpu_custom_call.1} parent=5 // pred_region
        %s412 = ssub.s32 %s25, 1
        %p413 = pneg %p58
        %p414 = pneg %p55
        %p415 = pneg %p79
        %p416 = pneg %p76
        %p417 = pneg %p100
        %p418 = pneg %p97
        %p419 = pneg %p121
        %p420 = pneg %p118
        %p421 = scmp.lt.s32.totalorder %s34, 0
        %s422 = scalar_select %p421, %s34, 0
        %s423 = smul.addr %s422, 8
        %s424 = scalar_lea.vmem %s4, %s423
        %p425 = pneg %p147
        %p426 = pneg %p144
        %p427 = pneg %p168
        %p428 = pneg %p165
        %p429 = pneg %p189
        %p430 = pneg %p186
        %p431 = pneg %p210
        %p432 = pneg %p207
        %p433 = pneg %p231
        %p434 = pneg %p228
        %s435 = smul.u32 8, %s34
        %p436 = scmp.lt.s32.totalorder %s435, 7
        %s437 = scalar_select %p436, %s435, 7
        %s438 = smul.addr %s437, 8
        %s439 = smul.addr %s438, 8
        %s440 = scalar_lea.vmem %s9, %s439
        %p441 = pneg %p257
        %p442 = pneg %p254
        %p443 = scmp.lt.s32.totalorder %s34, 0
        %s444 = scalar_select %p443, %s34, 0
        %s445 = smul.addr %s444, 8
        %s446 = scalar_lea.vmem %s10, %s445
        %p447 = pneg %p283
        %p448 = pneg %p280
        %p449 = pneg %p311
        %p450 = pneg %p308
        %s451 = sand.u32 %s298, 1
        %s452 = scalar_lea.sflag [#allocation5], %s451
        %s453 = sand.u32 %s298, 1
        %s454 = smul.addr %s453, 24
        %s455 = scalar_lea.vmem [#allocation4], %s454
        %p456 = pneg %p339
        %p457 = pneg %p336
        %s458 = sand.u32 %s326, 1
        %s459 = scalar_lea.sflag [#allocation7], %s458
        %s460 = sand.u32 %s326, 1
        %s461 = smul.addr %s460, 24
        %s462 = scalar_lea.vmem [#allocation6], %s461
        %p463 = scmp.lt.s32.totalorder %s34, 0
        %s464 = scalar_select %p463, %s34, 0
        %s465 = smul.addr %s464, 8
        %s466 = scalar_lea.vmem %s4, %s465
        %s467 = smul.u32 8, %s34
        %p468 = scmp.lt.s32.totalorder %s467, 7
        %s469 = scalar_select %p468, %s467, 7
        %s470 = smul.addr %s469, 8
        %s471 = smul.addr %s470, 8
        %s472 = scalar_lea.vmem %s9, %s471
        %s473 = smul.u32 8, %s34
        %p474 = scmp.lt.s32.totalorder %s34, 0
        %s475 = scalar_select %p474, %s34, 0
        %s476 = smul.addr %s475, 8
        %s477 = scalar_lea.vmem %s10, %s476
        %s478 = smul.u32 3, %s35
        %s479 = smul.u32 3, %s35
        %v480 = vlaneseq
        %v481 = vand.u32 %v480, 127
        %p482 = scmp.eq.s32.totalorder %s35, 0
        // Predicated region
        $region65: #{tpu_custom_call.1} parent=63 // pred_check
          %p483 = pneg %p482
        $region66: #{tpu_custom_call.1} parent=63 // pred_check_branch
          %485 = sbr.rel (%p483) target = $region68
        $region67: #{tpu_custom_call.1} parent=63 // pred_region
          %v486 = vld [vmem:[%s466] sm:$0xff]
          %v487 = vld [vmem:[%s2] sm:$0xff]
          %v488 = vld [vmem:[%s2 + $0x8] sm:$0xff]
          %v489 = vld [vmem:[%s2 + $0x10] sm:$0xff]
          %v490 = vld [vmem:[%s2 + $0x18] sm:$0xff]
          %v491 = vld [vmem:[%s2 + $0x20] sm:$0xff]
          %v492 = vld [vmem:[%s2 + $0x28] sm:$0xff]
          %v493 = vld [vmem:[%s2 + $0x30] sm:$0xff]
          %v494 = vld [vmem:[%s2 + $0x38] sm:$0xff]
          %v495 = vld [vmem:[%s2 + $0x40] sm:$0xff]
          %v496 = vld [vmem:[%s2 + $0x48] sm:$0xff]
          %v497 = vld [vmem:[%s2 + $0x50] sm:$0xff]
          %v498 = vld [vmem:[%s2 + $0x58] sm:$0xff]
          %v499 = vld [vmem:[%s2 + $0x60] sm:$0xff]
          %v500 = vld [vmem:[%s2 + $0x68] sm:$0xff]
          %v501 = vld [vmem:[%s2 + $0x70] sm:$0xff]
          %v502 = vld [vmem:[%s2 + $0x78] sm:$0xff]
          %v503 = vld [vmem:[%s3] sm:$0x1]
          %v505 = vlaneseq
          %v506 = vshrl.u32 %v505, 7
          %v507 = vsub.s32 0, %v506
          %v508 = vrot.slane %v503, %v507
          %510 = vmatprep.subr.mxu0 0.0
          %511 = vmatpush1.msra.mxu0 %v487
          %512 = vmatprep.subr.mxu0 0.0
          %513 = vmatpush1.msra.mxu0 %v488
          %514 = vmatprep.subr.mxu0 0.0
          %515 = vmatpush1.msra.mxu0 %v489
          %516 = vmatprep.subr.mxu0 0.0
          %517 = vmatpush1.msra.mxu0 %v490
          %518 = vmatprep.subr.mxu0 0.0
          %519 = vmatpush1.msra.mxu0 %v491
          %520 = vmatprep.subr.mxu0 0.0
          %521 = vmatpush1.msra.mxu0 %v492
          %522 = vmatprep.subr.mxu0 0.0
          %523 = vmatpush1.msra.mxu0 %v493
          %524 = vmatprep.subr.mxu0 0.0
          %525 = vmatpush1.msra.mxu0 %v494
          %526 = vmatprep.subr.mxu0 0.0
          %527 = vmatpush1.msra.mxu0 %v495
          %528 = vmatprep.subr.mxu0 0.0
          %529 = vmatpush1.msra.mxu0 %v496
          %530 = vmatprep.subr.mxu0 0.0
          %531 = vmatpush1.msra.mxu0 %v497
          %532 = vmatprep.subr.mxu0 0.0
          %533 = vmatpush1.msra.mxu0 %v498
          %534 = vmatprep.subr.mxu0 0.0
          %535 = vmatpush1.msra.mxu0 %v499
          %536 = vmatprep.subr.mxu0 0.0
          %537 = vmatpush1.msra.mxu0 %v500
          %538 = vmatprep.subr.mxu0 0.0
          %539 = vmatpush1.msra.mxu0 %v501
          %540 = vmatprep.subr.mxu0 0.0
          %541 = vmatpush1.msra.mxu0 %v502
          %542 = vmatprep.subr.mxu0 0.0
          %543 = vmatpush1.msra.mxu0 0.0
          %544 = vmatprep.subr.mxu0 0.0
          %545 = vmatpush1.msra.mxu0 0.0
          %546 = vmatprep.subr.mxu0 0.0
          %547 = vmatpush1.msra.mxu0 0.0
          %548 = vmatprep.subr.mxu0 0.0
          %549 = vmatpush1.msra.mxu0 0.0
          %550 = vmatprep.subr.mxu0 0.0
          %551 = vmatpush1.msra.mxu0 0.0
          %552 = vmatprep.subr.mxu0 0.0
          %553 = vmatpush1.msra.mxu0 0.0
          %554 = vmatprep.subr.mxu0 0.0
          %555 = vmatpush1.msra.mxu0 0.0
          %556 = vmatprep.subr.mxu0 0.0
          %557 = vmatpush1.msra.mxu0 0.0
          %558 = vmatprep.subr.mxu0 0.0
          %559 = vmatpush1.msra.mxu0 0.0
          %560 = vmatprep.subr.mxu0 0.0
          %561 = vmatpush1.msra.mxu0 0.0
          %562 = vmatprep.subr.mxu0 0.0
          %563 = vmatpush1.msra.mxu0 0.0
          %564 = vmatprep.subr.mxu0 0.0
          %565 = vmatpush1.msra.mxu0 0.0
          %566 = vmatprep.subr.mxu0 0.0
          %567 = vmatpush1.msra.mxu0 0.0
          %568 = vmatprep.subr.mxu0 0.0
          %569 = vmatpush1.msra.mxu0 0.0
          %570 = vmatprep.subr.mxu0 0.0
          %571 = vmatpush1.msra.mxu0 0.0
          %572 = vmatprep.subr.mxu0 0.0
          %573 = vmatpush1.msra.mxu0 0.0
          %574 = vmatprep.mubr.f32.mxu0 0.0
          %575 = vmatmul.mubr.f32.gmra.mrb[0].mxu0 %v486
          %v576 = vpop.f32.mrb[0].mxu0
          %v577 = vadd.f32 %v508, %v576
          %v578 = vpop.f32.mrb[0].mxu0
          %579 = vdwg.mxu0
          %v580 = vmax.f32 %v577, 0.0
          %vm581 = vcmask 523264
          %582 = vst.msk [vmem:[#allocation3] sm:$0xff] %vm581, %v580
          %v583 = vld [vmem:[%s0 + $0x2] sm:$0x1]
          %v584 = vlaneseq
          %v585 = vshrl.u32 %v584, 7
          %v586 = vsub.s32 0, %v585
          %v587 = vrot.slane %v583, %v586
          %588 = vst.msk [vmem:[#allocation2] sm:$0xff] %vm581, %v587
        $region68: #{tpu_custom_call.1} parent=63 // pred_fallthru
          _
        %v589 = vld [vmem:[#allocation2] sm:$0xff]
        %v590 = vld [vmem:[#allocation3] sm:$0xff]
        %592 = vrot.lane.b32.xlu0 %v590, 64
        %v593 = vpop.permute.xlu0 %592
        %vm595 = vcmask 523264
        %v596 = vsel %vm595, %v589, %v593
        %v597 = vld [vmem:[%s5] sm:$0xff]
        %v598 = vld [vmem:[%s5 + $0x8] sm:$0xff]
        %v599 = vld [vmem:[%s5 + $0x10] sm:$0xff]
        %v600 = vld [vmem:[%s5 + $0x18] sm:$0xff]
        %v601 = vld [vmem:[%s5 + $0x20] sm:$0xff]
        %v602 = vld [vmem:[%s5 + $0x28] sm:$0xff]
        %v603 = vld [vmem:[%s5 + $0x30] sm:$0xff]
        %v604 = vld [vmem:[%s5 + $0x38] sm:$0xff]
        %v605 = vld [vmem:[%s5 + $0x40] sm:$0xff]
        %v606 = vld [vmem:[%s5 + $0x48] sm:$0xff]
        %v607 = vld [vmem:[%s5 + $0x50] sm:$0xff]
        %v608 = vld [vmem:[%s5 + $0x58] sm:$0xff]
        %v609 = vld [vmem:[%s5 + $0x60] sm:$0xff]
        %v610 = vld [vmem:[%s5 + $0x68] sm:$0xff]
        %v611 = vld [vmem:[%s5 + $0x70] sm:$0xff]
        %v612 = vld [vmem:[%s5 + $0x78] sm:$0xff]
        %v613 = vld [vmem:[%s7] sm:$0x1]
        %v615 = vlaneseq
        %v616 = vshrl.u32 %v615, 7
        %v617 = vsub.s32 0, %v616
        %v618 = vrot.slane %v613, %v617
        %620 = vmatprep.subr.mxu0 0.0
        %621 = vmatpush1.msra.mxu0 %v597
        %622 = vmatprep.subr.mxu0 0.0
        %623 = vmatpush1.msra.mxu0 %v598
        %624 = vmatprep.subr.mxu0 0.0
        %625 = vmatpush1.msra.mxu0 %v599
        %626 = vmatprep.subr.mxu0 0.0
        %627 = vmatpush1.msra.mxu0 %v600
        %628 = vmatprep.subr.mxu0 0.0
        %629 = vmatpush1.msra.mxu0 %v601
        %630 = vmatprep.subr.mxu0 0.0
        %631 = vmatpush1.msra.mxu0 %v602
        %632 = vmatprep.subr.mxu0 0.0
        %633 = vmatpush1.msra.mxu0 %v603
        %634 = vmatprep.subr.mxu0 0.0
        %635 = vmatpush1.msra.mxu0 %v604
        %636 = vmatprep.subr.mxu0 0.0
        %637 = vmatpush1.msra.mxu0 %v605
        %638 = vmatprep.subr.mxu0 0.0
        %639 = vmatpush1.msra.mxu0 %v606
        %640 = vmatprep.subr.mxu0 0.0
        %641 = vmatpush1.msra.mxu0 %v607
        %642 = vmatprep.subr.mxu0 0.0
        %643 = vmatpush1.msra.mxu0 %v608
        %644 = vmatprep.subr.mxu0 0.0
        %645 = vmatpush1.msra.mxu0 %v609
        %646 = vmatprep.subr.mxu0 0.0
        %647 = vmatpush1.msra.mxu0 %v610
        %648 = vmatprep.subr.mxu0 0.0
        %649 = vmatpush1.msra.mxu0 %v611
        %650 = vmatprep.subr.mxu0 0.0
        %651 = vmatpush1.msra.mxu0 %v612
        %652 = vmatprep.subr.mxu0 0.0
        %653 = vmatpush1.msra.mxu0 0.0
        %654 = vmatprep.subr.mxu0 0.0
        %655 = vmatpush1.msra.mxu0 0.0
        %656 = vmatprep.subr.mxu0 0.0
        %657 = vmatpush1.msra.mxu0 0.0
        %658 = vmatprep.subr.mxu0 0.0
        %659 = vmatpush1.msra.mxu0 0.0
        %660 = vmatprep.subr.mxu0 0.0
        %661 = vmatpush1.msra.mxu0 0.0
        %662 = vmatprep.subr.mxu0 0.0
        %663 = vmatpush1.msra.mxu0 0.0
        %664 = vmatprep.subr.mxu0 0.0
        %665 = vmatpush1.msra.mxu0 0.0
        %666 = vmatprep.subr.mxu0 0.0
        %667 = vmatpush1.msra.mxu0 0.0
        %668 = vmatprep.subr.mxu0 0.0
        %669 = vmatpush1.msra.mxu0 0.0
        %670 = vmatprep.subr.mxu0 0.0
        %671 = vmatpush1.msra.mxu0 0.0
        %672 = vmatprep.subr.mxu0 0.0
        %673 = vmatpush1.msra.mxu0 0.0
        %674 = vmatprep.subr.mxu0 0.0
        %675 = vmatpush1.msra.mxu0 0.0
        %676 = vmatprep.subr.mxu0 0.0
        %677 = vmatpush1.msra.mxu0 0.0
        %678 = vmatprep.subr.mxu0 0.0
        %679 = vmatpush1.msra.mxu0 0.0
        %680 = vmatprep.subr.mxu0 0.0
        %681 = vmatpush1.msra.mxu0 0.0
        %682 = vmatprep.subr.mxu0 0.0
        %683 = vmatpush1.msra.mxu0 0.0
        %684 = vmatprep.mubr.f32.mxu0 0.0
        %685 = vmatmul.mubr.f32.gmra.mrb[0].mxu0 %v596
        %v686 = vpop.f32.mrb[0].mxu0
        %v687 = vadd.f32 %v618, %v686
        %v688 = vpop.f32.mrb[0].mxu0
        %689 = vdwg.mxu0
        %v690 = vxor.u32 %v687, 2147483648
        %v691 = vmul.f32 %v690, 1.442695
        %v692 = vpow.pop %v691
        %v693 = vadd.f32 %v692, 1.0
        %v694 = vrcp.pop %v693
        %v695 = vmul.f32 1.0, %v694
        %s696 = scalar_lea.vmem %s5, 128
        %v697 = vld [vmem:[%s696] sm:$0xff]
        %v698 = vld [vmem:[%s696 + $0x8] sm:$0xff]
        %v699 = vld [vmem:[%s696 + $0x10] sm:$0xff]
        %v700 = vld [vmem:[%s696 + $0x18] sm:$0xff]
        %v701 = vld [vmem:[%s696 + $0x20] sm:$0xff]
        %v702 = vld [vmem:[%s696 + $0x28] sm:$0xff]
        %v703 = vld [vmem:[%s696 + $0x30] sm:$0xff]
        %v704 = vld [vmem:[%s696 + $0x38] sm:$0xff]
        %v705 = vld [vmem:[%s696 + $0x40] sm:$0xff]
        %v706 = vld [vmem:[%s696 + $0x48] sm:$0xff]
        %v707 = vld [vmem:[%s696 + $0x50] sm:$0xff]
        %v708 = vld [vmem:[%s696 + $0x58] sm:$0xff]
        %v709 = vld [vmem:[%s696 + $0x60] sm:$0xff]
        %v710 = vld [vmem:[%s696 + $0x68] sm:$0xff]
        %v711 = vld [vmem:[%s696 + $0x70] sm:$0xff]
        %v712 = vld [vmem:[%s696 + $0x78] sm:$0xff]
        %s713 = scalar_lea.vmem %s7, 1
        %v714 = vld [vmem:[%s713] sm:$0x1]
        %v716 = vlaneseq
        %v717 = vshrl.u32 %v716, 7
        %v718 = vsub.s32 0, %v717
        %v719 = vrot.slane %v714, %v718
        %721 = vmatprep.subr.mxu0 0.0
        %722 = vmatpush1.msra.mxu0 %v697
        %723 = vmatprep.subr.mxu0 0.0
        %724 = vmatpush1.msra.mxu0 %v698
        %725 = vmatprep.subr.mxu0 0.0
        %726 = vmatpush1.msra.mxu0 %v699
        %727 = vmatprep.subr.mxu0 0.0
        %728 = vmatpush1.msra.mxu0 %v700
        %729 = vmatprep.subr.mxu0 0.0
        %730 = vmatpush1.msra.mxu0 %v701
        %731 = vmatprep.subr.mxu0 0.0
        %732 = vmatpush1.msra.mxu0 %v702
        %733 = vmatprep.subr.mxu0 0.0
        %734 = vmatpush1.msra.mxu0 %v703
        %735 = vmatprep.subr.mxu0 0.0
        %736 = vmatpush1.msra.mxu0 %v704
        %737 = vmatprep.subr.mxu0 0.0
        %738 = vmatpush1.msra.mxu0 %v705
        %739 = vmatprep.subr.mxu0 0.0
        %740 = vmatpush1.msra.mxu0 %v706
        %741 = vmatprep.subr.mxu0 0.0
        %742 = vmatpush1.msra.mxu0 %v707
        %743 = vmatprep.subr.mxu0 0.0
        %744 = vmatpush1.msra.mxu0 %v708
        %745 = vmatprep.subr.mxu0 0.0
        %746 = vmatpush1.msra.mxu0 %v709
        %747 = vmatprep.subr.mxu0 0.0
        %748 = vmatpush1.msra.mxu0 %v710
        %749 = vmatprep.subr.mxu0 0.0
        %750 = vmatpush1.msra.mxu0 %v711
        %751 = vmatprep.subr.mxu0 0.0
        %752 = vmatpush1.msra.mxu0 %v712
        %753 = vmatprep.subr.mxu0 0.0
        %754 = vmatpush1.msra.mxu0 0.0
        %755 = vmatprep.subr.mxu0 0.0
        %756 = vmatpush1.msra.mxu0 0.0
        %757 = vmatprep.subr.mxu0 0.0
        %758 = vmatpush1.msra.mxu0 0.0
        %759 = vmatprep.subr.mxu0 0.0
        %760 = vmatpush1.msra.mxu0 0.0
        %761 = vmatprep.subr.mxu0 0.0
        %762 = vmatpush1.msra.mxu0 0.0
        %763 = vmatprep.subr.mxu0 0.0
        %764 = vmatpush1.msra.mxu0 0.0
        %765 = vmatprep.subr.mxu0 0.0
        %766 = vmatpush1.msra.mxu0 0.0
        %767 = vmatprep.subr.mxu0 0.0
        %768 = vmatpush1.msra.mxu0 0.0
        %769 = vmatprep.subr.mxu0 0.0
        %770 = vmatpush1.msra.mxu0 0.0
        %771 = vmatprep.subr.mxu0 0.0
        %772 = vmatpush1.msra.mxu0 0.0
        %773 = vmatprep.subr.mxu0 0.0
        %774 = vmatpush1.msra.mxu0 0.0
        %775 = vmatprep.subr.mxu0 0.0
        %776 = vmatpush1.msra.mxu0 0.0
        %777 = vmatprep.subr.mxu0 0.0
        %778 = vmatpush1.msra.mxu0 0.0
        %779 = vmatprep.subr.mxu0 0.0
        %780 = vmatpush1.msra.mxu0 0.0
        %781 = vmatprep.subr.mxu0 0.0
        %782 = vmatpush1.msra.mxu0 0.0
        %783 = vmatprep.subr.mxu0 0.0
        %784 = vmatpush1.msra.mxu0 0.0
        %785 = vmatprep.mubr.f32.mxu0 0.0
        %786 = vmatmul.mubr.f32.gmra.mrb[0].mxu0 %v596
        %v787 = vpop.f32.mrb[0].mxu0
        %v788 = vadd.f32 %v719, %v787
        %v789 = vpop.f32.mrb[0].mxu0
        %790 = vdwg.mxu0
        %v791 = vxor.u32 %v788, 2147483648
        %v792 = vmul.f32 %v791, 1.442695
        %v793 = vpow.pop %v792
        %v794 = vadd.f32 %v793, 1.0
        %v795 = vrcp.pop %v794
        %v796 = vmul.f32 1.0, %v795
        %v797 = vld [vmem:[%s6] sm:$0xff]
        %v798 = vld [vmem:[%s6 + $0x8] sm:$0xff]
        %v799 = vld [vmem:[%s6 + $0x10] sm:$0xff]
        %v800 = vld [vmem:[%s6 + $0x18] sm:$0xff]
        %v801 = vld [vmem:[%s6 + $0x20] sm:$0xff]
        %v802 = vld [vmem:[%s6 + $0x28] sm:$0xff]
        %v803 = vld [vmem:[%s6 + $0x30] sm:$0xff]
        %v804 = vld [vmem:[%s6 + $0x38] sm:$0xff]
        %v805 = vld [vmem:[%s8] sm:$0x1]
        %v807 = vlaneseq
        %v808 = vshrl.u32 %v807, 7
        %v809 = vsub.s32 0, %v808
        %v810 = vrot.slane %v805, %v809
        %v813 = vsel %vm595, %v589, 0
        %815 = vmatprep.subr.mxu0 0.0
        %816 = vmatpush1.msra.mxu0 %v797
        %817 = vmatprep.subr.mxu0 0.0
        %818 = vmatpush1.msra.mxu0 %v798
        %819 = vmatprep.subr.mxu0 0.0
        %820 = vmatpush1.msra.mxu0 %v799
        %821 = vmatprep.subr.mxu0 0.0
        %822 = vmatpush1.msra.mxu0 %v800
        %823 = vmatprep.subr.mxu0 0.0
        %824 = vmatpush1.msra.mxu0 %v801
        %825 = vmatprep.subr.mxu0 0.0
        %826 = vmatpush1.msra.mxu0 %v802
        %827 = vmatprep.subr.mxu0 0.0
        %828 = vmatpush1.msra.mxu0 %v803
        %829 = vmatprep.subr.mxu0 0.0
        %830 = vmatpush1.msra.mxu0 %v804
        %831 = vmatprep.subr.mxu0 0.0
        %832 = vmatpush1.msra.mxu0 0.0
        %833 = vmatprep.subr.mxu0 0.0
        %834 = vmatpush1.msra.mxu0 0.0
        %835 = vmatprep.subr.mxu0 0.0
        %836 = vmatpush1.msra.mxu0 0.0
        %837 = vmatprep.subr.mxu0 0.0
        %838 = vmatpush1.msra.mxu0 0.0
        %839 = vmatprep.subr.mxu0 0.0
        %840 = vmatpush1.msra.mxu0 0.0
        %841 = vmatprep.subr.mxu0 0.0
        %842 = vmatpush1.msra.mxu0 0.0
        %843 = vmatprep.subr.mxu0 0.0
        %844 = vmatpush1.msra.mxu0 0.0
        %845 = vmatprep.subr.mxu0 0.0
        %846 = vmatpush1.msra.mxu0 0.0
        %847 = vmatprep.subr.mxu0 0.0
        %848 = vmatpush1.msra.mxu0 0.0
        %849 = vmatprep.subr.mxu0 0.0
        %850 = vmatpush1.msra.mxu0 0.0
        %851 = vmatprep.subr.mxu0 0.0
        %852 = vmatpush1.msra.mxu0 0.0
        %853 = vmatprep.subr.mxu0 0.0
        %854 = vmatpush1.msra.mxu0 0.0
        %855 = vmatprep.subr.mxu0 0.0
        %856 = vmatpush1.msra.mxu0 0.0
        %857 = vmatprep.subr.mxu0 0.0
        %858 = vmatpush1.msra.mxu0 0.0
        %859 = vmatprep.subr.mxu0 0.0
        %860 = vmatpush1.msra.mxu0 0.0
        %861 = vmatprep.subr.mxu0 0.0
        %862 = vmatpush1.msra.mxu0 0.0
        %863 = vmatprep.subr.mxu0 0.0
        %864 = vmatpush1.msra.mxu0 0.0
        %865 = vmatprep.subr.mxu0 0.0
        %866 = vmatpush1.msra.mxu0 0.0
        %867 = vmatprep.subr.mxu0 0.0
        %868 = vmatpush1.msra.mxu0 0.0
        %869 = vmatprep.subr.mxu0 0.0
        %870 = vmatpush1.msra.mxu0 0.0
        %871 = vmatprep.subr.mxu0 0.0
        %872 = vmatpush1.msra.mxu0 0.0
        %873 = vmatprep.subr.mxu0 0.0
        %874 = vmatpush1.msra.mxu0 0.0
        %875 = vmatprep.subr.mxu0 0.0
        %876 = vmatpush1.msra.mxu0 0.0
        %877 = vmatprep.subr.mxu0 0.0
        %878 = vmatpush1.msra.mxu0 0.0
        %879 = vmatprep.mubr.f32.mxu0 0.0
        %880 = vmatmul.mubr.f32.gmra.mrb[0].mxu0 %v813
        %v881 = vpop.f32.mrb[0].mxu0
        %v882 = vadd.f32 %v810, %v881
        %v883 = vpop.f32.mrb[0].mxu0
        %884 = vdwg.mxu0
        %s885 = scalar_lea.vmem %s6, 64
        %v886 = vld [vmem:[%s885] sm:$0xff]
        %v887 = vld [vmem:[%s885 + $0x8] sm:$0xff]
        %v888 = vld [vmem:[%s885 + $0x10] sm:$0xff]
        %v889 = vld [vmem:[%s885 + $0x18] sm:$0xff]
        %v890 = vld [vmem:[%s885 + $0x20] sm:$0xff]
        %v891 = vld [vmem:[%s885 + $0x28] sm:$0xff]
        %v892 = vld [vmem:[%s885 + $0x30] sm:$0xff]
        %v893 = vld [vmem:[%s885 + $0x38] sm:$0xff]
        %s894 = scalar_lea.vmem %s8, 1
        %v895 = vld [vmem:[%s894] sm:$0x1]
        %v897 = vlaneseq
        %v898 = vshrl.u32 %v897, 7
        %v899 = vsub.s32 0, %v898
        %v900 = vrot.slane %v895, %v899
        %v902 = vsel %vm595, %v590, 0
        %904 = vmatprep.subr.mxu0 0.0
        %905 = vmatpush1.msra.mxu0 %v886
        %906 = vmatprep.subr.mxu0 0.0
        %907 = vmatpush1.msra.mxu0 %v887
        %908 = vmatprep.subr.mxu0 0.0
        %909 = vmatpush1.msra.mxu0 %v888
        %910 = vmatprep.subr.mxu0 0.0
        %911 = vmatpush1.msra.mxu0 %v889
        %912 = vmatprep.subr.mxu0 0.0
        %913 = vmatpush1.msra.mxu0 %v890
        %914 = vmatprep.subr.mxu0 0.0
        %915 = vmatpush1.msra.mxu0 %v891
        %916 = vmatprep.subr.mxu0 0.0
        %917 = vmatpush1.msra.mxu0 %v892
        %918 = vmatprep.subr.mxu0 0.0
        %919 = vmatpush1.msra.mxu0 %v893
        %920 = vmatprep.subr.mxu0 0.0
        %921 = vmatpush1.msra.mxu0 0.0
        %922 = vmatprep.subr.mxu0 0.0
        %923 = vmatpush1.msra.mxu0 0.0
        %924 = vmatprep.subr.mxu0 0.0
        %925 = vmatpush1.msra.mxu0 0.0
        %926 = vmatprep.subr.mxu0 0.0
        %927 = vmatpush1.msra.mxu0 0.0
        %928 = vmatprep.subr.mxu0 0.0
        %929 = vmatpush1.msra.mxu0 0.0
        %930 = vmatprep.subr.mxu0 0.0
        %931 = vmatpush1.msra.mxu0 0.0
        %932 = vmatprep.subr.mxu0 0.0
        %933 = vmatpush1.msra.mxu0 0.0
        %934 = vmatprep.subr.mxu0 0.0
        %935 = vmatpush1.msra.mxu0 0.0
        %936 = vmatprep.subr.mxu0 0.0
        %937 = vmatpush1.msra.mxu0 0.0
        %938 = vmatprep.subr.mxu0 0.0
        %939 = vmatpush1.msra.mxu0 0.0
        %940 = vmatprep.subr.mxu0 0.0
        %941 = vmatpush1.msra.mxu0 0.0
        %942 = vmatprep.subr.mxu0 0.0
        %943 = vmatpush1.msra.mxu0 0.0
        %944 = vmatprep.subr.mxu0 0.0
        %945 = vmatpush1.msra.mxu0 0.0
        %946 = vmatprep.subr.mxu0 0.0
        %947 = vmatpush1.msra.mxu0 0.0
        %948 = vmatprep.subr.mxu0 0.0
        %949 = vmatpush1.msra.mxu0 0.0
        %950 = vmatprep.subr.mxu0 0.0
        %951 = vmatpush1.msra.mxu0 0.0
        %952 = vmatprep.subr.mxu0 0.0
        %953 = vmatpush1.msra.mxu0 0.0
        %954 = vmatprep.subr.mxu0 0.0
        %955 = vmatpush1.msra.mxu0 0.0
        %956 = vmatprep.subr.mxu0 0.0
        %957 = vmatpush1.msra.mxu0 0.0
        %958 = vmatprep.subr.mxu0 0.0
        %959 = vmatpush1.msra.mxu0 0.0
        %960 = vmatprep.subr.mxu0 0.0
        %961 = vmatpush1.msra.mxu0 0.0
        %962 = vmatprep.subr.mxu0 0.0
        %963 = vmatpush1.msra.mxu0 0.0
        %964 = vmatprep.subr.mxu0 0.0
        %965 = vmatpush1.msra.mxu0 0.0
        %966 = vmatprep.subr.mxu0 0.0
        %967 = vmatpush1.msra.mxu0 0.0
        %968 = vmatprep.mubr.f32.mxu0 0.0
        %969 = vmatmul.mubr.f32.gmra.mrb[0].mxu0 %v902
        %v970 = vpop.f32.mrb[0].mxu0
        %v971 = vadd.f32 %v900, %v970
        %v972 = vpop.f32.mrb[0].mxu0
        %973 = vdwg.mxu0
        %v974 = vmul.f32 %v695, %v971
        %v975 = vadd.f32 %v882, %v974
        %v976 = vtanh.pop %v975
        %v977 = vsub.f32 1.0, %v796
        %v978 = vmul.f32 %v977, %v976
        %v979 = vmul.f32 %v796, %v590
        %v980 = vadd.f32 %v978, %v979
        %v981 = vld [vmem:[%s472] sm:$0xff]
        %v982 = vld [vmem:[%s472 + $0x8] sm:$0xff]
        %v983 = vld [vmem:[%s472 + $0x10] sm:$0xff]
        %v984 = vld [vmem:[%s472 + $0x18] sm:$0xff]
        %v985 = vld [vmem:[%s472 + $0x20] sm:$0xff]
        %v986 = vld [vmem:[%s472 + $0x28] sm:$0xff]
        %v987 = vld [vmem:[%s472 + $0x30] sm:$0xff]
        %v988 = vld [vmem:[%s472 + $0x38] sm:$0xff]
        %v989 = vld [vmem:[%s472 + $0x40] sm:$0xff]
        %v990 = vld [vmem:[%s472 + $0x48] sm:$0xff]
        %v991 = vld [vmem:[%s472 + $0x50] sm:$0xff]
        %v992 = vld [vmem:[%s472 + $0x58] sm:$0xff]
        %v993 = vld [vmem:[%s472 + $0x60] sm:$0xff]
        %v994 = vld [vmem:[%s472 + $0x68] sm:$0xff]
        %v995 = vld [vmem:[%s472 + $0x70] sm:$0xff]
        %v996 = vld [vmem:[%s472 + $0x78] sm:$0xff]
        %v997 = vld [vmem:[%s472 + $0x80] sm:$0xff]
        %v998 = vld [vmem:[%s472 + $0x88] sm:$0xff]
        %v999 = vld [vmem:[%s472 + $0x90] sm:$0xff]
        %v1000 = vld [vmem:[%s472 + $0x98] sm:$0xff]
        %v1001 = vld [vmem:[%s472 + $0xa0] sm:$0xff]
        %v1002 = vld [vmem:[%s472 + $0xa8] sm:$0xff]
        %v1003 = vld [vmem:[%s472 + $0xb0] sm:$0xff]
        %v1004 = vld [vmem:[%s472 + $0xb8] sm:$0xff]
        %v1005 = vld [vmem:[%s472 + $0xc0] sm:$0xff]
        %v1006 = vld [vmem:[%s472 + $0xc8] sm:$0xff]
        %v1007 = vld [vmem:[%s472 + $0xd0] sm:$0xff]
        %v1008 = vld [vmem:[%s472 + $0xd8] sm:$0xff]
        %v1009 = vld [vmem:[%s472 + $0xe0] sm:$0xff]
        %v1010 = vld [vmem:[%s472 + $0xe8] sm:$0xff]
        %v1011 = vld [vmem:[%s472 + $0xf0] sm:$0xff]
        %v1012 = vld [vmem:[%s472 + $0xf8] sm:$0xff]
        %v1013 = vld [vmem:[%s472 + $0x100] sm:$0xff]
        %v1014 = vld [vmem:[%s472 + $0x108] sm:$0xff]
        %v1015 = vld [vmem:[%s472 + $0x110] sm:$0xff]
        %v1016 = vld [vmem:[%s472 + $0x118] sm:$0xff]
        %v1017 = vld [vmem:[%s472 + $0x120] sm:$0xff]
        %v1018 = vld [vmem:[%s472 + $0x128] sm:$0xff]
        %v1019 = vld [vmem:[%s472 + $0x130] sm:$0xff]
        %v1020 = vld [vmem:[%s472 + $0x138] sm:$0xff]
        %v1021 = vld [vmem:[%s472 + $0x140] sm:$0xff]
        %v1022 = vld [vmem:[%s472 + $0x148] sm:$0xff]
        %v1023 = vld [vmem:[%s472 + $0x150] sm:$0xff]
        %v1024 = vld [vmem:[%s472 + $0x158] sm:$0xff]
        %v1025 = vld [vmem:[%s472 + $0x160] sm:$0xff]
        %v1026 = vld [vmem:[%s472 + $0x168] sm:$0xff]
        %v1027 = vld [vmem:[%s472 + $0x170] sm:$0xff]
        %v1028 = vld [vmem:[%s472 + $0x178] sm:$0xff]
        %v1029 = vld [vmem:[%s472 + $0x180] sm:$0xff]
        %v1030 = vld [vmem:[%s472 + $0x188] sm:$0xff]
        %v1031 = vld [vmem:[%s472 + $0x190] sm:$0xff]
        %v1032 = vld [vmem:[%s472 + $0x198] sm:$0xff]
        %v1033 = vld [vmem:[%s472 + $0x1a0] sm:$0xff]
        %v1034 = vld [vmem:[%s472 + $0x1a8] sm:$0xff]
        %v1035 = vld [vmem:[%s472 + $0x1b0] sm:$0xff]
        %v1036 = vld [vmem:[%s472 + $0x1b8] sm:$0xff]
        %v1037 = vld [vmem:[%s472 + $0x1c0] sm:$0xff]
        %v1038 = vld [vmem:[%s472 + $0x1c8] sm:$0xff]
        %v1039 = vld [vmem:[%s472 + $0x1d0] sm:$0xff]
        %v1040 = vld [vmem:[%s472 + $0x1d8] sm:$0xff]
        %v1041 = vld [vmem:[%s472 + $0x1e0] sm:$0xff]
        %v1042 = vld [vmem:[%s472 + $0x1e8] sm:$0xff]
        %v1043 = vld [vmem:[%s472 + $0x1f0] sm:$0xff]
        %v1044 = vld [vmem:[%s472 + $0x1f8] sm:$0xff]
        %v1045 = vlaneseq
        %v1046 = vshrl.u32 %v1045, 7
        %v1047 = vsub.s32 0, %v1046
        %v1048 = vrot.slane %v980, %v1047
        %1050 = vbcast.lane.b32.xlu0 %v1048, 256
        %v1051 = vpop.permute.xlu0 %1050
        %s1053 = sor.u32 256, 8
        %1054 = vbcast.lane.b32.xlu0 %v1048, %s1053
        %v1055 = vpop.permute.xlu0 %1054
        %s1057 = sor.u32 256, 16
        %1058 = vbcast.lane.b32.xlu0 %v1048, %s1057
        %v1059 = vpop.permute.xlu0 %1058
        %s1061 = sor.u32 256, 24
        %1062 = vbcast.lane.b32.xlu0 %v1048, %s1061
        %v1063 = vpop.permute.xlu0 %1062
        %s1065 = sor.u32 256, 32
        %1066 = vbcast.lane.b32.xlu0 %v1048, %s1065
        %v1067 = vpop.permute.xlu0 %1066
        %s1069 = sor.u32 256, 40
        %1070 = vbcast.lane.b32.xlu0 %v1048, %s1069
        %v1071 = vpop.permute.xlu0 %1070
        %s1073 = sor.u32 256, 48
        %1074 = vbcast.lane.b32.xlu0 %v1048, %s1073
        %v1075 = vpop.permute.xlu0 %1074
        %s1077 = sor.u32 256, 56
        %1078 = vbcast.lane.b32.xlu0 %v1048, %s1077
        %v1079 = vpop.permute.xlu0 %1078
        %v1080 = vlaneseq
        %v1081 = vshrl.u32 %v1080, 7
        %v1082 = vsub.s32 1, %v1081
        %v1083 = vrot.slane %v980, %v1082
        %1085 = vbcast.lane.b32.xlu0 %v1083, 256
        %v1086 = vpop.permute.xlu0 %1085
        %s1088 = sor.u32 256, 8
        %1089 = vbcast.lane.b32.xlu0 %v1083, %s1088
        %v1090 = vpop.permute.xlu0 %1089
        %s1092 = sor.u32 256, 16
        %1093 = vbcast.lane.b32.xlu0 %v1083, %s1092
        %v1094 = vpop.permute.xlu0 %1093
        %s1096 = sor.u32 256, 24
        %1097 = vbcast.lane.b32.xlu0 %v1083, %s1096
        %v1098 = vpop.permute.xlu0 %1097
        %s1100 = sor.u32 256, 32
        %1101 = vbcast.lane.b32.xlu0 %v1083, %s1100
        %v1102 = vpop.permute.xlu0 %1101
        %s1104 = sor.u32 256, 40
        %1105 = vbcast.lane.b32.xlu0 %v1083, %s1104
        %v1106 = vpop.permute.xlu0 %1105
        %s1108 = sor.u32 256, 48
        %1109 = vbcast.lane.b32.xlu0 %v1083, %s1108
        %v1110 = vpop.permute.xlu0 %1109
        %s1112 = sor.u32 256, 56
        %1113 = vbcast.lane.b32.xlu0 %v1083, %s1112
        %v1114 = vpop.permute.xlu0 %1113
        %v1115 = vlaneseq
        %v1116 = vshrl.u32 %v1115, 7
        %v1117 = vsub.s32 2, %v1116
        %v1118 = vrot.slane %v980, %v1117
        %1120 = vbcast.lane.b32.xlu0 %v1118, 256
        %v1121 = vpop.permute.xlu0 %1120
        %s1123 = sor.u32 256, 8
        %1124 = vbcast.lane.b32.xlu0 %v1118, %s1123
        %v1125 = vpop.permute.xlu0 %1124
        %s1127 = sor.u32 256, 16
        %1128 = vbcast.lane.b32.xlu0 %v1118, %s1127
        %v1129 = vpop.permute.xlu0 %1128
        %s1131 = sor.u32 256, 24
        %1132 = vbcast.lane.b32.xlu0 %v1118, %s1131
        %v1133 = vpop.permute.xlu0 %1132
        %s1135 = sor.u32 256, 32
        %1136 = vbcast.lane.b32.xlu0 %v1118, %s1135
        %v1137 = vpop.permute.xlu0 %1136
        %s1139 = sor.u32 256, 40
        %1140 = vbcast.lane.b32.xlu0 %v1118, %s1139
        %v1141 = vpop.permute.xlu0 %1140
        %s1143 = sor.u32 256, 48
        %1144 = vbcast.lane.b32.xlu0 %v1118, %s1143
        %v1145 = vpop.permute.xlu0 %1144
        %s1147 = sor.u32 256, 56
        %1148 = vbcast.lane.b32.xlu0 %v1118, %s1147
        %v1149 = vpop.permute.xlu0 %1148
        %v1150 = vlaneseq
        %v1151 = vshrl.u32 %v1150, 7
        %v1152 = vsub.s32 3, %v1151
        %v1153 = vrot.slane %v980, %v1152
        %1155 = vbcast.lane.b32.xlu0 %v1153, 256
        %v1156 = vpop.permute.xlu0 %1155
        %s1158 = sor.u32 256, 8
        %1159 = vbcast.lane.b32.xlu0 %v1153, %s1158
        %v1160 = vpop.permute.xlu0 %1159
        %s1162 = sor.u32 256, 16
        %1163 = vbcast.lane.b32.xlu0 %v1153, %s1162
        %v1164 = vpop.permute.xlu0 %1163
        %s1166 = sor.u32 256, 24
        %1167 = vbcast.lane.b32.xlu0 %v1153, %s1166
        %v1168 = vpop.permute.xlu0 %1167
        %s1170 = sor.u32 256, 32
        %1171 = vbcast.lane.b32.xlu0 %v1153, %s1170
        %v1172 = vpop.permute.xlu0 %1171
        %s1174 = sor.u32 256, 40
        %1175 = vbcast.lane.b32.xlu0 %v1153, %s1174
        %v1176 = vpop.permute.xlu0 %1175
        %s1178 = sor.u32 256, 48
        %1179 = vbcast.lane.b32.xlu0 %v1153, %s1178
        %v1180 = vpop.permute.xlu0 %1179
        %s1182 = sor.u32 256, 56
        %1183 = vbcast.lane.b32.xlu0 %v1153, %s1182
        %v1184 = vpop.permute.xlu0 %1183
        %v1185 = vlaneseq
        %v1186 = vshrl.u32 %v1185, 7
        %v1187 = vsub.s32 4, %v1186
        %v1188 = vrot.slane %v980, %v1187
        %1190 = vbcast.lane.b32.xlu0 %v1188, 256
        %v1191 = vpop.permute.xlu0 %1190
        %s1193 = sor.u32 256, 8
        %1194 = vbcast.lane.b32.xlu0 %v1188, %s1193
        %v1195 = vpop.permute.xlu0 %1194
        %s1197 = sor.u32 256, 16
        %1198 = vbcast.lane.b32.xlu0 %v1188, %s1197
        %v1199 = vpop.permute.xlu0 %1198
        %s1201 = sor.u32 256, 24
        %1202 = vbcast.lane.b32.xlu0 %v1188, %s1201
        %v1203 = vpop.permute.xlu0 %1202
        %s1205 = sor.u32 256, 32
        %1206 = vbcast.lane.b32.xlu0 %v1188, %s1205
        %v1207 = vpop.permute.xlu0 %1206
        %s1209 = sor.u32 256, 40
        %1210 = vbcast.lane.b32.xlu0 %v1188, %s1209
        %v1211 = vpop.permute.xlu0 %1210
        %s1213 = sor.u32 256, 48
        %1214 = vbcast.lane.b32.xlu0 %v1188, %s1213
        %v1215 = vpop.permute.xlu0 %1214
        %s1217 = sor.u32 256, 56
        %1218 = vbcast.lane.b32.xlu0 %v1188, %s1217
        %v1219 = vpop.permute.xlu0 %1218
        %v1220 = vlaneseq
        %v1221 = vshrl.u32 %v1220, 7
        %v1222 = vsub.s32 5, %v1221
        %v1223 = vrot.slane %v980, %v1222
        %1225 = vbcast.lane.b32.xlu0 %v1223, 256
        %v1226 = vpop.permute.xlu0 %1225
        %s1228 = sor.u32 256, 8
        %1229 = vbcast.lane.b32.xlu0 %v1223, %s1228
        %v1230 = vpop.permute.xlu0 %1229
        %s1232 = sor.u32 256, 16
        %1233 = vbcast.lane.b32.xlu0 %v1223, %s1232
        %v1234 = vpop.permute.xlu0 %1233
        %s1236 = sor.u32 256, 24
        %1237 = vbcast.lane.b32.xlu0 %v1223, %s1236
        %v1238 = vpop.permute.xlu0 %1237
        %s1240 = sor.u32 256, 32
        %1241 = vbcast.lane.b32.xlu0 %v1223, %s1240
        %v1242 = vpop.permute.xlu0 %1241
        %s1244 = sor.u32 256, 40
        %1245 = vbcast.lane.b32.xlu0 %v1223, %s1244
        %v1246 = vpop.permute.xlu0 %1245
        %s1248 = sor.u32 256, 48
        %1249 = vbcast.lane.b32.xlu0 %v1223, %s1248
        %v1250 = vpop.permute.xlu0 %1249
        %s1252 = sor.u32 256, 56
        %1253 = vbcast.lane.b32.xlu0 %v1223, %s1252
        %v1254 = vpop.permute.xlu0 %1253
        %v1255 = vlaneseq
        %v1256 = vshrl.u32 %v1255, 7
        %v1257 = vsub.s32 6, %v1256
        %v1258 = vrot.slane %v980, %v1257
        %1260 = vbcast.lane.b32.xlu0 %v1258, 256
        %v1261 = vpop.permute.xlu0 %1260
        %s1263 = sor.u32 256, 8
        %1264 = vbcast.lane.b32.xlu0 %v1258, %s1263
        %v1265 = vpop.permute.xlu0 %1264
        %s1267 = sor.u32 256, 16
        %1268 = vbcast.lane.b32.xlu0 %v1258, %s1267
        %v1269 = vpop.permute.xlu0 %1268
        %s1271 = sor.u32 256, 24
        %1272 = vbcast.lane.b32.xlu0 %v1258, %s1271
        %v1273 = vpop.permute.xlu0 %1272
        %s1275 = sor.u32 256, 32
        %1276 = vbcast.lane.b32.xlu0 %v1258, %s1275
        %v1277 = vpop.permute.xlu0 %1276
        %s1279 = sor.u32 256, 40
        %1280 = vbcast.lane.b32.xlu0 %v1258, %s1279
        %v1281 = vpop.permute.xlu0 %1280
        %s1283 = sor.u32 256, 48
        %1284 = vbcast.lane.b32.xlu0 %v1258, %s1283
        %v1285 = vpop.permute.xlu0 %1284
        %s1287 = sor.u32 256, 56
        %1288 = vbcast.lane.b32.xlu0 %v1258, %s1287
        %v1289 = vpop.permute.xlu0 %1288
        %v1290 = vlaneseq
        %v1291 = vshrl.u32 %v1290, 7
        %v1292 = vsub.s32 7, %v1291
        %v1293 = vrot.slane %v980, %v1292
        %1295 = vbcast.lane.b32.xlu0 %v1293, 256
        %v1296 = vpop.permute.xlu0 %1295
        %s1298 = sor.u32 256, 8
        %1299 = vbcast.lane.b32.xlu0 %v1293, %s1298
        %v1300 = vpop.permute.xlu0 %1299
        %s1302 = sor.u32 256, 16
        %1303 = vbcast.lane.b32.xlu0 %v1293, %s1302
        %v1304 = vpop.permute.xlu0 %1303
        %s1306 = sor.u32 256, 24
        %1307 = vbcast.lane.b32.xlu0 %v1293, %s1306
        %v1308 = vpop.permute.xlu0 %1307
        %s1310 = sor.u32 256, 32
        %1311 = vbcast.lane.b32.xlu0 %v1293, %s1310
        %v1312 = vpop.permute.xlu0 %1311
        %s1314 = sor.u32 256, 40
        %1315 = vbcast.lane.b32.xlu0 %v1293, %s1314
        %v1316 = vpop.permute.xlu0 %1315
        %s1318 = sor.u32 256, 48
        %1319 = vbcast.lane.b32.xlu0 %v1293, %s1318
        %v1320 = vpop.permute.xlu0 %1319
        %s1322 = sor.u32 256, 56
        %1323 = vbcast.lane.b32.xlu0 %v1293, %s1322
        %v1324 = vpop.permute.xlu0 %1323
        %v1325 = vmul.f32 %v981, %v1051
        %v1326 = vmul.f32 %v982, %v1055
        %v1327 = vmul.f32 %v983, %v1059
        %v1328 = vmul.f32 %v984, %v1063
        %v1329 = vmul.f32 %v985, %v1067
        %v1330 = vmul.f32 %v986, %v1071
        %v1331 = vmul.f32 %v987, %v1075
        %v1332 = vmul.f32 %v988, %v1079
        %v1333 = vmul.f32 %v989, %v1086
        %v1334 = vmul.f32 %v990, %v1090
        %v1335 = vmul.f32 %v991, %v1094
        %v1336 = vmul.f32 %v992, %v1098
        %v1337 = vmul.f32 %v993, %v1102
        %v1338 = vmul.f32 %v994, %v1106
        %v1339 = vmul.f32 %v995, %v1110
        %v1340 = vmul.f32 %v996, %v1114
        %v1341 = vmul.f32 %v997, %v1121
        %v1342 = vmul.f32 %v998, %v1125
        %v1343 = vmul.f32 %v999, %v1129
        %v1344 = vmul.f32 %v1000, %v1133
        %v1345 = vmul.f32 %v1001, %v1137
        %v1346 = vmul.f32 %v1002, %v1141
        %v1347 = vmul.f32 %v1003, %v1145
        %v1348 = vmul.f32 %v1004, %v1149
        %v1349 = vmul.f32 %v1005, %v1156
        %v1350 = vmul.f32 %v1006, %v1160
        %v1351 = vmul.f32 %v1007, %v1164
        %v1352 = vmul.f32 %v1008, %v1168
        %v1353 = vmul.f32 %v1009, %v1172
        %v1354 = vmul.f32 %v1010, %v1176
        %v1355 = vmul.f32 %v1011, %v1180
        %v1356 = vmul.f32 %v1012, %v1184
        %v1357 = vmul.f32 %v1013, %v1191
        %v1358 = vmul.f32 %v1014, %v1195
        %v1359 = vmul.f32 %v1015, %v1199
        %v1360 = vmul.f32 %v1016, %v1203
        %v1361 = vmul.f32 %v1017, %v1207
        %v1362 = vmul.f32 %v1018, %v1211
        %v1363 = vmul.f32 %v1019, %v1215
        %v1364 = vmul.f32 %v1020, %v1219
        %v1365 = vmul.f32 %v1021, %v1226
        %v1366 = vmul.f32 %v1022, %v1230
        %v1367 = vmul.f32 %v1023, %v1234
        %v1368 = vmul.f32 %v1024, %v1238
        %v1369 = vmul.f32 %v1025, %v1242
        %v1370 = vmul.f32 %v1026, %v1246
        %v1371 = vmul.f32 %v1027, %v1250
        %v1372 = vmul.f32 %v1028, %v1254
        %v1373 = vmul.f32 %v1029, %v1261
        %v1374 = vmul.f32 %v1030, %v1265
        %v1375 = vmul.f32 %v1031, %v1269
        %v1376 = vmul.f32 %v1032, %v1273
        %v1377 = vmul.f32 %v1033, %v1277
        %v1378 = vmul.f32 %v1034, %v1281
        %v1379 = vmul.f32 %v1035, %v1285
        %v1380 = vmul.f32 %v1036, %v1289
        %v1381 = vmul.f32 %v1037, %v1296
        %v1382 = vmul.f32 %v1038, %v1300
        %v1383 = vmul.f32 %v1039, %v1304
        %v1384 = vmul.f32 %v1040, %v1308
        %v1385 = vmul.f32 %v1041, %v1312
        %v1386 = vmul.f32 %v1042, %v1316
        %v1387 = vmul.f32 %v1043, %v1320
        %v1388 = vmul.f32 %v1044, %v1324
        %vm1389 = vcmask 130048
        %v1390 = vsel %vm1389, %v1325, 0.0
        %v1391 = vsel %vm1389, %v1326, 0.0
        %v1392 = vadd.f32 %v1390, %v1391
        %v1393 = vsel %vm1389, %v1327, 0.0
        %v1394 = vadd.f32 %v1392, %v1393
        %v1395 = vsel %vm1389, %v1328, 0.0
        %v1396 = vadd.f32 %v1394, %v1395
        %v1397 = vsel %vm1389, %v1329, 0.0
        %v1398 = vadd.f32 %v1396, %v1397
        %v1399 = vsel %vm1389, %v1330, 0.0
        %v1400 = vadd.f32 %v1398, %v1399
        %v1401 = vsel %vm1389, %v1331, 0.0
        %v1402 = vadd.f32 %v1400, %v1401
        %v1403 = vsel %vm1389, %v1332, 0.0
        %v1404 = vadd.f32 %v1402, %v1403
        %v1405 = vrot.slane %v1404, 4
        %v1406 = vadd.f32 %v1404, %v1405
        %v1407 = vrot.slane %v1406, 2
        %v1408 = vadd.f32 %v1406, %v1407
        %v1409 = vrot.slane %v1408, 1
        %v1410 = vadd.f32 %v1408, %v1409
        %v1411 = vsel %vm1389, %v1333, 0.0
        %v1412 = vsel %vm1389, %v1334, 0.0
        %v1413 = vadd.f32 %v1411, %v1412
        %v1414 = vsel %vm1389, %v1335, 0.0
        %v1415 = vadd.f32 %v1413, %v1414
        %v1416 = vsel %vm1389, %v1336, 0.0
        %v1417 = vadd.f32 %v1415, %v1416
        %v1418 = vsel %vm1389, %v1337, 0.0
        %v1419 = vadd.f32 %v1417, %v1418
        %v1420 = vsel %vm1389, %v1338, 0.0
        %v1421 = vadd.f32 %v1419, %v1420
        %v1422 = vsel %vm1389, %v1339, 0.0
        %v1423 = vadd.f32 %v1421, %v1422
        %v1424 = vsel %vm1389, %v1340, 0.0
        %v1425 = vadd.f32 %v1423, %v1424
        %v1426 = vrot.slane %v1425, 4
        %v1427 = vadd.f32 %v1425, %v1426
        %v1428 = vrot.slane %v1427, 2
        %v1429 = vadd.f32 %v1427, %v1428
        %v1430 = vrot.slane %v1429, 1
        %v1431 = vadd.f32 %v1429, %v1430
        %v1432 = vsel %vm1389, %v1341, 0.0
        %v1433 = vsel %vm1389, %v1342, 0.0
        %v1434 = vadd.f32 %v1432, %v1433
        %v1435 = vsel %vm1389, %v1343, 0.0
        %v1436 = vadd.f32 %v1434, %v1435
        %v1437 = vsel %vm1389, %v1344, 0.0
        %v1438 = vadd.f32 %v1436, %v1437
        %v1439 = vsel %vm1389, %v1345, 0.0
        %v1440 = vadd.f32 %v1438, %v1439
        %v1441 = vsel %vm1389, %v1346, 0.0
        %v1442 = vadd.f32 %v1440, %v1441
        %v1443 = vsel %vm1389, %v1347, 0.0
        %v1444 = vadd.f32 %v1442, %v1443
        %v1445 = vsel %vm1389, %v1348, 0.0
        %v1446 = vadd.f32 %v1444, %v1445
        %v1447 = vrot.slane %v1446, 4
        %v1448 = vadd.f32 %v1446, %v1447
        %v1449 = vrot.slane %v1448, 2
        %v1450 = vadd.f32 %v1448, %v1449
        %v1451 = vrot.slane %v1450, 1
        %v1452 = vadd.f32 %v1450, %v1451
        %v1453 = vsel %vm1389, %v1349, 0.0
        %v1454 = vsel %vm1389, %v1350, 0.0
        %v1455 = vadd.f32 %v1453, %v1454
        %v1456 = vsel %vm1389, %v1351, 0.0
        %v1457 = vadd.f32 %v1455, %v1456
        %v1458 = vsel %vm1389, %v1352, 0.0
        %v1459 = vadd.f32 %v1457, %v1458
        %v1460 = vsel %vm1389, %v1353, 0.0
        %v1461 = vadd.f32 %v1459, %v1460
        %v1462 = vsel %vm1389, %v1354, 0.0
        %v1463 = vadd.f32 %v1461, %v1462
        %v1464 = vsel %vm1389, %v1355, 0.0
        %v1465 = vadd.f32 %v1463, %v1464
        %v1466 = vsel %vm1389, %v1356, 0.0
        %v1467 = vadd.f32 %v1465, %v1466
        %v1468 = vrot.slane %v1467, 4
        %v1469 = vadd.f32 %v1467, %v1468
        %v1470 = vrot.slane %v1469, 2
        %v1471 = vadd.f32 %v1469, %v1470
        %v1472 = vrot.slane %v1471, 1
        %v1473 = vadd.f32 %v1471, %v1472
        %v1474 = vsel %vm1389, %v1357, 0.0
        %v1475 = vsel %vm1389, %v1358, 0.0
        %v1476 = vadd.f32 %v1474, %v1475
        %v1477 = vsel %vm1389, %v1359, 0.0
        %v1478 = vadd.f32 %v1476, %v1477
        %v1479 = vsel %vm1389, %v1360, 0.0
        %v1480 = vadd.f32 %v1478, %v1479
        %v1481 = vsel %vm1389, %v1361, 0.0
        %v1482 = vadd.f32 %v1480, %v1481
        %v1483 = vsel %vm1389, %v1362, 0.0
        %v1484 = vadd.f32 %v1482, %v1483
        %v1485 = vsel %vm1389, %v1363, 0.0
        %v1486 = vadd.f32 %v1484, %v1485
        %v1487 = vsel %vm1389, %v1364, 0.0
        %v1488 = vadd.f32 %v1486, %v1487
        %v1489 = vrot.slane %v1488, 4
        %v1490 = vadd.f32 %v1488, %v1489
        %v1491 = vrot.slane %v1490, 2
        %v1492 = vadd.f32 %v1490, %v1491
        %v1493 = vrot.slane %v1492, 1
        %v1494 = vadd.f32 %v1492, %v1493
        %v1495 = vsel %vm1389, %v1365, 0.0
        %v1496 = vsel %vm1389, %v1366, 0.0
        %v1497 = vadd.f32 %v1495, %v1496
        %v1498 = vsel %vm1389, %v1367, 0.0
        %v1499 = vadd.f32 %v1497, %v1498
        %v1500 = vsel %vm1389, %v1368, 0.0
        %v1501 = vadd.f32 %v1499, %v1500
        %v1502 = vsel %vm1389, %v1369, 0.0
        %v1503 = vadd.f32 %v1501, %v1502
        %v1504 = vsel %vm1389, %v1370, 0.0
        %v1505 = vadd.f32 %v1503, %v1504
        %v1506 = vsel %vm1389, %v1371, 0.0
        %v1507 = vadd.f32 %v1505, %v1506
        %v1508 = vsel %vm1389, %v1372, 0.0
        %v1509 = vadd.f32 %v1507, %v1508
        %v1510 = vrot.slane %v1509, 4
        %v1511 = vadd.f32 %v1509, %v1510
        %v1512 = vrot.slane %v1511, 2
        %v1513 = vadd.f32 %v1511, %v1512
        %v1514 = vrot.slane %v1513, 1
        %v1515 = vadd.f32 %v1513, %v1514
        %v1516 = vsel %vm1389, %v1373, 0.0
        %v1517 = vsel %vm1389, %v1374, 0.0
        %v1518 = vadd.f32 %v1516, %v1517
        %v1519 = vsel %vm1389, %v1375, 0.0
        %v1520 = vadd.f32 %v1518, %v1519
        %v1521 = vsel %vm1389, %v1376, 0.0
        %v1522 = vadd.f32 %v1520, %v1521
        %v1523 = vsel %vm1389, %v1377, 0.0
        %v1524 = vadd.f32 %v1522, %v1523
        %v1525 = vsel %vm1389, %v1378, 0.0
        %v1526 = vadd.f32 %v1524, %v1525
        %v1527 = vsel %vm1389, %v1379, 0.0
        %v1528 = vadd.f32 %v1526, %v1527
        %v1529 = vsel %vm1389, %v1380, 0.0
        %v1530 = vadd.f32 %v1528, %v1529
        %v1531 = vrot.slane %v1530, 4
        %v1532 = vadd.f32 %v1530, %v1531
        %v1533 = vrot.slane %v1532, 2
        %v1534 = vadd.f32 %v1532, %v1533
        %v1535 = vrot.slane %v1534, 1
        %v1536 = vadd.f32 %v1534, %v1535
        %v1537 = vsel %vm1389, %v1381, 0.0
        %v1538 = vsel %vm1389, %v1382, 0.0
        %v1539 = vadd.f32 %v1537, %v1538
        %v1540 = vsel %vm1389, %v1383, 0.0
        %v1541 = vadd.f32 %v1539, %v1540
        %v1542 = vsel %vm1389, %v1384, 0.0
        %v1543 = vadd.f32 %v1541, %v1542
        %v1544 = vsel %vm1389, %v1385, 0.0
        %v1545 = vadd.f32 %v1543, %v1544
        %v1546 = vsel %vm1389, %v1386, 0.0
        %v1547 = vadd.f32 %v1545, %v1546
        %v1548 = vsel %vm1389, %v1387, 0.0
        %v1549 = vadd.f32 %v1547, %v1548
        %v1550 = vsel %vm1389, %v1388, 0.0
        %v1551 = vadd.f32 %v1549, %v1550
        %v1552 = vrot.slane %v1551, 4
        %v1553 = vadd.f32 %v1551, %v1552
        %v1554 = vrot.slane %v1553, 2
        %v1555 = vadd.f32 %v1553, %v1554
        %v1556 = vrot.slane %v1555, 1
        %v1557 = vadd.f32 %v1555, %v1556
        %v1558 = vld [vmem:[%s477] sm:$0xff]
        %v1560 = vrot.slane %v1558, 1
        %v1561 = vrot.slane %v1558, 2
        %v1562 = vrot.slane %v1558, 3
        %v1563 = vrot.slane %v1558, 4
        %v1564 = vrot.slane %v1558, 5
        %v1565 = vrot.slane %v1558, 6
        %v1566 = vrot.slane %v1558, 7
        %v1575 = vmul.f32 %v1410, %v1558
        %v1576 = vmul.f32 %v1431, %v1560
        %v1577 = vmul.f32 %v1452, %v1561
        %v1578 = vmul.f32 %v1473, %v1562
        %v1579 = vmul.f32 %v1494, %v1563
        %v1580 = vmul.f32 %v1515, %v1564
        %v1581 = vmul.f32 %v1536, %v1565
        %v1582 = vmul.f32 %v1557, %v1566
        %v1591 = vrot.slane %v1576, 7
        %vm1592 = vcmask 1041409
        %v1593 = vsel %vm1592, %v1591, %v1575
        %v1594 = vrot.slane %v1577, 6
        %vm1595 = vcmask 1042434
        %v1596 = vsel %vm1595, %v1594, %v1593
        %v1597 = vrot.slane %v1578, 5
        %vm1598 = vcmask 1043459
        %v1599 = vsel %vm1598, %v1597, %v1596
        %v1600 = vrot.slane %v1579, 4
        %vm1601 = vcmask 1044484
        %v1602 = vsel %vm1601, %v1600, %v1599
        %v1603 = vrot.slane %v1580, 3
        %vm1604 = vcmask 1045509
        %v1605 = vsel %vm1604, %v1603, %v1602
        %v1606 = vrot.slane %v1581, 2
        %vm1607 = vcmask 1046534
        %v1608 = vsel %vm1607, %v1606, %v1605
        %v1609 = vrot.slane %v1582, 1
        %vm1610 = vcmask 1047559
        %v1611 = vsel %vm1610, %v1609, %v1608
        %1613 = vst.msk [vmem:[%s462] sm:$0xff] %vm1389, %v1611
        %v1614 = vld [vmem:[%s1] sm:$0xff]
        %v1615 = vld [vmem:[%s1 + $0x8] sm:$0xff]
        %v1616 = vld [vmem:[%s1 + $0x10] sm:$0xff]
        %v1617 = vld [vmem:[%s1 + $0x18] sm:$0xff]
        %v1618 = vld [vmem:[%s1 + $0x20] sm:$0xff]
        %v1619 = vld [vmem:[%s1 + $0x28] sm:$0xff]
        %v1620 = vld [vmem:[%s1 + $0x30] sm:$0xff]
        %v1621 = vld [vmem:[%s1 + $0x38] sm:$0xff]
        %v1623 = vsel %vm595, %v980, 0
        %1625 = vmatprep.subr.mxu0 0.0
        %1626 = vmatpush1.msra.mxu0 %v1614
        %1627 = vmatprep.subr.mxu0 0.0
        %1628 = vmatpush1.msra.mxu0 %v1615
        %1629 = vmatprep.subr.mxu0 0.0
        %1630 = vmatpush1.msra.mxu0 %v1616
        %1631 = vmatprep.subr.mxu0 0.0
        %1632 = vmatpush1.msra.mxu0 %v1617
        %1633 = vmatprep.subr.mxu0 0.0
        %1634 = vmatpush1.msra.mxu0 %v1618
        %1635 = vmatprep.subr.mxu0 0.0
        %1636 = vmatpush1.msra.mxu0 %v1619
        %1637 = vmatprep.subr.mxu0 0.0
        %1638 = vmatpush1.msra.mxu0 %v1620
        %1639 = vmatprep.subr.mxu0 0.0
        %1640 = vmatpush1.msra.mxu0 %v1621
        %1641 = vmatprep.subr.mxu0 0.0
        %1642 = vmatpush1.msra.mxu0 0.0
        %1643 = vmatprep.subr.mxu0 0.0
        %1644 = vmatpush1.msra.mxu0 0.0
        %1645 = vmatprep.subr.mxu0 0.0
        %1646 = vmatpush1.msra.mxu0 0.0
        %1647 = vmatprep.subr.mxu0 0.0
        %1648 = vmatpush1.msra.mxu0 0.0
        %1649 = vmatprep.subr.mxu0 0.0
        %1650 = vmatpush1.msra.mxu0 0.0
        %1651 = vmatprep.subr.mxu0 0.0
        %1652 = vmatpush1.msra.mxu0 0.0
        %1653 = vmatprep.subr.mxu0 0.0
        %1654 = vmatpush1.msra.mxu0 0.0
        %1655 = vmatprep.subr.mxu0 0.0
        %1656 = vmatpush1.msra.mxu0 0.0
        %1657 = vmatprep.subr.mxu0 0.0
        %1658 = vmatpush1.msra.mxu0 0.0
        %1659 = vmatprep.subr.mxu0 0.0
        %1660 = vmatpush1.msra.mxu0 0.0
        %1661 = vmatprep.subr.mxu0 0.0
        %1662 = vmatpush1.msra.mxu0 0.0
        %1663 = vmatprep.subr.mxu0 0.0
        %1664 = vmatpush1.msra.mxu0 0.0
        %1665 = vmatprep.subr.mxu0 0.0
        %1666 = vmatpush1.msra.mxu0 0.0
        %1667 = vmatprep.subr.mxu0 0.0
        %1668 = vmatpush1.msra.mxu0 0.0
        %1669 = vmatprep.subr.mxu0 0.0
        %1670 = vmatpush1.msra.mxu0 0.0
        %1671 = vmatprep.subr.mxu0 0.0
        %1672 = vmatpush1.msra.mxu0 0.0
        %1673 = vmatprep.subr.mxu0 0.0
        %1674 = vmatpush1.msra.mxu0 0.0
        %1675 = vmatprep.subr.mxu0 0.0
        %1676 = vmatpush1.msra.mxu0 0.0
        %1677 = vmatprep.subr.mxu0 0.0
        %1678 = vmatpush1.msra.mxu0 0.0
        %1679 = vmatprep.subr.mxu0 0.0
        %1680 = vmatpush1.msra.mxu0 0.0
        %1681 = vmatprep.subr.mxu0 0.0
        %1682 = vmatpush1.msra.mxu0 0.0
        %1683 = vmatprep.subr.mxu0 0.0
        %1684 = vmatpush1.msra.mxu0 0.0
        %1685 = vmatprep.subr.mxu0 0.0
        %1686 = vmatpush1.msra.mxu0 0.0
        %1687 = vmatprep.subr.mxu0 0.0
        %1688 = vmatpush1.msra.mxu0 0.0
        %1689 = vmatprep.mubr.f32.mxu0 0.0
        %1690 = vmatmul.mubr.f32.gmra.mrb[0].mxu0 %v1623
        %v1691 = vpop.f32.mrb[0].mxu0
        %v1692 = vadd.f32 0.0, %v1691
        %v1693 = vpop.f32.mrb[0].mxu0
        %1694 = vdwg.mxu0
        %1695 = vst [vmem:[%s455] sm:$0xff] %v1692
        %1696 = vmax.xlane.f32.xlu0 %v1692
        %v1697 = vpop.xlane.xlu0 %1696
        %vm1698 = vcmp.eq.f32.partialorder %v1692, %v1697
        %v1699 = vsel %vm1698, %v481, 128
        %v1700 = vand.u32 %v1699, 65535
        %v1701 = vshra.s32 %v1699, 16
        %v1702 = vcvt.s32.f32 %v1700
        %v1703 = vcvt.s32.f32 %v1701
        %1704 = vmin.xlane.f32.xlu0 %v1703
        %v1705 = vpop.xlane.xlu0 %1704
        %vm1706 = vcmp.eq.f32.partialorder %v1703, %v1705
        %v1707 = vsel %vm1706, %v1702, inf
        %1708 = vmin.xlane.f32.xlu0 %v1707
        %v1709 = vpop.xlane.xlu0 %1708
        %v1710 = vcvt.f32.s32 %v1709
        %v1711 = vcvt.f32.s32 %v1705
        %v1712 = vshll.u32 %v1711, 16
        %v1713 = vadd.s32 %v1712, %v1710
        %vm1714 = vcmp.eq.s32.totalorder %v481, %v1713
        %v1715 = vsel %vm1714, 1, 0
        %v1716 = vcvt.s32.f32 %v1715
        %v1717 = vld [vmem:[%s0] sm:$0xff]
        %v1718 = vld [vmem:[%s0 + $0x8] sm:$0xff]
        %v1719 = vld [vmem:[%s0 + $0x10] sm:$0xff]
        %v1720 = vld [vmem:[%s0 + $0x18] sm:$0xff]
        %v1721 = vld [vmem:[%s0 + $0x20] sm:$0xff]
        %v1722 = vld [vmem:[%s0 + $0x28] sm:$0xff]
        %v1723 = vld [vmem:[%s0 + $0x30] sm:$0xff]
        %v1724 = vld [vmem:[%s0 + $0x38] sm:$0xff]
        %v1725 = vld [vmem:[%s0 + $0x40] sm:$0xff]
        %v1726 = vld [vmem:[%s0 + $0x48] sm:$0xff]
        %v1727 = vld [vmem:[%s0 + $0x50] sm:$0xff]
        %v1728 = vld [vmem:[%s0 + $0x58] sm:$0xff]
        %v1729 = vld [vmem:[%s0 + $0x60] sm:$0xff]
        %v1730 = vld [vmem:[%s0 + $0x68] sm:$0xff]
        %v1731 = vld [vmem:[%s0 + $0x70] sm:$0xff]
        %v1732 = vld [vmem:[%s0 + $0x78] sm:$0xff]
        %1733 = vmatprep.subr.mxu0 0.0
        %1734 = vmatpush1.msra.mxu0 %v1717
        %1735 = vmatprep.subr.mxu0 0.0
        %1736 = vmatpush1.msra.mxu0 %v1718
        %1737 = vmatprep.subr.mxu0 0.0
        %1738 = vmatpush1.msra.mxu0 %v1719
        %1739 = vmatprep.subr.mxu0 0.0
        %1740 = vmatpush1.msra.mxu0 %v1720
        %1741 = vmatprep.subr.mxu0 0.0
        %1742 = vmatpush1.msra.mxu0 %v1721
        %1743 = vmatprep.subr.mxu0 0.0
        %1744 = vmatpush1.msra.mxu0 %v1722
        %1745 = vmatprep.subr.mxu0 0.0
        %1746 = vmatpush1.msra.mxu0 %v1723
        %1747 = vmatprep.subr.mxu0 0.0
        %1748 = vmatpush1.msra.mxu0 %v1724
        %1749 = vmatprep.subr.mxu0 0.0
        %1750 = vmatpush1.msra.mxu0 %v1725
        %1751 = vmatprep.subr.mxu0 0.0
        %1752 = vmatpush1.msra.mxu0 %v1726
        %1753 = vmatprep.subr.mxu0 0.0
        %1754 = vmatpush1.msra.mxu0 %v1727
        %1755 = vmatprep.subr.mxu0 0.0
        %1756 = vmatpush1.msra.mxu0 %v1728
        %1757 = vmatprep.subr.mxu0 0.0
        %1758 = vmatpush1.msra.mxu0 %v1729
        %1759 = vmatprep.subr.mxu0 0.0
        %1760 = vmatpush1.msra.mxu0 %v1730
        %1761 = vmatprep.subr.mxu0 0.0
        %1762 = vmatpush1.msra.mxu0 %v1731
        %1763 = vmatprep.subr.mxu0 0.0
        %1764 = vmatpush1.msra.mxu0 %v1732
        %1765 = vmatprep.subr.mxu0 0.0
        %1766 = vmatpush1.msra.mxu0 0.0
        %1767 = vmatprep.subr.mxu0 0.0
        %1768 = vmatpush1.msra.mxu0 0.0
        %1769 = vmatprep.subr.mxu0 0.0
        %1770 = vmatpush1.msra.mxu0 0.0
        %1771 = vmatprep.subr.mxu0 0.0
        %1772 = vmatpush1.msra.mxu0 0.0
        %1773 = vmatprep.subr.mxu0 0.0
        %1774 = vmatpush1.msra.mxu0 0.0
        %1775 = vmatprep.subr.mxu0 0.0
        %1776 = vmatpush1.msra.mxu0 0.0
        %1777 = vmatprep.subr.mxu0 0.0
        %1778 = vmatpush1.msra.mxu0 0.0
        %1779 = vmatprep.subr.mxu0 0.0
        %1780 = vmatpush1.msra.mxu0 0.0
        %1781 = vmatprep.subr.mxu0 0.0
        %1782 = vmatpush1.msra.mxu0 0.0
        %1783 = vmatprep.subr.mxu0 0.0
        %1784 = vmatpush1.msra.mxu0 0.0
        %1785 = vmatprep.subr.mxu0 0.0
        %1786 = vmatpush1.msra.mxu0 0.0
        %1787 = vmatprep.subr.mxu0 0.0
        %1788 = vmatpush1.msra.mxu0 0.0
        %1789 = vmatprep.subr.mxu0 0.0
        %1790 = vmatpush1.msra.mxu0 0.0
        %1791 = vmatprep.subr.mxu0 0.0
        %1792 = vmatpush1.msra.mxu0 0.0
        %1793 = vmatprep.subr.mxu0 0.0
        %1794 = vmatpush1.msra.mxu0 0.0
        %1795 = vmatprep.subr.mxu0 0.0
        %1796 = vmatpush1.msra.mxu0 0.0
        %1797 = vmatprep.mubr.f32.mxu0 0.0
        %1798 = vmatmul.mubr.f32.gmra.mrb[0].mxu0 %v1716
        %v1799 = vpop.f32.mrb[0].mxu0
        %v1800 = vadd.f32 0.0, %v1799
        %v1801 = vpop.f32.mrb[0].mxu0
        %1802 = vdwg.mxu0
        %1803 = vrot.lane.b32.xlu0 %v980, 64
        %v1804 = vpop.permute.xlu0 %1803
        %v1806 = vsel %vm595, %v1800, %v1804
        %v1807 = vld [vmem:[%s5] sm:$0xff]
        %v1808 = vld [vmem:[%s5 + $0x8] sm:$0xff]
        %v1809 = vld [vmem:[%s5 + $0x10] sm:$0xff]
        %v1810 = vld [vmem:[%s5 + $0x18] sm:$0xff]
        %v1811 = vld [vmem:[%s5 + $0x20] sm:$0xff]
        %v1812 = vld [vmem:[%s5 + $0x28] sm:$0xff]
        %v1813 = vld [vmem:[%s5 + $0x30] sm:$0xff]
        %v1814 = vld [vmem:[%s5 + $0x38] sm:$0xff]
        %v1815 = vld [vmem:[%s5 + $0x40] sm:$0xff]
        %v1816 = vld [vmem:[%s5 + $0x48] sm:$0xff]
        %v1817 = vld [vmem:[%s5 + $0x50] sm:$0xff]
        %v1818 = vld [vmem:[%s5 + $0x58] sm:$0xff]
        %v1819 = vld [vmem:[%s5 + $0x60] sm:$0xff]
        %v1820 = vld [vmem:[%s5 + $0x68] sm:$0xff]
        %v1821 = vld [vmem:[%s5 + $0x70] sm:$0xff]
        %v1822 = vld [vmem:[%s5 + $0x78] sm:$0xff]
        %v1823 = vld [vmem:[%s7] sm:$0x1]
        %v1825 = vlaneseq
        %v1826 = vshrl.u32 %v1825, 7
        %v1827 = vsub.s32 0, %v1826
        %v1828 = vrot.slane %v1823, %v1827
        %1830 = vmatprep.subr.mxu0 0.0
        %1831 = vmatpush1.msra.mxu0 %v1807
        %1832 = vmatprep.subr.mxu0 0.0
        %1833 = vmatpush1.msra.mxu0 %v1808
        %1834 = vmatprep.subr.mxu0 0.0
        %1835 = vmatpush1.msra.mxu0 %v1809
        %1836 = vmatprep.subr.mxu0 0.0
        %1837 = vmatpush1.msra.mxu0 %v1810
        %1838 = vmatprep.subr.mxu0 0.0
        %1839 = vmatpush1.msra.mxu0 %v1811
        %1840 = vmatprep.subr.mxu0 0.0
        %1841 = vmatpush1.msra.mxu0 %v1812
        %1842 = vmatprep.subr.mxu0 0.0
        %1843 = vmatpush1.msra.mxu0 %v1813
        %1844 = vmatprep.subr.mxu0 0.0
        %1845 = vmatpush1.msra.mxu0 %v1814
        %1846 = vmatprep.subr.mxu0 0.0
        %1847 = vmatpush1.msra.mxu0 %v1815
        %1848 = vmatprep.subr.mxu0 0.0
        %1849 = vmatpush1.msra.mxu0 %v1816
        %1850 = vmatprep.subr.mxu0 0.0
        %1851 = vmatpush1.msra.mxu0 %v1817
        %1852 = vmatprep.subr.mxu0 0.0
        %1853 = vmatpush1.msra.mxu0 %v1818
        %1854 = vmatprep.subr.mxu0 0.0
        %1855 = vmatpush1.msra.mxu0 %v1819
        %1856 = vmatprep.subr.mxu0 0.0
        %1857 = vmatpush1.msra.mxu0 %v1820
        %1858 = vmatprep.subr.mxu0 0.0
        %1859 = vmatpush1.msra.mxu0 %v1821
        %1860 = vmatprep.subr.mxu0 0.0
        %1861 = vmatpush1.msra.mxu0 %v1822
        %1862 = vmatprep.subr.mxu0 0.0
        %1863 = vmatpush1.msra.mxu0 0.0
        %1864 = vmatprep.subr.mxu0 0.0
        %1865 = vmatpush1.msra.mxu0 0.0
        %1866 = vmatprep.subr.mxu0 0.0
        %1867 = vmatpush1.msra.mxu0 0.0
        %1868 = vmatprep.subr.mxu0 0.0
        %1869 = vmatpush1.msra.mxu0 0.0
        %1870 = vmatprep.subr.mxu0 0.0
        %1871 = vmatpush1.msra.mxu0 0.0
        %1872 = vmatprep.subr.mxu0 0.0
        %1873 = vmatpush1.msra.mxu0 0.0
        %1874 = vmatprep.subr.mxu0 0.0
        %1875 = vmatpush1.msra.mxu0 0.0
        %1876 = vmatprep.subr.mxu0 0.0
        %1877 = vmatpush1.msra.mxu0 0.0
        %1878 = vmatprep.subr.mxu0 0.0
        %1879 = vmatpush1.msra.mxu0 0.0
        %1880 = vmatprep.subr.mxu0 0.0
        %1881 = vmatpush1.msra.mxu0 0.0
        %1882 = vmatprep.subr.mxu0 0.0
        %1883 = vmatpush1.msra.mxu0 0.0
        %1884 = vmatprep.subr.mxu0 0.0
        %1885 = vmatpush1.msra.mxu0 0.0
        %1886 = vmatprep.subr.mxu0 0.0
        %1887 = vmatpush1.msra.mxu0 0.0
        %1888 = vmatprep.subr.mxu0 0.0
        %1889 = vmatpush1.msra.mxu0 0.0
        %1890 = vmatprep.subr.mxu0 0.0
        %1891 = vmatpush1.msra.mxu0 0.0
        %1892 = vmatprep.subr.mxu0 0.0
        %1893 = vmatpush1.msra.mxu0 0.0
        %1894 = vmatprep.mubr.f32.mxu0 0.0
        %1895 = vmatmul.mubr.f32.gmra.mrb[0].mxu0 %v1806
        %v1896 = vpop.f32.mrb[0].mxu0
        %v1897 = vadd.f32 %v1828, %v1896
        %v1898 = vpop.f32.mrb[0].mxu0
        %1899 = vdwg.mxu0
        %v1900 = vxor.u32 %v1897, 2147483648
        %v1901 = vmul.f32 %v1900, 1.442695
        %v1902 = vpow.pop %v1901
        %v1903 = vadd.f32 %v1902, 1.0
        %v1904 = vrcp.pop %v1903
        %v1905 = vmul.f32 1.0, %v1904
        %v1906 = vld [vmem:[%s696] sm:$0xff]
        %v1907 = vld [vmem:[%s696 + $0x8] sm:$0xff]
        %v1908 = vld [vmem:[%s696 + $0x10] sm:$0xff]
        %v1909 = vld [vmem:[%s696 + $0x18] sm:$0xff]
        %v1910 = vld [vmem:[%s696 + $0x20] sm:$0xff]
        %v1911 = vld [vmem:[%s696 + $0x28] sm:$0xff]
        %v1912 = vld [vmem:[%s696 + $0x30] sm:$0xff]
        %v1913 = vld [vmem:[%s696 + $0x38] sm:$0xff]
        %v1914 = vld [vmem:[%s696 + $0x40] sm:$0xff]
        %v1915 = vld [vmem:[%s696 + $0x48] sm:$0xff]
        %v1916 = vld [vmem:[%s696 + $0x50] sm:$0xff]
        %v1917 = vld [vmem:[%s696 + $0x58] sm:$0xff]
        %v1918 = vld [vmem:[%s696 + $0x60] sm:$0xff]
        %v1919 = vld [vmem:[%s696 + $0x68] sm:$0xff]
        %v1920 = vld [vmem:[%s696 + $0x70] sm:$0xff]
        %v1921 = vld [vmem:[%s696 + $0x78] sm:$0xff]
        %v1922 = vld [vmem:[%s713] sm:$0x1]
        %v1924 = vlaneseq
        %v1925 = vshrl.u32 %v1924, 7
        %v1926 = vsub.s32 0, %v1925
        %v1927 = vrot.slane %v1922, %v1926
        %1929 = vmatprep.subr.mxu0 0.0
        %1930 = vmatpush1.msra.mxu0 %v1906
        %1931 = vmatprep.subr.mxu0 0.0
        %1932 = vmatpush1.msra.mxu0 %v1907
        %1933 = vmatprep.subr.mxu0 0.0
        %1934 = vmatpush1.msra.mxu0 %v1908
        %1935 = vmatprep.subr.mxu0 0.0
        %1936 = vmatpush1.msra.mxu0 %v1909
        %1937 = vmatprep.subr.mxu0 0.0
        %1938 = vmatpush1.msra.mxu0 %v1910
        %1939 = vmatprep.subr.mxu0 0.0
        %1940 = vmatpush1.msra.mxu0 %v1911
        %1941 = vmatprep.subr.mxu0 0.0
        %1942 = vmatpush1.msra.mxu0 %v1912
        %1943 = vmatprep.subr.mxu0 0.0
        %1944 = vmatpush1.msra.mxu0 %v1913
        %1945 = vmatprep.subr.mxu0 0.0
        %1946 = vmatpush1.msra.mxu0 %v1914
        %1947 = vmatprep.subr.mxu0 0.0
        %1948 = vmatpush1.msra.mxu0 %v1915
        %1949 = vmatprep.subr.mxu0 0.0
        %1950 = vmatpush1.msra.mxu0 %v1916
        %1951 = vmatprep.subr.mxu0 0.0
        %1952 = vmatpush1.msra.mxu0 %v1917
        %1953 = vmatprep.subr.mxu0 0.0
        %1954 = vmatpush1.msra.mxu0 %v1918
        %1955 = vmatprep.subr.mxu0 0.0
        %1956 = vmatpush1.msra.mxu0 %v1919
        %1957 = vmatprep.subr.mxu0 0.0
        %1958 = vmatpush1.msra.mxu0 %v1920
        %1959 = vmatprep.subr.mxu0 0.0
        %1960 = vmatpush1.msra.mxu0 %v1921
        %1961 = vmatprep.subr.mxu0 0.0
        %1962 = vmatpush1.msra.mxu0 0.0
        %1963 = vmatprep.subr.mxu0 0.0
        %1964 = vmatpush1.msra.mxu0 0.0
        %1965 = vmatprep.subr.mxu0 0.0
        %1966 = vmatpush1.msra.mxu0 0.0
        %1967 = vmatprep.subr.mxu0 0.0
        %1968 = vmatpush1.msra.mxu0 0.0
        %1969 = vmatprep.subr.mxu0 0.0
        %1970 = vmatpush1.msra.mxu0 0.0
        %1971 = vmatprep.subr.mxu0 0.0
        %1972 = vmatpush1.msra.mxu0 0.0
        %1973 = vmatprep.subr.mxu0 0.0
        %1974 = vmatpush1.msra.mxu0 0.0
        %1975 = vmatprep.subr.mxu0 0.0
        %1976 = vmatpush1.msra.mxu0 0.0
        %1977 = vmatprep.subr.mxu0 0.0
        %1978 = vmatpush1.msra.mxu0 0.0
        %1979 = vmatprep.subr.mxu0 0.0
        %1980 = vmatpush1.msra.mxu0 0.0
        %1981 = vmatprep.subr.mxu0 0.0
        %1982 = vmatpush1.msra.mxu0 0.0
        %1983 = vmatprep.subr.mxu0 0.0
        %1984 = vmatpush1.msra.mxu0 0.0
        %1985 = vmatprep.subr.mxu0 0.0
        %1986 = vmatpush1.msra.mxu0 0.0
        %1987 = vmatprep.subr.mxu0 0.0
        %1988 = vmatpush1.msra.mxu0 0.0
        %1989 = vmatprep.subr.mxu0 0.0
        %1990 = vmatpush1.msra.mxu0 0.0
        %1991 = vmatprep.subr.mxu0 0.0
        %1992 = vmatpush1.msra.mxu0 0.0
        %1993 = vmatprep.mubr.f32.mxu0 0.0
        %1994 = vmatmul.mubr.f32.gmra.mrb[0].mxu0 %v1806
        %v1995 = vpop.f32.mrb[0].mxu0
        %v1996 = vadd.f32 %v1927, %v1995
        %v1997 = vpop.f32.mrb[0].mxu0
        %1998 = vdwg.mxu0
        %v1999 = vxor.u32 %v1996, 2147483648
        %v2000 = vmul.f32 %v1999, 1.442695
        %v2001 = vpow.pop %v2000
        %v2002 = vadd.f32 %v2001, 1.0
        %v2003 = vrcp.pop %v2002
        %v2004 = vmul.f32 1.0, %v2003
        %v2005 = vld [vmem:[%s6] sm:$0xff]
        %v2006 = vld [vmem:[%s6 + $0x8] sm:$0xff]
        %v2007 = vld [vmem:[%s6 + $0x10] sm:$0xff]
        %v2008 = vld [vmem:[%s6 + $0x18] sm:$0xff]
        %v2009 = vld [vmem:[%s6 + $0x20] sm:$0xff]
        %v2010 = vld [vmem:[%s6 + $0x28] sm:$0xff]
        %v2011 = vld [vmem:[%s6 + $0x30] sm:$0xff]
        %v2012 = vld [vmem:[%s6 + $0x38] sm:$0xff]
        %v2013 = vld [vmem:[%s8] sm:$0x1]
        %v2015 = vlaneseq
        %v2016 = vshrl.u32 %v2015, 7
        %v2017 = vsub.s32 0, %v2016
        %v2018 = vrot.slane %v2013, %v2017
        %v2021 = vsel %vm595, %v1800, 0
        %2023 = vmatprep.subr.mxu0 0.0
        %2024 = vmatpush1.msra.mxu0 %v2005
        %2025 = vmatprep.subr.mxu0 0.0
        %2026 = vmatpush1.msra.mxu0 %v2006
        %2027 = vmatprep.subr.mxu0 0.0
        %2028 = vmatpush1.msra.mxu0 %v2007
        %2029 = vmatprep.subr.mxu0 0.0
        %2030 = vmatpush1.msra.mxu0 %v2008
        %2031 = vmatprep.subr.mxu0 0.0
        %2032 = vmatpush1.msra.mxu0 %v2009
        %2033 = vmatprep.subr.mxu0 0.0
        %2034 = vmatpush1.msra.mxu0 %v2010
        %2035 = vmatprep.subr.mxu0 0.0
        %2036 = vmatpush1.msra.mxu0 %v2011
        %2037 = vmatprep.subr.mxu0 0.0
        %2038 = vmatpush1.msra.mxu0 %v2012
        %2039 = vmatprep.subr.mxu0 0.0
        %2040 = vmatpush1.msra.mxu0 0.0
        %2041 = vmatprep.subr.mxu0 0.0
        %2042 = vmatpush1.msra.mxu0 0.0
        %2043 = vmatprep.subr.mxu0 0.0
        %2044 = vmatpush1.msra.mxu0 0.0
        %2045 = vmatprep.subr.mxu0 0.0
        %2046 = vmatpush1.msra.mxu0 0.0
        %2047 = vmatprep.subr.mxu0 0.0
        %2048 = vmatpush1.msra.mxu0 0.0
        %2049 = vmatprep.subr.mxu0 0.0
        %2050 = vmatpush1.msra.mxu0 0.0
        %2051 = vmatprep.subr.mxu0 0.0
        %2052 = vmatpush1.msra.mxu0 0.0
        %2053 = vmatprep.subr.mxu0 0.0
        %2054 = vmatpush1.msra.mxu0 0.0
        %2055 = vmatprep.subr.mxu0 0.0
        %2056 = vmatpush1.msra.mxu0 0.0
        %2057 = vmatprep.subr.mxu0 0.0
        %2058 = vmatpush1.msra.mxu0 0.0
        %2059 = vmatprep.subr.mxu0 0.0
        %2060 = vmatpush1.msra.mxu0 0.0
        %2061 = vmatprep.subr.mxu0 0.0
        %2062 = vmatpush1.msra.mxu0 0.0
        %2063 = vmatprep.subr.mxu0 0.0
        %2064 = vmatpush1.msra.mxu0 0.0
        %2065 = vmatprep.subr.mxu0 0.0
        %2066 = vmatpush1.msra.mxu0 0.0
        %2067 = vmatprep.subr.mxu0 0.0
        %2068 = vmatpush1.msra.mxu0 0.0
        %2069 = vmatprep.subr.mxu0 0.0
        %2070 = vmatpush1.msra.mxu0 0.0
        %2071 = vmatprep.subr.mxu0 0.0
        %2072 = vmatpush1.msra.mxu0 0.0
        %2073 = vmatprep.subr.mxu0 0.0
        %2074 = vmatpush1.msra.mxu0 0.0
        %2075 = vmatprep.subr.mxu0 0.0
        %2076 = vmatpush1.msra.mxu0 0.0
        %2077 = vmatprep.subr.mxu0 0.0
        %2078 = vmatpush1.msra.mxu0 0.0
        %2079 = vmatprep.subr.mxu0 0.0
        %2080 = vmatpush1.msra.mxu0 0.0
        %2081 = vmatprep.subr.mxu0 0.0
        %2082 = vmatpush1.msra.mxu0 0.0
        %2083 = vmatprep.subr.mxu0 0.0
        %2084 = vmatpush1.msra.mxu0 0.0
        %2085 = vmatprep.subr.mxu0 0.0
        %2086 = vmatpush1.msra.mxu0 0.0
        %2087 = vmatprep.mubr.f32.mxu0 0.0
        %2088 = vmatmul.mubr.f32.gmra.mrb[0].mxu0 %v2021
        %v2089 = vpop.f32.mrb[0].mxu0
        %v2090 = vadd.f32 %v2018, %v2089
        %v2091 = vpop.f32.mrb[0].mxu0
        %2092 = vdwg.mxu0
        %v2093 = vld [vmem:[%s885] sm:$0xff]
        %v2094 = vld [vmem:[%s885 + $0x8] sm:$0xff]
        %v2095 = vld [vmem:[%s885 + $0x10] sm:$0xff]
        %v2096 = vld [vmem:[%s885 + $0x18] sm:$0xff]
        %v2097 = vld [vmem:[%s885 + $0x20] sm:$0xff]
        %v2098 = vld [vmem:[%s885 + $0x28] sm:$0xff]
        %v2099 = vld [vmem:[%s885 + $0x30] sm:$0xff]
        %v2100 = vld [vmem:[%s885 + $0x38] sm:$0xff]
        %v2101 = vld [vmem:[%s894] sm:$0x1]
        %v2103 = vlaneseq
        %v2104 = vshrl.u32 %v2103, 7
        %v2105 = vsub.s32 0, %v2104
        %v2106 = vrot.slane %v2101, %v2105
        %2108 = vmatprep.subr.mxu0 0.0
        %2109 = vmatpush1.msra.mxu0 %v2093
        %2110 = vmatprep.subr.mxu0 0.0
        %2111 = vmatpush1.msra.mxu0 %v2094
        %2112 = vmatprep.subr.mxu0 0.0
        %2113 = vmatpush1.msra.mxu0 %v2095
        %2114 = vmatprep.subr.mxu0 0.0
        %2115 = vmatpush1.msra.mxu0 %v2096
        %2116 = vmatprep.subr.mxu0 0.0
        %2117 = vmatpush1.msra.mxu0 %v2097
        %2118 = vmatprep.subr.mxu0 0.0
        %2119 = vmatpush1.msra.mxu0 %v2098
        %2120 = vmatprep.subr.mxu0 0.0
        %2121 = vmatpush1.msra.mxu0 %v2099
        %2122 = vmatprep.subr.mxu0 0.0
        %2123 = vmatpush1.msra.mxu0 %v2100
        %2124 = vmatprep.subr.mxu0 0.0
        %2125 = vmatpush1.msra.mxu0 0.0
        %2126 = vmatprep.subr.mxu0 0.0
        %2127 = vmatpush1.msra.mxu0 0.0
        %2128 = vmatprep.subr.mxu0 0.0
        %2129 = vmatpush1.msra.mxu0 0.0
        %2130 = vmatprep.subr.mxu0 0.0
        %2131 = vmatpush1.msra.mxu0 0.0
        %2132 = vmatprep.subr.mxu0 0.0
        %2133 = vmatpush1.msra.mxu0 0.0
        %2134 = vmatprep.subr.mxu0 0.0
        %2135 = vmatpush1.msra.mxu0 0.0
        %2136 = vmatprep.subr.mxu0 0.0
        %2137 = vmatpush1.msra.mxu0 0.0
        %2138 = vmatprep.subr.mxu0 0.0
        %2139 = vmatpush1.msra.mxu0 0.0
        %2140 = vmatprep.subr.mxu0 0.0
        %2141 = vmatpush1.msra.mxu0 0.0
        %2142 = vmatprep.subr.mxu0 0.0
        %2143 = vmatpush1.msra.mxu0 0.0
        %2144 = vmatprep.subr.mxu0 0.0
        %2145 = vmatpush1.msra.mxu0 0.0
        %2146 = vmatprep.subr.mxu0 0.0
        %2147 = vmatpush1.msra.mxu0 0.0
        %2148 = vmatprep.subr.mxu0 0.0
        %2149 = vmatpush1.msra.mxu0 0.0
        %2150 = vmatprep.subr.mxu0 0.0
        %2151 = vmatpush1.msra.mxu0 0.0
        %2152 = vmatprep.subr.mxu0 0.0
        %2153 = vmatpush1.msra.mxu0 0.0
        %2154 = vmatprep.subr.mxu0 0.0
        %2155 = vmatpush1.msra.mxu0 0.0
        %2156 = vmatprep.subr.mxu0 0.0
        %2157 = vmatpush1.msra.mxu0 0.0
        %2158 = vmatprep.subr.mxu0 0.0
        %2159 = vmatpush1.msra.mxu0 0.0
        %2160 = vmatprep.subr.mxu0 0.0
        %2161 = vmatpush1.msra.mxu0 0.0
        %2162 = vmatprep.subr.mxu0 0.0
        %2163 = vmatpush1.msra.mxu0 0.0
        %2164 = vmatprep.subr.mxu0 0.0
        %2165 = vmatpush1.msra.mxu0 0.0
        %2166 = vmatprep.subr.mxu0 0.0
        %2167 = vmatpush1.msra.mxu0 0.0
        %2168 = vmatprep.subr.mxu0 0.0
        %2169 = vmatpush1.msra.mxu0 0.0
        %2170 = vmatprep.subr.mxu0 0.0
        %2171 = vmatpush1.msra.mxu0 0.0
        %2172 = vmatprep.mubr.f32.mxu0 0.0
        %2173 = vmatmul.mubr.f32.gmra.mrb[0].mxu0 %v1623
        %v2174 = vpop.f32.mrb[0].mxu0
        %v2175 = vadd.f32 %v2106, %v2174
        %v2176 = vpop.f32.mrb[0].mxu0
        %2177 = vdwg.mxu0
        %v2178 = vmul.f32 %v1905, %v2175
        %v2179 = vadd.f32 %v2090, %v2178
        %v2180 = vtanh.pop %v2179
        %v2181 = vsub.f32 1.0, %v2004
        %v2182 = vmul.f32 %v2181, %v2180
        %v2183 = vmul.f32 %v2004, %v980
        %v2184 = vadd.f32 %v2182, %v2183
        %v2185 = vld [vmem:[%s472] sm:$0xff]
        %v2186 = vld [vmem:[%s472 + $0x8] sm:$0xff]
        %v2187 = vld [vmem:[%s472 + $0x10] sm:$0xff]
        %v2188 = vld [vmem:[%s472 + $0x18] sm:$0xff]
        %v2189 = vld [vmem:[%s472 + $0x20] sm:$0xff]
        %v2190 = vld [vmem:[%s472 + $0x28] sm:$0xff]
        %v2191 = vld [vmem:[%s472 + $0x30] sm:$0xff]
        %v2192 = vld [vmem:[%s472 + $0x38] sm:$0xff]
        %v2193 = vld [vmem:[%s472 + $0x40] sm:$0xff]
        %v2194 = vld [vmem:[%s472 + $0x48] sm:$0xff]
        %v2195 = vld [vmem:[%s472 + $0x50] sm:$0xff]
        %v2196 = vld [vmem:[%s472 + $0x58] sm:$0xff]
        %v2197 = vld [vmem:[%s472 + $0x60] sm:$0xff]
        %v2198 = vld [vmem:[%s472 + $0x68] sm:$0xff]
        %v2199 = vld [vmem:[%s472 + $0x70] sm:$0xff]
        %v2200 = vld [vmem:[%s472 + $0x78] sm:$0xff]
        %v2201 = vld [vmem:[%s472 + $0x80] sm:$0xff]
        %v2202 = vld [vmem:[%s472 + $0x88] sm:$0xff]
        %v2203 = vld [vmem:[%s472 + $0x90] sm:$0xff]
        %v2204 = vld [vmem:[%s472 + $0x98] sm:$0xff]
        %v2205 = vld [vmem:[%s472 + $0xa0] sm:$0xff]
        %v2206 = vld [vmem:[%s472 + $0xa8] sm:$0xff]
        %v2207 = vld [vmem:[%s472 + $0xb0] sm:$0xff]
        %v2208 = vld [vmem:[%s472 + $0xb8] sm:$0xff]
        %v2209 = vld [vmem:[%s472 + $0xc0] sm:$0xff]
        %v2210 = vld [vmem:[%s472 + $0xc8] sm:$0xff]
        %v2211 = vld [vmem:[%s472 + $0xd0] sm:$0xff]
        %v2212 = vld [vmem:[%s472 + $0xd8] sm:$0xff]
        %v2213 = vld [vmem:[%s472 + $0xe0] sm:$0xff]
        %v2214 = vld [vmem:[%s472 + $0xe8] sm:$0xff]
        %v2215 = vld [vmem:[%s472 + $0xf0] sm:$0xff]
        %v2216 = vld [vmem:[%s472 + $0xf8] sm:$0xff]
        %v2217 = vld [vmem:[%s472 + $0x100] sm:$0xff]
        %v2218 = vld [vmem:[%s472 + $0x108] sm:$0xff]
        %v2219 = vld [vmem:[%s472 + $0x110] sm:$0xff]
        %v2220 = vld [vmem:[%s472 + $0x118] sm:$0xff]
        %v2221 = vld [vmem:[%s472 + $0x120] sm:$0xff]
        %v2222 = vld [vmem:[%s472 + $0x128] sm:$0xff]
        %v2223 = vld [vmem:[%s472 + $0x130] sm:$0xff]
        %v2224 = vld [vmem:[%s472 + $0x138] sm:$0xff]
        %v2225 = vld [vmem:[%s472 + $0x140] sm:$0xff]
        %v2226 = vld [vmem:[%s472 + $0x148] sm:$0xff]
        %v2227 = vld [vmem:[%s472 + $0x150] sm:$0xff]
        %v2228 = vld [vmem:[%s472 + $0x158] sm:$0xff]
        %v2229 = vld [vmem:[%s472 + $0x160] sm:$0xff]
        %v2230 = vld [vmem:[%s472 + $0x168] sm:$0xff]
        %v2231 = vld [vmem:[%s472 + $0x170] sm:$0xff]
        %v2232 = vld [vmem:[%s472 + $0x178] sm:$0xff]
        %v2233 = vld [vmem:[%s472 + $0x180] sm:$0xff]
        %v2234 = vld [vmem:[%s472 + $0x188] sm:$0xff]
        %v2235 = vld [vmem:[%s472 + $0x190] sm:$0xff]
        %v2236 = vld [vmem:[%s472 + $0x198] sm:$0xff]
        %v2237 = vld [vmem:[%s472 + $0x1a0] sm:$0xff]
        %v2238 = vld [vmem:[%s472 + $0x1a8] sm:$0xff]
        %v2239 = vld [vmem:[%s472 + $0x1b0] sm:$0xff]
        %v2240 = vld [vmem:[%s472 + $0x1b8] sm:$0xff]
        %v2241 = vld [vmem:[%s472 + $0x1c0] sm:$0xff]
        %v2242 = vld [vmem:[%s472 + $0x1c8] sm:$0xff]
        %v2243 = vld [vmem:[%s472 + $0x1d0] sm:$0xff]
        %v2244 = vld [vmem:[%s472 + $0x1d8] sm:$0xff]
        %v2245 = vld [vmem:[%s472 + $0x1e0] sm:$0xff]
        %v2246 = vld [vmem:[%s472 + $0x1e8] sm:$0xff]
        %v2247 = vld [vmem:[%s472 + $0x1f0] sm:$0xff]
        %v2248 = vld [vmem:[%s472 + $0x1f8] sm:$0xff]
        %v2249 = vlaneseq
        %v2250 = vshrl.u32 %v2249, 7
        %v2251 = vsub.s32 0, %v2250
        %v2252 = vrot.slane %v2184, %v2251
        %2254 = vbcast.lane.b32.xlu0 %v2252, 256
        %v2255 = vpop.permute.xlu0 %2254
        %s2257 = sor.u32 256, 8
        %2258 = vbcast.lane.b32.xlu0 %v2252, %s2257
        %v2259 = vpop.permute.xlu0 %2258
        %s2261 = sor.u32 256, 16
        %2262 = vbcast.lane.b32.xlu0 %v2252, %s2261
        %v2263 = vpop.permute.xlu0 %2262
        %s2265 = sor.u32 256, 24
        %2266 = vbcast.lane.b32.xlu0 %v2252, %s2265
        %v2267 = vpop.permute.xlu0 %2266
        %s2269 = sor.u32 256, 32
        %2270 = vbcast.lane.b32.xlu0 %v2252, %s2269
        %v2271 = vpop.permute.xlu0 %2270
        %s2273 = sor.u32 256, 40
        %2274 = vbcast.lane.b32.xlu0 %v2252, %s2273
        %v2275 = vpop.permute.xlu0 %2274
        %s2277 = sor.u32 256, 48
        %2278 = vbcast.lane.b32.xlu0 %v2252, %s2277
        %v2279 = vpop.permute.xlu0 %2278
        %s2281 = sor.u32 256, 56
        %2282 = vbcast.lane.b32.xlu0 %v2252, %s2281
        %v2283 = vpop.permute.xlu0 %2282
        %v2284 = vlaneseq
        %v2285 = vshrl.u32 %v2284, 7
        %v2286 = vsub.s32 1, %v2285
        %v2287 = vrot.slane %v2184, %v2286
        %2289 = vbcast.lane.b32.xlu0 %v2287, 256
        %v2290 = vpop.permute.xlu0 %2289
        %s2292 = sor.u32 256, 8
        %2293 = vbcast.lane.b32.xlu0 %v2287, %s2292
        %v2294 = vpop.permute.xlu0 %2293
        %s2296 = sor.u32 256, 16
        %2297 = vbcast.lane.b32.xlu0 %v2287, %s2296
        %v2298 = vpop.permute.xlu0 %2297
        %s2300 = sor.u32 256, 24
        %2301 = vbcast.lane.b32.xlu0 %v2287, %s2300
        %v2302 = vpop.permute.xlu0 %2301
        %s2304 = sor.u32 256, 32
        %2305 = vbcast.lane.b32.xlu0 %v2287, %s2304
        %v2306 = vpop.permute.xlu0 %2305
        %s2308 = sor.u32 256, 40
        %2309 = vbcast.lane.b32.xlu0 %v2287, %s2308
        %v2310 = vpop.permute.xlu0 %2309
        %s2312 = sor.u32 256, 48
        %2313 = vbcast.lane.b32.xlu0 %v2287, %s2312
        %v2314 = vpop.permute.xlu0 %2313
        %s2316 = sor.u32 256, 56
        %2317 = vbcast.lane.b32.xlu0 %v2287, %s2316
        %v2318 = vpop.permute.xlu0 %2317
        %v2319 = vlaneseq
        %v2320 = vshrl.u32 %v2319, 7
        %v2321 = vsub.s32 2, %v2320
        %v2322 = vrot.slane %v2184, %v2321
        %2324 = vbcast.lane.b32.xlu0 %v2322, 256
        %v2325 = vpop.permute.xlu0 %2324
        %s2327 = sor.u32 256, 8
        %2328 = vbcast.lane.b32.xlu0 %v2322, %s2327
        %v2329 = vpop.permute.xlu0 %2328
        %s2331 = sor.u32 256, 16
        %2332 = vbcast.lane.b32.xlu0 %v2322, %s2331
        %v2333 = vpop.permute.xlu0 %2332
        %s2335 = sor.u32 256, 24
        %2336 = vbcast.lane.b32.xlu0 %v2322, %s2335
        %v2337 = vpop.permute.xlu0 %2336
        %s2339 = sor.u32 256, 32
        %2340 = vbcast.lane.b32.xlu0 %v2322, %s2339
        %v2341 = vpop.permute.xlu0 %2340
        %s2343 = sor.u32 256, 40
        %2344 = vbcast.lane.b32.xlu0 %v2322, %s2343
        %v2345 = vpop.permute.xlu0 %2344
        %s2347 = sor.u32 256, 48
        %2348 = vbcast.lane.b32.xlu0 %v2322, %s2347
        %v2349 = vpop.permute.xlu0 %2348
        %s2351 = sor.u32 256, 56
        %2352 = vbcast.lane.b32.xlu0 %v2322, %s2351
        %v2353 = vpop.permute.xlu0 %2352
        %v2354 = vlaneseq
        %v2355 = vshrl.u32 %v2354, 7
        %v2356 = vsub.s32 3, %v2355
        %v2357 = vrot.slane %v2184, %v2356
        %2359 = vbcast.lane.b32.xlu0 %v2357, 256
        %v2360 = vpop.permute.xlu0 %2359
        %s2362 = sor.u32 256, 8
        %2363 = vbcast.lane.b32.xlu0 %v2357, %s2362
        %v2364 = vpop.permute.xlu0 %2363
        %s2366 = sor.u32 256, 16
        %2367 = vbcast.lane.b32.xlu0 %v2357, %s2366
        %v2368 = vpop.permute.xlu0 %2367
        %s2370 = sor.u32 256, 24
        %2371 = vbcast.lane.b32.xlu0 %v2357, %s2370
        %v2372 = vpop.permute.xlu0 %2371
        %s2374 = sor.u32 256, 32
        %2375 = vbcast.lane.b32.xlu0 %v2357, %s2374
        %v2376 = vpop.permute.xlu0 %2375
        %s2378 = sor.u32 256, 40
        %2379 = vbcast.lane.b32.xlu0 %v2357, %s2378
        %v2380 = vpop.permute.xlu0 %2379
        %s2382 = sor.u32 256, 48
        %2383 = vbcast.lane.b32.xlu0 %v2357, %s2382
        %v2384 = vpop.permute.xlu0 %2383
        %s2386 = sor.u32 256, 56
        %2387 = vbcast.lane.b32.xlu0 %v2357, %s2386
        %v2388 = vpop.permute.xlu0 %2387
        %v2389 = vlaneseq
        %v2390 = vshrl.u32 %v2389, 7
        %v2391 = vsub.s32 4, %v2390
        %v2392 = vrot.slane %v2184, %v2391
        %2394 = vbcast.lane.b32.xlu0 %v2392, 256
        %v2395 = vpop.permute.xlu0 %2394
        %s2397 = sor.u32 256, 8
        %2398 = vbcast.lane.b32.xlu0 %v2392, %s2397
        %v2399 = vpop.permute.xlu0 %2398
        %s2401 = sor.u32 256, 16
        %2402 = vbcast.lane.b32.xlu0 %v2392, %s2401
        %v2403 = vpop.permute.xlu0 %2402
        %s2405 = sor.u32 256, 24
        %2406 = vbcast.lane.b32.xlu0 %v2392, %s2405
        %v2407 = vpop.permute.xlu0 %2406
        %s2409 = sor.u32 256, 32
        %2410 = vbcast.lane.b32.xlu0 %v2392, %s2409
        %v2411 = vpop.permute.xlu0 %2410
        %s2413 = sor.u32 256, 40
        %2414 = vbcast.lane.b32.xlu0 %v2392, %s2413
        %v2415 = vpop.permute.xlu0 %2414
        %s2417 = sor.u32 256, 48
        %2418 = vbcast.lane.b32.xlu0 %v2392, %s2417
        %v2419 = vpop.permute.xlu0 %2418
        %s2421 = sor.u32 256, 56
        %2422 = vbcast.lane.b32.xlu0 %v2392, %s2421
        %v2423 = vpop.permute.xlu0 %2422
        %v2424 = vlaneseq
        %v2425 = vshrl.u32 %v2424, 7
        %v2426 = vsub.s32 5, %v2425
        %v2427 = vrot.slane %v2184, %v2426
        %2429 = vbcast.lane.b32.xlu0 %v2427, 256
        %v2430 = vpop.permute.xlu0 %2429
        %s2432 = sor.u32 256, 8
        %2433 = vbcast.lane.b32.xlu0 %v2427, %s2432
        %v2434 = vpop.permute.xlu0 %2433
        %s2436 = sor.u32 256, 16
        %2437 = vbcast.lane.b32.xlu0 %v2427, %s2436
        %v2438 = vpop.permute.xlu0 %2437
        %s2440 = sor.u32 256, 24
        %2441 = vbcast.lane.b32.xlu0 %v2427, %s2440
        %v2442 = vpop.permute.xlu0 %2441
        %s2444 = sor.u32 256, 32
        %2445 = vbcast.lane.b32.xlu0 %v2427, %s2444
        %v2446 = vpop.permute.xlu0 %2445
        %s2448 = sor.u32 256, 40
        %2449 = vbcast.lane.b32.xlu0 %v2427, %s2448
        %v2450 = vpop.permute.xlu0 %2449
        %s2452 = sor.u32 256, 48
        %2453 = vbcast.lane.b32.xlu0 %v2427, %s2452
        %v2454 = vpop.permute.xlu0 %2453
        %s2456 = sor.u32 256, 56
        %2457 = vbcast.lane.b32.xlu0 %v2427, %s2456
        %v2458 = vpop.permute.xlu0 %2457
        %v2459 = vlaneseq
        %v2460 = vshrl.u32 %v2459, 7
        %v2461 = vsub.s32 6, %v2460
        %v2462 = vrot.slane %v2184, %v2461
        %2464 = vbcast.lane.b32.xlu0 %v2462, 256
        %v2465 = vpop.permute.xlu0 %2464
        %s2467 = sor.u32 256, 8
        %2468 = vbcast.lane.b32.xlu0 %v2462, %s2467
        %v2469 = vpop.permute.xlu0 %2468
        %s2471 = sor.u32 256, 16
        %2472 = vbcast.lane.b32.xlu0 %v2462, %s2471
        %v2473 = vpop.permute.xlu0 %2472
        %s2475 = sor.u32 256, 24
        %2476 = vbcast.lane.b32.xlu0 %v2462, %s2475
        %v2477 = vpop.permute.xlu0 %2476
        %s2479 = sor.u32 256, 32
        %2480 = vbcast.lane.b32.xlu0 %v2462, %s2479
        %v2481 = vpop.permute.xlu0 %2480
        %s2483 = sor.u32 256, 40
        %2484 = vbcast.lane.b32.xlu0 %v2462, %s2483
        %v2485 = vpop.permute.xlu0 %2484
        %s2487 = sor.u32 256, 48
        %2488 = vbcast.lane.b32.xlu0 %v2462, %s2487
        %v2489 = vpop.permute.xlu0 %2488
        %s2491 = sor.u32 256, 56
        %2492 = vbcast.lane.b32.xlu0 %v2462, %s2491
        %v2493 = vpop.permute.xlu0 %2492
        %v2494 = vlaneseq
        %v2495 = vshrl.u32 %v2494, 7
        %v2496 = vsub.s32 7, %v2495
        %v2497 = vrot.slane %v2184, %v2496
        %2499 = vbcast.lane.b32.xlu0 %v2497, 256
        %v2500 = vpop.permute.xlu0 %2499
        %s2502 = sor.u32 256, 8
        %2503 = vbcast.lane.b32.xlu0 %v2497, %s2502
        %v2504 = vpop.permute.xlu0 %2503
        %s2506 = sor.u32 256, 16
        %2507 = vbcast.lane.b32.xlu0 %v2497, %s2506
        %v2508 = vpop.permute.xlu0 %2507
        %s2510 = sor.u32 256, 24
        %2511 = vbcast.lane.b32.xlu0 %v2497, %s2510
        %v2512 = vpop.permute.xlu0 %2511
        %s2514 = sor.u32 256, 32
        %2515 = vbcast.lane.b32.xlu0 %v2497, %s2514
        %v2516 = vpop.permute.xlu0 %2515
        %s2518 = sor.u32 256, 40
        %2519 = vbcast.lane.b32.xlu0 %v2497, %s2518
        %v2520 = vpop.permute.xlu0 %2519
        %s2522 = sor.u32 256, 48
        %2523 = vbcast.lane.b32.xlu0 %v2497, %s2522
        %v2524 = vpop.permute.xlu0 %2523
        %s2526 = sor.u32 256, 56
        %2527 = vbcast.lane.b32.xlu0 %v2497, %s2526
        %v2528 = vpop.permute.xlu0 %2527
        %v2529 = vmul.f32 %v2185, %v2255
        %v2530 = vmul.f32 %v2186, %v2259
        %v2531 = vmul.f32 %v2187, %v2263
        %v2532 = vmul.f32 %v2188, %v2267
        %v2533 = vmul.f32 %v2189, %v2271
        %v2534 = vmul.f32 %v2190, %v2275
        %v2535 = vmul.f32 %v2191, %v2279
        %v2536 = vmul.f32 %v2192, %v2283
        %v2537 = vmul.f32 %v2193, %v2290
        %v2538 = vmul.f32 %v2194, %v2294
        %v2539 = vmul.f32 %v2195, %v2298
        %v2540 = vmul.f32 %v2196, %v2302
        %v2541 = vmul.f32 %v2197, %v2306
        %v2542 = vmul.f32 %v2198, %v2310
        %v2543 = vmul.f32 %v2199, %v2314
        %v2544 = vmul.f32 %v2200, %v2318
        %v2545 = vmul.f32 %v2201, %v2325
        %v2546 = vmul.f32 %v2202, %v2329
        %v2547 = vmul.f32 %v2203, %v2333
        %v2548 = vmul.f32 %v2204, %v2337
        %v2549 = vmul.f32 %v2205, %v2341
        %v2550 = vmul.f32 %v2206, %v2345
        %v2551 = vmul.f32 %v2207, %v2349
        %v2552 = vmul.f32 %v2208, %v2353
        %v2553 = vmul.f32 %v2209, %v2360
        %v2554 = vmul.f32 %v2210, %v2364
        %v2555 = vmul.f32 %v2211, %v2368
        %v2556 = vmul.f32 %v2212, %v2372
        %v2557 = vmul.f32 %v2213, %v2376
        %v2558 = vmul.f32 %v2214, %v2380
        %v2559 = vmul.f32 %v2215, %v2384
        %v2560 = vmul.f32 %v2216, %v2388
        %v2561 = vmul.f32 %v2217, %v2395
        %v2562 = vmul.f32 %v2218, %v2399
        %v2563 = vmul.f32 %v2219, %v2403
        %v2564 = vmul.f32 %v2220, %v2407
        %v2565 = vmul.f32 %v2221, %v2411
        %v2566 = vmul.f32 %v2222, %v2415
        %v2567 = vmul.f32 %v2223, %v2419
        %v2568 = vmul.f32 %v2224, %v2423
        %v2569 = vmul.f32 %v2225, %v2430
        %v2570 = vmul.f32 %v2226, %v2434
        %v2571 = vmul.f32 %v2227, %v2438
        %v2572 = vmul.f32 %v2228, %v2442
        %v2573 = vmul.f32 %v2229, %v2446
        %v2574 = vmul.f32 %v2230, %v2450
        %v2575 = vmul.f32 %v2231, %v2454
        %v2576 = vmul.f32 %v2232, %v2458
        %v2577 = vmul.f32 %v2233, %v2465
        %v2578 = vmul.f32 %v2234, %v2469
        %v2579 = vmul.f32 %v2235, %v2473
        %v2580 = vmul.f32 %v2236, %v2477
        %v2581 = vmul.f32 %v2237, %v2481
        %v2582 = vmul.f32 %v2238, %v2485
        %v2583 = vmul.f32 %v2239, %v2489
        %v2584 = vmul.f32 %v2240, %v2493
        %v2585 = vmul.f32 %v2241, %v2500
        %v2586 = vmul.f32 %v2242, %v2504
        %v2587 = vmul.f32 %v2243, %v2508
        %v2588 = vmul.f32 %v2244, %v2512
        %v2589 = vmul.f32 %v2245, %v2516
        %v2590 = vmul.f32 %v2246, %v2520
        %v2591 = vmul.f32 %v2247, %v2524
        %v2592 = vmul.f32 %v2248, %v2528
        %v2593 = vsel %vm1389, %v2529, 0.0
        %v2594 = vsel %vm1389, %v2530, 0.0
        %v2595 = vadd.f32 %v2593, %v2594
        %v2596 = vsel %vm1389, %v2531, 0.0
        %v2597 = vadd.f32 %v2595, %v2596
        %v2598 = vsel %vm1389, %v2532, 0.0
        %v2599 = vadd.f32 %v2597, %v2598
        %v2600 = vsel %vm1389, %v2533, 0.0
        %v2601 = vadd.f32 %v2599, %v2600
        %v2602 = vsel %vm1389, %v2534, 0.0
        %v2603 = vadd.f32 %v2601, %v2602
        %v2604 = vsel %vm1389, %v2535, 0.0
        %v2605 = vadd.f32 %v2603, %v2604
        %v2606 = vsel %vm1389, %v2536, 0.0
        %v2607 = vadd.f32 %v2605, %v2606
        %v2608 = vrot.slane %v2607, 4
        %v2609 = vadd.f32 %v2607, %v2608
        %v2610 = vrot.slane %v2609, 2
        %v2611 = vadd.f32 %v2609, %v2610
        %v2612 = vrot.slane %v2611, 1
        %v2613 = vadd.f32 %v2611, %v2612
        %v2614 = vsel %vm1389, %v2537, 0.0
        %v2615 = vsel %vm1389, %v2538, 0.0
        %v2616 = vadd.f32 %v2614, %v2615
        %v2617 = vsel %vm1389, %v2539, 0.0
        %v2618 = vadd.f32 %v2616, %v2617
        %v2619 = vsel %vm1389, %v2540, 0.0
        %v2620 = vadd.f32 %v2618, %v2619
        %v2621 = vsel %vm1389, %v2541, 0.0
        %v2622 = vadd.f32 %v2620, %v2621
        %v2623 = vsel %vm1389, %v2542, 0.0
        %v2624 = vadd.f32 %v2622, %v2623
        %v2625 = vsel %vm1389, %v2543, 0.0
        %v2626 = vadd.f32 %v2624, %v2625
        %v2627 = vsel %vm1389, %v2544, 0.0
        %v2628 = vadd.f32 %v2626, %v2627
        %v2629 = vrot.slane %v2628, 4
        %v2630 = vadd.f32 %v2628, %v2629
        %v2631 = vrot.slane %v2630, 2
        %v2632 = vadd.f32 %v2630, %v2631
        %v2633 = vrot.slane %v2632, 1
        %v2634 = vadd.f32 %v2632, %v2633
        %v2635 = vsel %vm1389, %v2545, 0.0
        %v2636 = vsel %vm1389, %v2546, 0.0
        %v2637 = vadd.f32 %v2635, %v2636
        %v2638 = vsel %vm1389, %v2547, 0.0
        %v2639 = vadd.f32 %v2637, %v2638
        %v2640 = vsel %vm1389, %v2548, 0.0
        %v2641 = vadd.f32 %v2639, %v2640
        %v2642 = vsel %vm1389, %v2549, 0.0
        %v2643 = vadd.f32 %v2641, %v2642
        %v2644 = vsel %vm1389, %v2550, 0.0
        %v2645 = vadd.f32 %v2643, %v2644
        %v2646 = vsel %vm1389, %v2551, 0.0
        %v2647 = vadd.f32 %v2645, %v2646
        %v2648 = vsel %vm1389, %v2552, 0.0
        %v2649 = vadd.f32 %v2647, %v2648
        %v2650 = vrot.slane %v2649, 4
        %v2651 = vadd.f32 %v2649, %v2650
        %v2652 = vrot.slane %v2651, 2
        %v2653 = vadd.f32 %v2651, %v2652
        %v2654 = vrot.slane %v2653, 1
        %v2655 = vadd.f32 %v2653, %v2654
        %v2656 = vsel %vm1389, %v2553, 0.0
        %v2657 = vsel %vm1389, %v2554, 0.0
        %v2658 = vadd.f32 %v2656, %v2657
        %v2659 = vsel %vm1389, %v2555, 0.0
        %v2660 = vadd.f32 %v2658, %v2659
        %v2661 = vsel %vm1389, %v2556, 0.0
        %v2662 = vadd.f32 %v2660, %v2661
        %v2663 = vsel %vm1389, %v2557, 0.0
        %v2664 = vadd.f32 %v2662, %v2663
        %v2665 = vsel %vm1389, %v2558, 0.0
        %v2666 = vadd.f32 %v2664, %v2665
        %v2667 = vsel %vm1389, %v2559, 0.0
        %v2668 = vadd.f32 %v2666, %v2667
        %v2669 = vsel %vm1389, %v2560, 0.0
        %v2670 = vadd.f32 %v2668, %v2669
        %v2671 = vrot.slane %v2670, 4
        %v2672 = vadd.f32 %v2670, %v2671
        %v2673 = vrot.slane %v2672, 2
        %v2674 = vadd.f32 %v2672, %v2673
        %v2675 = vrot.slane %v2674, 1
        %v2676 = vadd.f32 %v2674, %v2675
        %v2677 = vsel %vm1389, %v2561, 0.0
        %v2678 = vsel %vm1389, %v2562, 0.0
        %v2679 = vadd.f32 %v2677, %v2678
        %v2680 = vsel %vm1389, %v2563, 0.0
        %v2681 = vadd.f32 %v2679, %v2680
        %v2682 = vsel %vm1389, %v2564, 0.0
        %v2683 = vadd.f32 %v2681, %v2682
        %v2684 = vsel %vm1389, %v2565, 0.0
        %v2685 = vadd.f32 %v2683, %v2684
        %v2686 = vsel %vm1389, %v2566, 0.0
        %v2687 = vadd.f32 %v2685, %v2686
        %v2688 = vsel %vm1389, %v2567, 0.0
        %v2689 = vadd.f32 %v2687, %v2688
        %v2690 = vsel %vm1389, %v2568, 0.0
        %v2691 = vadd.f32 %v2689, %v2690
        %v2692 = vrot.slane %v2691, 4
        %v2693 = vadd.f32 %v2691, %v2692
        %v2694 = vrot.slane %v2693, 2
        %v2695 = vadd.f32 %v2693, %v2694
        %v2696 = vrot.slane %v2695, 1
        %v2697 = vadd.f32 %v2695, %v2696
        %v2698 = vsel %vm1389, %v2569, 0.0
        %v2699 = vsel %vm1389, %v2570, 0.0
        %v2700 = vadd.f32 %v2698, %v2699
        %v2701 = vsel %vm1389, %v2571, 0.0
        %v2702 = vadd.f32 %v2700, %v2701
        %v2703 = vsel %vm1389, %v2572, 0.0
        %v2704 = vadd.f32 %v2702, %v2703
        %v2705 = vsel %vm1389, %v2573, 0.0
        %v2706 = vadd.f32 %v2704, %v2705
        %v2707 = vsel %vm1389, %v2574, 0.0
        %v2708 = vadd.f32 %v2706, %v2707
        %v2709 = vsel %vm1389, %v2575, 0.0
        %v2710 = vadd.f32 %v2708, %v2709
        %v2711 = vsel %vm1389, %v2576, 0.0
        %v2712 = vadd.f32 %v2710, %v2711
        %v2713 = vrot.slane %v2712, 4
        %v2714 = vadd.f32 %v2712, %v2713
        %v2715 = vrot.slane %v2714, 2
        %v2716 = vadd.f32 %v2714, %v2715
        %v2717 = vrot.slane %v2716, 1
        %v2718 = vadd.f32 %v2716, %v2717
        %v2719 = vsel %vm1389, %v2577, 0.0
        %v2720 = vsel %vm1389, %v2578, 0.0
        %v2721 = vadd.f32 %v2719, %v2720
        %v2722 = vsel %vm1389, %v2579, 0.0
        %v2723 = vadd.f32 %v2721, %v2722
        %v2724 = vsel %vm1389, %v2580, 0.0
        %v2725 = vadd.f32 %v2723, %v2724
        %v2726 = vsel %vm1389, %v2581, 0.0
        %v2727 = vadd.f32 %v2725, %v2726
        %v2728 = vsel %vm1389, %v2582, 0.0
        %v2729 = vadd.f32 %v2727, %v2728
        %v2730 = vsel %vm1389, %v2583, 0.0
        %v2731 = vadd.f32 %v2729, %v2730
        %v2732 = vsel %vm1389, %v2584, 0.0
        %v2733 = vadd.f32 %v2731, %v2732
        %v2734 = vrot.slane %v2733, 4
        %v2735 = vadd.f32 %v2733, %v2734
        %v2736 = vrot.slane %v2735, 2
        %v2737 = vadd.f32 %v2735, %v2736
        %v2738 = vrot.slane %v2737, 1
        %v2739 = vadd.f32 %v2737, %v2738
        %v2740 = vsel %vm1389, %v2585, 0.0
        %v2741 = vsel %vm1389, %v2586, 0.0
        %v2742 = vadd.f32 %v2740, %v2741
        %v2743 = vsel %vm1389, %v2587, 0.0
        %v2744 = vadd.f32 %v2742, %v2743
        %v2745 = vsel %vm1389, %v2588, 0.0
        %v2746 = vadd.f32 %v2744, %v2745
        %v2747 = vsel %vm1389, %v2589, 0.0
        %v2748 = vadd.f32 %v2746, %v2747
        %v2749 = vsel %vm1389, %v2590, 0.0
        %v2750 = vadd.f32 %v2748, %v2749
        %v2751 = vsel %vm1389, %v2591, 0.0
        %v2752 = vadd.f32 %v2750, %v2751
        %v2753 = vsel %vm1389, %v2592, 0.0
        %v2754 = vadd.f32 %v2752, %v2753
        %v2755 = vrot.slane %v2754, 4
        %v2756 = vadd.f32 %v2754, %v2755
        %v2757 = vrot.slane %v2756, 2
        %v2758 = vadd.f32 %v2756, %v2757
        %v2759 = vrot.slane %v2758, 1
        %v2760 = vadd.f32 %v2758, %v2759
        %v2761 = vld [vmem:[%s477] sm:$0xff]
        %v2763 = vrot.slane %v2761, 1
        %v2764 = vrot.slane %v2761, 2
        %v2765 = vrot.slane %v2761, 3
        %v2766 = vrot.slane %v2761, 4
        %v2767 = vrot.slane %v2761, 5
        %v2768 = vrot.slane %v2761, 6
        %v2769 = vrot.slane %v2761, 7
        %v2778 = vmul.f32 %v2613, %v2761
        %v2779 = vmul.f32 %v2634, %v2763
        %v2780 = vmul.f32 %v2655, %v2764
        %v2781 = vmul.f32 %v2676, %v2765
        %v2782 = vmul.f32 %v2697, %v2766
        %v2783 = vmul.f32 %v2718, %v2767
        %v2784 = vmul.f32 %v2739, %v2768
        %v2785 = vmul.f32 %v2760, %v2769
        %v2794 = vrot.slane %v2779, 7
        %v2795 = vsel %vm1592, %v2794, %v2778
        %v2796 = vrot.slane %v2780, 6
        %v2797 = vsel %vm1595, %v2796, %v2795
        %v2798 = vrot.slane %v2781, 5
        %v2799 = vsel %vm1598, %v2798, %v2797
        %v2800 = vrot.slane %v2782, 4
        %v2801 = vsel %vm1601, %v2800, %v2799
        %v2802 = vrot.slane %v2783, 3
        %v2803 = vsel %vm1604, %v2802, %v2801
        %v2804 = vrot.slane %v2784, 2
        %v2805 = vsel %vm1607, %v2804, %v2803
        %v2806 = vrot.slane %v2785, 1
        %v2807 = vsel %vm1610, %v2806, %v2805
        %s2809 = scalar_lea.vmem %s462, 8 [#allocation6]
        %2810 = vst.msk [vmem:[%s2809] sm:$0xff] %vm1389, %v2807
        %v2811 = vld [vmem:[%s1] sm:$0xff]
        %v2812 = vld [vmem:[%s1 + $0x8] sm:$0xff]
        %v2813 = vld [vmem:[%s1 + $0x10] sm:$0xff]
        %v2814 = vld [vmem:[%s1 + $0x18] sm:$0xff]
        %v2815 = vld [vmem:[%s1 + $0x20] sm:$0xff]
        %v2816 = vld [vmem:[%s1 + $0x28] sm:$0xff]
        %v2817 = vld [vmem:[%s1 + $0x30] sm:$0xff]
        %v2818 = vld [vmem:[%s1 + $0x38] sm:$0xff]
        %v2820 = vsel %vm595, %v2184, 0
        %2822 = vmatprep.subr.mxu0 0.0
        %2823 = vmatpush1.msra.mxu0 %v2811
        %2824 = vmatprep.subr.mxu0 0.0
        %2825 = vmatpush1.msra.mxu0 %v2812
        %2826 = vmatprep.subr.mxu0 0.0
        %2827 = vmatpush1.msra.mxu0 %v2813
        %2828 = vmatprep.subr.mxu0 0.0
        %2829 = vmatpush1.msra.mxu0 %v2814
        %2830 = vmatprep.subr.mxu0 0.0
        %2831 = vmatpush1.msra.mxu0 %v2815
        %2832 = vmatprep.subr.mxu0 0.0
        %2833 = vmatpush1.msra.mxu0 %v2816
        %2834 = vmatprep.subr.mxu0 0.0
        %2835 = vmatpush1.msra.mxu0 %v2817
        %2836 = vmatprep.subr.mxu0 0.0
        %2837 = vmatpush1.msra.mxu0 %v2818
        %2838 = vmatprep.subr.mxu0 0.0
        %2839 = vmatpush1.msra.mxu0 0.0
        %2840 = vmatprep.subr.mxu0 0.0
        %2841 = vmatpush1.msra.mxu0 0.0
        %2842 = vmatprep.subr.mxu0 0.0
        %2843 = vmatpush1.msra.mxu0 0.0
        %2844 = vmatprep.subr.mxu0 0.0
        %2845 = vmatpush1.msra.mxu0 0.0
        %2846 = vmatprep.subr.mxu0 0.0
        %2847 = vmatpush1.msra.mxu0 0.0
        %2848 = vmatprep.subr.mxu0 0.0
        %2849 = vmatpush1.msra.mxu0 0.0
        %2850 = vmatprep.subr.mxu0 0.0
        %2851 = vmatpush1.msra.mxu0 0.0
        %2852 = vmatprep.subr.mxu0 0.0
        %2853 = vmatpush1.msra.mxu0 0.0
        %2854 = vmatprep.subr.mxu0 0.0
        %2855 = vmatpush1.msra.mxu0 0.0
        %2856 = vmatprep.subr.mxu0 0.0
        %2857 = vmatpush1.msra.mxu0 0.0
        %2858 = vmatprep.subr.mxu0 0.0
        %2859 = vmatpush1.msra.mxu0 0.0
        %2860 = vmatprep.subr.mxu0 0.0
        %2861 = vmatpush1.msra.mxu0 0.0
        %2862 = vmatprep.subr.mxu0 0.0
        %2863 = vmatpush1.msra.mxu0 0.0
        %2864 = vmatprep.subr.mxu0 0.0
        %2865 = vmatpush1.msra.mxu0 0.0
        %2866 = vmatprep.subr.mxu0 0.0
        %2867 = vmatpush1.msra.mxu0 0.0
        %2868 = vmatprep.subr.mxu0 0.0
        %2869 = vmatpush1.msra.mxu0 0.0
        %2870 = vmatprep.subr.mxu0 0.0
        %2871 = vmatpush1.msra.mxu0 0.0
        %2872 = vmatprep.subr.mxu0 0.0
        %2873 = vmatpush1.msra.mxu0 0.0
        %2874 = vmatprep.subr.mxu0 0.0
        %2875 = vmatpush1.msra.mxu0 0.0
        %2876 = vmatprep.subr.mxu0 0.0
        %2877 = vmatpush1.msra.mxu0 0.0
        %2878 = vmatprep.subr.mxu0 0.0
        %2879 = vmatpush1.msra.mxu0 0.0
        %2880 = vmatprep.subr.mxu0 0.0
        %2881 = vmatpush1.msra.mxu0 0.0
        %2882 = vmatprep.subr.mxu0 0.0
        %2883 = vmatpush1.msra.mxu0 0.0
        %2884 = vmatprep.subr.mxu0 0.0
        %2885 = vmatpush1.msra.mxu0 0.0
        %2886 = vmatprep.mubr.f32.mxu0 0.0
        %2887 = vmatmul.mubr.f32.gmra.mrb[0].mxu0 %v2820
        %v2888 = vpop.f32.mrb[0].mxu0
        %v2889 = vadd.f32 0.0, %v2888
        %v2890 = vpop.f32.mrb[0].mxu0
        %2891 = vdwg.mxu0
        %s2892 = scalar_lea.vmem %s455, 8 [#allocation4]
        %2893 = vst [vmem:[%s2892] sm:$0xff] %v2889
        %2894 = vmax.xlane.f32.xlu0 %v2889
        %v2895 = vpop.xlane.xlu0 %2894
        %vm2896 = vcmp.eq.f32.partialorder %v2889, %v2895
        %v2897 = vsel %vm2896, %v481, 128
        %v2898 = vand.u32 %v2897, 65535
        %v2899 = vshra.s32 %v2897, 16
        %v2900 = vcvt.s32.f32 %v2898
        %v2901 = vcvt.s32.f32 %v2899
        %2902 = vmin.xlane.f32.xlu0 %v2901
        %v2903 = vpop.xlane.xlu0 %2902
        %vm2904 = vcmp.eq.f32.partialorder %v2901, %v2903
        %v2905 = vsel %vm2904, %v2900, inf
        %2906 = vmin.xlane.f32.xlu0 %v2905
        %v2907 = vpop.xlane.xlu0 %2906
        %v2908 = vcvt.f32.s32 %v2907
        %v2909 = vcvt.f32.s32 %v2903
        %v2910 = vshll.u32 %v2909, 16
        %v2911 = vadd.s32 %v2910, %v2908
        %vm2912 = vcmp.eq.s32.totalorder %v481, %v2911
        %v2913 = vsel %vm2912, 1, 0
        %v2914 = vcvt.s32.f32 %v2913
        %v2915 = vld [vmem:[%s0] sm:$0xff]
        %v2916 = vld [vmem:[%s0 + $0x8] sm:$0xff]
        %v2917 = vld [vmem:[%s0 + $0x10] sm:$0xff]
        %v2918 = vld [vmem:[%s0 + $0x18] sm:$0xff]
        %v2919 = vld [vmem:[%s0 + $0x20] sm:$0xff]
        %v2920 = vld [vmem:[%s0 + $0x28] sm:$0xff]
        %v2921 = vld [vmem:[%s0 + $0x30] sm:$0xff]
        %v2922 = vld [vmem:[%s0 + $0x38] sm:$0xff]
        %v2923 = vld [vmem:[%s0 + $0x40] sm:$0xff]
        %v2924 = vld [vmem:[%s0 + $0x48] sm:$0xff]
        %v2925 = vld [vmem:[%s0 + $0x50] sm:$0xff]
        %v2926 = vld [vmem:[%s0 + $0x58] sm:$0xff]
        %v2927 = vld [vmem:[%s0 + $0x60] sm:$0xff]
        %v2928 = vld [vmem:[%s0 + $0x68] sm:$0xff]
        %v2929 = vld [vmem:[%s0 + $0x70] sm:$0xff]
        %v2930 = vld [vmem:[%s0 + $0x78] sm:$0xff]
        %2931 = vmatprep.subr.mxu0 0.0
        %2932 = vmatpush1.msra.mxu0 %v2915
        %2933 = vmatprep.subr.mxu0 0.0
        %2934 = vmatpush1.msra.mxu0 %v2916
        %2935 = vmatprep.subr.mxu0 0.0
        %2936 = vmatpush1.msra.mxu0 %v2917
        %2937 = vmatprep.subr.mxu0 0.0
        %2938 = vmatpush1.msra.mxu0 %v2918
        %2939 = vmatprep.subr.mxu0 0.0
        %2940 = vmatpush1.msra.mxu0 %v2919
        %2941 = vmatprep.subr.mxu0 0.0
        %2942 = vmatpush1.msra.mxu0 %v2920
        %2943 = vmatprep.subr.mxu0 0.0
        %2944 = vmatpush1.msra.mxu0 %v2921
        %2945 = vmatprep.subr.mxu0 0.0
        %2946 = vmatpush1.msra.mxu0 %v2922
        %2947 = vmatprep.subr.mxu0 0.0
        %2948 = vmatpush1.msra.mxu0 %v2923
        %2949 = vmatprep.subr.mxu0 0.0
        %2950 = vmatpush1.msra.mxu0 %v2924
        %2951 = vmatprep.subr.mxu0 0.0
        %2952 = vmatpush1.msra.mxu0 %v2925
        %2953 = vmatprep.subr.mxu0 0.0
        %2954 = vmatpush1.msra.mxu0 %v2926
        %2955 = vmatprep.subr.mxu0 0.0
        %2956 = vmatpush1.msra.mxu0 %v2927
        %2957 = vmatprep.subr.mxu0 0.0
        %2958 = vmatpush1.msra.mxu0 %v2928
        %2959 = vmatprep.subr.mxu0 0.0
        %2960 = vmatpush1.msra.mxu0 %v2929
        %2961 = vmatprep.subr.mxu0 0.0
        %2962 = vmatpush1.msra.mxu0 %v2930
        %2963 = vmatprep.subr.mxu0 0.0
        %2964 = vmatpush1.msra.mxu0 0.0
        %2965 = vmatprep.subr.mxu0 0.0
        %2966 = vmatpush1.msra.mxu0 0.0
        %2967 = vmatprep.subr.mxu0 0.0
        %2968 = vmatpush1.msra.mxu0 0.0
        %2969 = vmatprep.subr.mxu0 0.0
        %2970 = vmatpush1.msra.mxu0 0.0
        %2971 = vmatprep.subr.mxu0 0.0
        %2972 = vmatpush1.msra.mxu0 0.0
        %2973 = vmatprep.subr.mxu0 0.0
        %2974 = vmatpush1.msra.mxu0 0.0
        %2975 = vmatprep.subr.mxu0 0.0
        %2976 = vmatpush1.msra.mxu0 0.0
        %2977 = vmatprep.subr.mxu0 0.0
        %2978 = vmatpush1.msra.mxu0 0.0
        %2979 = vmatprep.subr.mxu0 0.0
        %2980 = vmatpush1.msra.mxu0 0.0
        %2981 = vmatprep.subr.mxu0 0.0
        %2982 = vmatpush1.msra.mxu0 0.0
        %2983 = vmatprep.subr.mxu0 0.0
        %2984 = vmatpush1.msra.mxu0 0.0
        %2985 = vmatprep.subr.mxu0 0.0
        %2986 = vmatpush1.msra.mxu0 0.0
        %2987 = vmatprep.subr.mxu0 0.0
        %2988 = vmatpush1.msra.mxu0 0.0
        %2989 = vmatprep.subr.mxu0 0.0
        %2990 = vmatpush1.msra.mxu0 0.0
        %2991 = vmatprep.subr.mxu0 0.0
        %2992 = vmatpush1.msra.mxu0 0.0
        %2993 = vmatprep.subr.mxu0 0.0
        %2994 = vmatpush1.msra.mxu0 0.0
        %2995 = vmatprep.mubr.f32.mxu0 0.0
        %2996 = vmatmul.mubr.f32.gmra.mrb[0].mxu0 %v2914
        %v2997 = vpop.f32.mrb[0].mxu0
        %v2998 = vadd.f32 0.0, %v2997
        %v2999 = vpop.f32.mrb[0].mxu0
        %3000 = vdwg.mxu0
        %3001 = vrot.lane.b32.xlu0 %v2184, 64
        %v3002 = vpop.permute.xlu0 %3001
        %v3004 = vsel %vm595, %v2998, %v3002
        %v3005 = vld [vmem:[%s5] sm:$0xff]
        %v3006 = vld [vmem:[%s5 + $0x8] sm:$0xff]
        %v3007 = vld [vmem:[%s5 + $0x10] sm:$0xff]
        %v3008 = vld [vmem:[%s5 + $0x18] sm:$0xff]
        %v3009 = vld [vmem:[%s5 + $0x20] sm:$0xff]
        %v3010 = vld [vmem:[%s5 + $0x28] sm:$0xff]
        %v3011 = vld [vmem:[%s5 + $0x30] sm:$0xff]
        %v3012 = vld [vmem:[%s5 + $0x38] sm:$0xff]
        %v3013 = vld [vmem:[%s5 + $0x40] sm:$0xff]
        %v3014 = vld [vmem:[%s5 + $0x48] sm:$0xff]
        %v3015 = vld [vmem:[%s5 + $0x50] sm:$0xff]
        %v3016 = vld [vmem:[%s5 + $0x58] sm:$0xff]
        %v3017 = vld [vmem:[%s5 + $0x60] sm:$0xff]
        %v3018 = vld [vmem:[%s5 + $0x68] sm:$0xff]
        %v3019 = vld [vmem:[%s5 + $0x70] sm:$0xff]
        %v3020 = vld [vmem:[%s5 + $0x78] sm:$0xff]
        %v3021 = vld [vmem:[%s7] sm:$0x1]
        %v3023 = vlaneseq
        %v3024 = vshrl.u32 %v3023, 7
        %v3025 = vsub.s32 0, %v3024
        %v3026 = vrot.slane %v3021, %v3025
        %3028 = vmatprep.subr.mxu0 0.0
        %3029 = vmatpush1.msra.mxu0 %v3005
        %3030 = vmatprep.subr.mxu0 0.0
        %3031 = vmatpush1.msra.mxu0 %v3006
        %3032 = vmatprep.subr.mxu0 0.0
        %3033 = vmatpush1.msra.mxu0 %v3007
        %3034 = vmatprep.subr.mxu0 0.0
        %3035 = vmatpush1.msra.mxu0 %v3008
        %3036 = vmatprep.subr.mxu0 0.0
        %3037 = vmatpush1.msra.mxu0 %v3009
        %3038 = vmatprep.subr.mxu0 0.0
        %3039 = vmatpush1.msra.mxu0 %v3010
        %3040 = vmatprep.subr.mxu0 0.0
        %3041 = vmatpush1.msra.mxu0 %v3011
        %3042 = vmatprep.subr.mxu0 0.0
        %3043 = vmatpush1.msra.mxu0 %v3012
        %3044 = vmatprep.subr.mxu0 0.0
        %3045 = vmatpush1.msra.mxu0 %v3013
        %3046 = vmatprep.subr.mxu0 0.0
        %3047 = vmatpush1.msra.mxu0 %v3014
        %3048 = vmatprep.subr.mxu0 0.0
        %3049 = vmatpush1.msra.mxu0 %v3015
        %3050 = vmatprep.subr.mxu0 0.0
        %3051 = vmatpush1.msra.mxu0 %v3016
        %3052 = vmatprep.subr.mxu0 0.0
        %3053 = vmatpush1.msra.mxu0 %v3017
        %3054 = vmatprep.subr.mxu0 0.0
        %3055 = vmatpush1.msra.mxu0 %v3018
        %3056 = vmatprep.subr.mxu0 0.0
        %3057 = vmatpush1.msra.mxu0 %v3019
        %3058 = vmatprep.subr.mxu0 0.0
        %3059 = vmatpush1.msra.mxu0 %v3020
        %3060 = vmatprep.subr.mxu0 0.0
        %3061 = vmatpush1.msra.mxu0 0.0
        %3062 = vmatprep.subr.mxu0 0.0
        %3063 = vmatpush1.msra.mxu0 0.0
        %3064 = vmatprep.subr.mxu0 0.0
        %3065 = vmatpush1.msra.mxu0 0.0
        %3066 = vmatprep.subr.mxu0 0.0
        %3067 = vmatpush1.msra.mxu0 0.0
        %3068 = vmatprep.subr.mxu0 0.0
        %3069 = vmatpush1.msra.mxu0 0.0
        %3070 = vmatprep.subr.mxu0 0.0
        %3071 = vmatpush1.msra.mxu0 0.0
        %3072 = vmatprep.subr.mxu0 0.0
        %3073 = vmatpush1.msra.mxu0 0.0
        %3074 = vmatprep.subr.mxu0 0.0
        %3075 = vmatpush1.msra.mxu0 0.0
        %3076 = vmatprep.subr.mxu0 0.0
        %3077 = vmatpush1.msra.mxu0 0.0
        %3078 = vmatprep.subr.mxu0 0.0
        %3079 = vmatpush1.msra.mxu0 0.0
        %3080 = vmatprep.subr.mxu0 0.0
        %3081 = vmatpush1.msra.mxu0 0.0
        %3082 = vmatprep.subr.mxu0 0.0
        %3083 = vmatpush1.msra.mxu0 0.0
        %3084 = vmatprep.subr.mxu0 0.0
        %3085 = vmatpush1.msra.mxu0 0.0
        %3086 = vmatprep.subr.mxu0 0.0
        %3087 = vmatpush1.msra.mxu0 0.0
        %3088 = vmatprep.subr.mxu0 0.0
        %3089 = vmatpush1.msra.mxu0 0.0
        %3090 = vmatprep.subr.mxu0 0.0
        %3091 = vmatpush1.msra.mxu0 0.0
        %3092 = vmatprep.mubr.f32.mxu0 0.0
        %3093 = vmatmul.mubr.f32.gmra.mrb[0].mxu0 %v3004
        %v3094 = vpop.f32.mrb[0].mxu0
        %v3095 = vadd.f32 %v3026, %v3094
        %v3096 = vpop.f32.mrb[0].mxu0
        %3097 = vdwg.mxu0
        %v3098 = vxor.u32 %v3095, 2147483648
        %v3099 = vmul.f32 %v3098, 1.442695
        %v3100 = vpow.pop %v3099
        %v3101 = vadd.f32 %v3100, 1.0
        %v3102 = vrcp.pop %v3101
        %v3103 = vmul.f32 1.0, %v3102
        %v3104 = vld [vmem:[%s696] sm:$0xff]
        %v3105 = vld [vmem:[%s696 + $0x8] sm:$0xff]
        %v3106 = vld [vmem:[%s696 + $0x10] sm:$0xff]
        %v3107 = vld [vmem:[%s696 + $0x18] sm:$0xff]
        %v3108 = vld [vmem:[%s696 + $0x20] sm:$0xff]
        %v3109 = vld [vmem:[%s696 + $0x28] sm:$0xff]
        %v3110 = vld [vmem:[%s696 + $0x30] sm:$0xff]
        %v3111 = vld [vmem:[%s696 + $0x38] sm:$0xff]
        %v3112 = vld [vmem:[%s696 + $0x40] sm:$0xff]
        %v3113 = vld [vmem:[%s696 + $0x48] sm:$0xff]
        %v3114 = vld [vmem:[%s696 + $0x50] sm:$0xff]
        %v3115 = vld [vmem:[%s696 + $0x58] sm:$0xff]
        %v3116 = vld [vmem:[%s696 + $0x60] sm:$0xff]
        %v3117 = vld [vmem:[%s696 + $0x68] sm:$0xff]
        %v3118 = vld [vmem:[%s696 + $0x70] sm:$0xff]
        %v3119 = vld [vmem:[%s696 + $0x78] sm:$0xff]
        %v3120 = vld [vmem:[%s713] sm:$0x1]
        %v3122 = vlaneseq
        %v3123 = vshrl.u32 %v3122, 7
        %v3124 = vsub.s32 0, %v3123
        %v3125 = vrot.slane %v3120, %v3124
        %3127 = vmatprep.subr.mxu0 0.0
        %3128 = vmatpush1.msra.mxu0 %v3104
        %3129 = vmatprep.subr.mxu0 0.0
        %3130 = vmatpush1.msra.mxu0 %v3105
        %3131 = vmatprep.subr.mxu0 0.0
        %3132 = vmatpush1.msra.mxu0 %v3106
        %3133 = vmatprep.subr.mxu0 0.0
        %3134 = vmatpush1.msra.mxu0 %v3107
        %3135 = vmatprep.subr.mxu0 0.0
        %3136 = vmatpush1.msra.mxu0 %v3108
        %3137 = vmatprep.subr.mxu0 0.0
        %3138 = vmatpush1.msra.mxu0 %v3109
        %3139 = vmatprep.subr.mxu0 0.0
        %3140 = vmatpush1.msra.mxu0 %v3110
        %3141 = vmatprep.subr.mxu0 0.0
        %3142 = vmatpush1.msra.mxu0 %v3111
        %3143 = vmatprep.subr.mxu0 0.0
        %3144 = vmatpush1.msra.mxu0 %v3112
        %3145 = vmatprep.subr.mxu0 0.0
        %3146 = vmatpush1.msra.mxu0 %v3113
        %3147 = vmatprep.subr.mxu0 0.0
        %3148 = vmatpush1.msra.mxu0 %v3114
        %3149 = vmatprep.subr.mxu0 0.0
        %3150 = vmatpush1.msra.mxu0 %v3115
        %3151 = vmatprep.subr.mxu0 0.0
        %3152 = vmatpush1.msra.mxu0 %v3116
        %3153 = vmatprep.subr.mxu0 0.0
        %3154 = vmatpush1.msra.mxu0 %v3117
        %3155 = vmatprep.subr.mxu0 0.0
        %3156 = vmatpush1.msra.mxu0 %v3118
        %3157 = vmatprep.subr.mxu0 0.0
        %3158 = vmatpush1.msra.mxu0 %v3119
        %3159 = vmatprep.subr.mxu0 0.0
        %3160 = vmatpush1.msra.mxu0 0.0
        %3161 = vmatprep.subr.mxu0 0.0
        %3162 = vmatpush1.msra.mxu0 0.0
        %3163 = vmatprep.subr.mxu0 0.0
        %3164 = vmatpush1.msra.mxu0 0.0
        %3165 = vmatprep.subr.mxu0 0.0
        %3166 = vmatpush1.msra.mxu0 0.0
        %3167 = vmatprep.subr.mxu0 0.0
        %3168 = vmatpush1.msra.mxu0 0.0
        %3169 = vmatprep.subr.mxu0 0.0
        %3170 = vmatpush1.msra.mxu0 0.0
        %3171 = vmatprep.subr.mxu0 0.0
        %3172 = vmatpush1.msra.mxu0 0.0
        %3173 = vmatprep.subr.mxu0 0.0
        %3174 = vmatpush1.msra.mxu0 0.0
        %3175 = vmatprep.subr.mxu0 0.0
        %3176 = vmatpush1.msra.mxu0 0.0
        %3177 = vmatprep.subr.mxu0 0.0
        %3178 = vmatpush1.msra.mxu0 0.0
        %3179 = vmatprep.subr.mxu0 0.0
        %3180 = vmatpush1.msra.mxu0 0.0
        %3181 = vmatprep.subr.mxu0 0.0
        %3182 = vmatpush1.msra.mxu0 0.0
        %3183 = vmatprep.subr.mxu0 0.0
        %3184 = vmatpush1.msra.mxu0 0.0
        %3185 = vmatprep.subr.mxu0 0.0
        %3186 = vmatpush1.msra.mxu0 0.0
        %3187 = vmatprep.subr.mxu0 0.0
        %3188 = vmatpush1.msra.mxu0 0.0
        %3189 = vmatprep.subr.mxu0 0.0
        %3190 = vmatpush1.msra.mxu0 0.0
        %3191 = vmatprep.mubr.f32.mxu0 0.0
        %3192 = vmatmul.mubr.f32.gmra.mrb[0].mxu0 %v3004
        %v3193 = vpop.f32.mrb[0].mxu0
        %v3194 = vadd.f32 %v3125, %v3193
        %v3195 = vpop.f32.mrb[0].mxu0
        %3196 = vdwg.mxu0
        %v3197 = vxor.u32 %v3194, 2147483648
        %v3198 = vmul.f32 %v3197, 1.442695
        %v3199 = vpow.pop %v3198
        %v3200 = vadd.f32 %v3199, 1.0
        %v3201 = vrcp.pop %v3200
        %v3202 = vmul.f32 1.0, %v3201
        %v3203 = vld [vmem:[%s6] sm:$0xff]
        %v3204 = vld [vmem:[%s6 + $0x8] sm:$0xff]
        %v3205 = vld [vmem:[%s6 + $0x10] sm:$0xff]
        %v3206 = vld [vmem:[%s6 + $0x18] sm:$0xff]
        %v3207 = vld [vmem:[%s6 + $0x20] sm:$0xff]
        %v3208 = vld [vmem:[%s6 + $0x28] sm:$0xff]
        %v3209 = vld [vmem:[%s6 + $0x30] sm:$0xff]
        %v3210 = vld [vmem:[%s6 + $0x38] sm:$0xff]
        %v3211 = vld [vmem:[%s8] sm:$0x1]
        %v3213 = vlaneseq
        %v3214 = vshrl.u32 %v3213, 7
        %v3215 = vsub.s32 0, %v3214
        %v3216 = vrot.slane %v3211, %v3215
        %v3219 = vsel %vm595, %v2998, 0
        %3221 = vmatprep.subr.mxu0 0.0
        %3222 = vmatpush1.msra.mxu0 %v3203
        %3223 = vmatprep.subr.mxu0 0.0
        %3224 = vmatpush1.msra.mxu0 %v3204
        %3225 = vmatprep.subr.mxu0 0.0
        %3226 = vmatpush1.msra.mxu0 %v3205
        %3227 = vmatprep.subr.mxu0 0.0
        %3228 = vmatpush1.msra.mxu0 %v3206
        %3229 = vmatprep.subr.mxu0 0.0
        %3230 = vmatpush1.msra.mxu0 %v3207
        %3231 = vmatprep.subr.mxu0 0.0
        %3232 = vmatpush1.msra.mxu0 %v3208
        %3233 = vmatprep.subr.mxu0 0.0
        %3234 = vmatpush1.msra.mxu0 %v3209
        %3235 = vmatprep.subr.mxu0 0.0
        %3236 = vmatpush1.msra.mxu0 %v3210
        %3237 = vmatprep.subr.mxu0 0.0
        %3238 = vmatpush1.msra.mxu0 0.0
        %3239 = vmatprep.subr.mxu0 0.0
        %3240 = vmatpush1.msra.mxu0 0.0
        %3241 = vmatprep.subr.mxu0 0.0
        %3242 = vmatpush1.msra.mxu0 0.0
        %3243 = vmatprep.subr.mxu0 0.0
        %3244 = vmatpush1.msra.mxu0 0.0
        %3245 = vmatprep.subr.mxu0 0.0
        %3246 = vmatpush1.msra.mxu0 0.0
        %3247 = vmatprep.subr.mxu0 0.0
        %3248 = vmatpush1.msra.mxu0 0.0
        %3249 = vmatprep.subr.mxu0 0.0
        %3250 = vmatpush1.msra.mxu0 0.0
        %3251 = vmatprep.subr.mxu0 0.0
        %3252 = vmatpush1.msra.mxu0 0.0
        %3253 = vmatprep.subr.mxu0 0.0
        %3254 = vmatpush1.msra.mxu0 0.0
        %3255 = vmatprep.subr.mxu0 0.0
        %3256 = vmatpush1.msra.mxu0 0.0
        %3257 = vmatprep.subr.mxu0 0.0
        %3258 = vmatpush1.msra.mxu0 0.0
        %3259 = vmatprep.subr.mxu0 0.0
        %3260 = vmatpush1.msra.mxu0 0.0
        %3261 = vmatprep.subr.mxu0 0.0
        %3262 = vmatpush1.msra.mxu0 0.0
        %3263 = vmatprep.subr.mxu0 0.0
        %3264 = vmatpush1.msra.mxu0 0.0
        %3265 = vmatprep.subr.mxu0 0.0
        %3266 = vmatpush1.msra.mxu0 0.0
        %3267 = vmatprep.subr.mxu0 0.0
        %3268 = vmatpush1.msra.mxu0 0.0
        %3269 = vmatprep.subr.mxu0 0.0
        %3270 = vmatpush1.msra.mxu0 0.0
        %3271 = vmatprep.subr.mxu0 0.0
        %3272 = vmatpush1.msra.mxu0 0.0
        %3273 = vmatprep.subr.mxu0 0.0
        %3274 = vmatpush1.msra.mxu0 0.0
        %3275 = vmatprep.subr.mxu0 0.0
        %3276 = vmatpush1.msra.mxu0 0.0
        %3277 = vmatprep.subr.mxu0 0.0
        %3278 = vmatpush1.msra.mxu0 0.0
        %3279 = vmatprep.subr.mxu0 0.0
        %3280 = vmatpush1.msra.mxu0 0.0
        %3281 = vmatprep.subr.mxu0 0.0
        %3282 = vmatpush1.msra.mxu0 0.0
        %3283 = vmatprep.subr.mxu0 0.0
        %3284 = vmatpush1.msra.mxu0 0.0
        %3285 = vmatprep.mubr.f32.mxu0 0.0
        %3286 = vmatmul.mubr.f32.gmra.mrb[0].mxu0 %v3219
        %v3287 = vpop.f32.mrb[0].mxu0
        %v3288 = vadd.f32 %v3216, %v3287
        %v3289 = vpop.f32.mrb[0].mxu0
        %3290 = vdwg.mxu0
        %v3291 = vld [vmem:[%s885] sm:$0xff]
        %v3292 = vld [vmem:[%s885 + $0x8] sm:$0xff]
        %v3293 = vld [vmem:[%s885 + $0x10] sm:$0xff]
        %v3294 = vld [vmem:[%s885 + $0x18] sm:$0xff]
        %v3295 = vld [vmem:[%s885 + $0x20] sm:$0xff]
        %v3296 = vld [vmem:[%s885 + $0x28] sm:$0xff]
        %v3297 = vld [vmem:[%s885 + $0x30] sm:$0xff]
        %v3298 = vld [vmem:[%s885 + $0x38] sm:$0xff]
        %v3299 = vld [vmem:[%s894] sm:$0x1]
        %v3301 = vlaneseq
        %v3302 = vshrl.u32 %v3301, 7
        %v3303 = vsub.s32 0, %v3302
        %v3304 = vrot.slane %v3299, %v3303
        %3306 = vmatprep.subr.mxu0 0.0
        %3307 = vmatpush1.msra.mxu0 %v3291
        %3308 = vmatprep.subr.mxu0 0.0
        %3309 = vmatpush1.msra.mxu0 %v3292
        %3310 = vmatprep.subr.mxu0 0.0
        %3311 = vmatpush1.msra.mxu0 %v3293
        %3312 = vmatprep.subr.mxu0 0.0
        %3313 = vmatpush1.msra.mxu0 %v3294
        %3314 = vmatprep.subr.mxu0 0.0
        %3315 = vmatpush1.msra.mxu0 %v3295
        %3316 = vmatprep.subr.mxu0 0.0
        %3317 = vmatpush1.msra.mxu0 %v3296
        %3318 = vmatprep.subr.mxu0 0.0
        %3319 = vmatpush1.msra.mxu0 %v3297
        %3320 = vmatprep.subr.mxu0 0.0
        %3321 = vmatpush1.msra.mxu0 %v3298
        %3322 = vmatprep.subr.mxu0 0.0
        %3323 = vmatpush1.msra.mxu0 0.0
        %3324 = vmatprep.subr.mxu0 0.0
        %3325 = vmatpush1.msra.mxu0 0.0
        %3326 = vmatprep.subr.mxu0 0.0
        %3327 = vmatpush1.msra.mxu0 0.0
        %3328 = vmatprep.subr.mxu0 0.0
        %3329 = vmatpush1.msra.mxu0 0.0
        %3330 = vmatprep.subr.mxu0 0.0
        %3331 = vmatpush1.msra.mxu0 0.0
        %3332 = vmatprep.subr.mxu0 0.0
        %3333 = vmatpush1.msra.mxu0 0.0
        %3334 = vmatprep.subr.mxu0 0.0
        %3335 = vmatpush1.msra.mxu0 0.0
        %3336 = vmatprep.subr.mxu0 0.0
        %3337 = vmatpush1.msra.mxu0 0.0
        %3338 = vmatprep.subr.mxu0 0.0
        %3339 = vmatpush1.msra.mxu0 0.0
        %3340 = vmatprep.subr.mxu0 0.0
        %3341 = vmatpush1.msra.mxu0 0.0
        %3342 = vmatprep.subr.mxu0 0.0
        %3343 = vmatpush1.msra.mxu0 0.0
        %3344 = vmatprep.subr.mxu0 0.0
        %3345 = vmatpush1.msra.mxu0 0.0
        %3346 = vmatprep.subr.mxu0 0.0
        %3347 = vmatpush1.msra.mxu0 0.0
        %3348 = vmatprep.subr.mxu0 0.0
        %3349 = vmatpush1.msra.mxu0 0.0
        %3350 = vmatprep.subr.mxu0 0.0
        %3351 = vmatpush1.msra.mxu0 0.0
        %3352 = vmatprep.subr.mxu0 0.0
        %3353 = vmatpush1.msra.mxu0 0.0
        %3354 = vmatprep.subr.mxu0 0.0
        %3355 = vmatpush1.msra.mxu0 0.0
        %3356 = vmatprep.subr.mxu0 0.0
        %3357 = vmatpush1.msra.mxu0 0.0
        %3358 = vmatprep.subr.mxu0 0.0
        %3359 = vmatpush1.msra.mxu0 0.0
        %3360 = vmatprep.subr.mxu0 0.0
        %3361 = vmatpush1.msra.mxu0 0.0
        %3362 = vmatprep.subr.mxu0 0.0
        %3363 = vmatpush1.msra.mxu0 0.0
        %3364 = vmatprep.subr.mxu0 0.0
        %3365 = vmatpush1.msra.mxu0 0.0
        %3366 = vmatprep.subr.mxu0 0.0
        %3367 = vmatpush1.msra.mxu0 0.0
        %3368 = vmatprep.subr.mxu0 0.0
        %3369 = vmatpush1.msra.mxu0 0.0
        %3370 = vmatprep.mubr.f32.mxu0 0.0
        %3371 = vmatmul.mubr.f32.gmra.mrb[0].mxu0 %v2820
        %v3372 = vpop.f32.mrb[0].mxu0
        %v3373 = vadd.f32 %v3304, %v3372
        %v3374 = vpop.f32.mrb[0].mxu0
        %3375 = vdwg.mxu0
        %v3376 = vmul.f32 %v3103, %v3373
        %v3377 = vadd.f32 %v3288, %v3376
        %v3378 = vtanh.pop %v3377
        %v3379 = vsub.f32 1.0, %v3202
        %v3380 = vmul.f32 %v3379, %v3378
        %v3381 = vmul.f32 %v3202, %v2184
        %v3382 = vadd.f32 %v3380, %v3381
        %v3383 = vld [vmem:[%s472] sm:$0xff]
        %v3384 = vld [vmem:[%s472 + $0x8] sm:$0xff]
        %v3385 = vld [vmem:[%s472 + $0x10] sm:$0xff]
        %v3386 = vld [vmem:[%s472 + $0x18] sm:$0xff]
        %v3387 = vld [vmem:[%s472 + $0x20] sm:$0xff]
        %v3388 = vld [vmem:[%s472 + $0x28] sm:$0xff]
        %v3389 = vld [vmem:[%s472 + $0x30] sm:$0xff]
        %v3390 = vld [vmem:[%s472 + $0x38] sm:$0xff]
        %v3391 = vld [vmem:[%s472 + $0x40] sm:$0xff]
        %v3392 = vld [vmem:[%s472 + $0x48] sm:$0xff]
        %v3393 = vld [vmem:[%s472 + $0x50] sm:$0xff]
        %v3394 = vld [vmem:[%s472 + $0x58] sm:$0xff]
        %v3395 = vld [vmem:[%s472 + $0x60] sm:$0xff]
        %v3396 = vld [vmem:[%s472 + $0x68] sm:$0xff]
        %v3397 = vld [vmem:[%s472 + $0x70] sm:$0xff]
        %v3398 = vld [vmem:[%s472 + $0x78] sm:$0xff]
        %v3399 = vld [vmem:[%s472 + $0x80] sm:$0xff]
        %v3400 = vld [vmem:[%s472 + $0x88] sm:$0xff]
        %v3401 = vld [vmem:[%s472 + $0x90] sm:$0xff]
        %v3402 = vld [vmem:[%s472 + $0x98] sm:$0xff]
        %v3403 = vld [vmem:[%s472 + $0xa0] sm:$0xff]
        %v3404 = vld [vmem:[%s472 + $0xa8] sm:$0xff]
        %v3405 = vld [vmem:[%s472 + $0xb0] sm:$0xff]
        %v3406 = vld [vmem:[%s472 + $0xb8] sm:$0xff]
        %v3407 = vld [vmem:[%s472 + $0xc0] sm:$0xff]
        %v3408 = vld [vmem:[%s472 + $0xc8] sm:$0xff]
        %v3409 = vld [vmem:[%s472 + $0xd0] sm:$0xff]
        %v3410 = vld [vmem:[%s472 + $0xd8] sm:$0xff]
        %v3411 = vld [vmem:[%s472 + $0xe0] sm:$0xff]
        %v3412 = vld [vmem:[%s472 + $0xe8] sm:$0xff]
        %v3413 = vld [vmem:[%s472 + $0xf0] sm:$0xff]
        %v3414 = vld [vmem:[%s472 + $0xf8] sm:$0xff]
        %v3415 = vld [vmem:[%s472 + $0x100] sm:$0xff]
        %v3416 = vld [vmem:[%s472 + $0x108] sm:$0xff]
        %v3417 = vld [vmem:[%s472 + $0x110] sm:$0xff]
        %v3418 = vld [vmem:[%s472 + $0x118] sm:$0xff]
        %v3419 = vld [vmem:[%s472 + $0x120] sm:$0xff]
        %v3420 = vld [vmem:[%s472 + $0x128] sm:$0xff]
        %v3421 = vld [vmem:[%s472 + $0x130] sm:$0xff]
        %v3422 = vld [vmem:[%s472 + $0x138] sm:$0xff]
        %v3423 = vld [vmem:[%s472 + $0x140] sm:$0xff]
        %v3424 = vld [vmem:[%s472 + $0x148] sm:$0xff]
        %v3425 = vld [vmem:[%s472 + $0x150] sm:$0xff]
        %v3426 = vld [vmem:[%s472 + $0x158] sm:$0xff]
        %v3427 = vld [vmem:[%s472 + $0x160] sm:$0xff]
        %v3428 = vld [vmem:[%s472 + $0x168] sm:$0xff]
        %v3429 = vld [vmem:[%s472 + $0x170] sm:$0xff]
        %v3430 = vld [vmem:[%s472 + $0x178] sm:$0xff]
        %v3431 = vld [vmem:[%s472 + $0x180] sm:$0xff]
        %v3432 = vld [vmem:[%s472 + $0x188] sm:$0xff]
        %v3433 = vld [vmem:[%s472 + $0x190] sm:$0xff]
        %v3434 = vld [vmem:[%s472 + $0x198] sm:$0xff]
        %v3435 = vld [vmem:[%s472 + $0x1a0] sm:$0xff]
        %v3436 = vld [vmem:[%s472 + $0x1a8] sm:$0xff]
        %v3437 = vld [vmem:[%s472 + $0x1b0] sm:$0xff]
        %v3438 = vld [vmem:[%s472 + $0x1b8] sm:$0xff]
        %v3439 = vld [vmem:[%s472 + $0x1c0] sm:$0xff]
        %v3440 = vld [vmem:[%s472 + $0x1c8] sm:$0xff]
        %v3441 = vld [vmem:[%s472 + $0x1d0] sm:$0xff]
        %v3442 = vld [vmem:[%s472 + $0x1d8] sm:$0xff]
        %v3443 = vld [vmem:[%s472 + $0x1e0] sm:$0xff]
        %v3444 = vld [vmem:[%s472 + $0x1e8] sm:$0xff]
        %v3445 = vld [vmem:[%s472 + $0x1f0] sm:$0xff]
        %v3446 = vld [vmem:[%s472 + $0x1f8] sm:$0xff]
        %v3447 = vlaneseq
        %v3448 = vshrl.u32 %v3447, 7
        %v3449 = vsub.s32 0, %v3448
        %v3450 = vrot.slane %v3382, %v3449
        %3452 = vbcast.lane.b32.xlu0 %v3450, 256
        %v3453 = vpop.permute.xlu0 %3452
        %s3455 = sor.u32 256, 8
        %3456 = vbcast.lane.b32.xlu0 %v3450, %s3455
        %v3457 = vpop.permute.xlu0 %3456
        %s3459 = sor.u32 256, 16
        %3460 = vbcast.lane.b32.xlu0 %v3450, %s3459
        %v3461 = vpop.permute.xlu0 %3460
        %s3463 = sor.u32 256, 24
        %3464 = vbcast.lane.b32.xlu0 %v3450, %s3463
        %v3465 = vpop.permute.xlu0 %3464
        %s3467 = sor.u32 256, 32
        %3468 = vbcast.lane.b32.xlu0 %v3450, %s3467
        %v3469 = vpop.permute.xlu0 %3468
        %s3471 = sor.u32 256, 40
        %3472 = vbcast.lane.b32.xlu0 %v3450, %s3471
        %v3473 = vpop.permute.xlu0 %3472
        %s3475 = sor.u32 256, 48
        %3476 = vbcast.lane.b32.xlu0 %v3450, %s3475
        %v3477 = vpop.permute.xlu0 %3476
        %s3479 = sor.u32 256, 56
        %3480 = vbcast.lane.b32.xlu0 %v3450, %s3479
        %v3481 = vpop.permute.xlu0 %3480
        %v3482 = vlaneseq
        %v3483 = vshrl.u32 %v3482, 7
        %v3484 = vsub.s32 1, %v3483
        %v3485 = vrot.slane %v3382, %v3484
        %3487 = vbcast.lane.b32.xlu0 %v3485, 256
        %v3488 = vpop.permute.xlu0 %3487
        %s3490 = sor.u32 256, 8
        %3491 = vbcast.lane.b32.xlu0 %v3485, %s3490
        %v3492 = vpop.permute.xlu0 %3491
        %s3494 = sor.u32 256, 16
        %3495 = vbcast.lane.b32.xlu0 %v3485, %s3494
        %v3496 = vpop.permute.xlu0 %3495
        %s3498 = sor.u32 256, 24
        %3499 = vbcast.lane.b32.xlu0 %v3485, %s3498
        %v3500 = vpop.permute.xlu0 %3499
        %s3502 = sor.u32 256, 32
        %3503 = vbcast.lane.b32.xlu0 %v3485, %s3502
        %v3504 = vpop.permute.xlu0 %3503
        %s3506 = sor.u32 256, 40
        %3507 = vbcast.lane.b32.xlu0 %v3485, %s3506
        %v3508 = vpop.permute.xlu0 %3507
        %s3510 = sor.u32 256, 48
        %3511 = vbcast.lane.b32.xlu0 %v3485, %s3510
        %v3512 = vpop.permute.xlu0 %3511
        %s3514 = sor.u32 256, 56
        %3515 = vbcast.lane.b32.xlu0 %v3485, %s3514
        %v3516 = vpop.permute.xlu0 %3515
        %v3517 = vlaneseq
        %v3518 = vshrl.u32 %v3517, 7
        %v3519 = vsub.s32 2, %v3518
        %v3520 = vrot.slane %v3382, %v3519
        %3522 = vbcast.lane.b32.xlu0 %v3520, 256
        %v3523 = vpop.permute.xlu0 %3522
        %s3525 = sor.u32 256, 8
        %3526 = vbcast.lane.b32.xlu0 %v3520, %s3525
        %v3527 = vpop.permute.xlu0 %3526
        %s3529 = sor.u32 256, 16
        %3530 = vbcast.lane.b32.xlu0 %v3520, %s3529
        %v3531 = vpop.permute.xlu0 %3530
        %s3533 = sor.u32 256, 24
        %3534 = vbcast.lane.b32.xlu0 %v3520, %s3533
        %v3535 = vpop.permute.xlu0 %3534
        %s3537 = sor.u32 256, 32
        %3538 = vbcast.lane.b32.xlu0 %v3520, %s3537
        %v3539 = vpop.permute.xlu0 %3538
        %s3541 = sor.u32 256, 40
        %3542 = vbcast.lane.b32.xlu0 %v3520, %s3541
        %v3543 = vpop.permute.xlu0 %3542
        %s3545 = sor.u32 256, 48
        %3546 = vbcast.lane.b32.xlu0 %v3520, %s3545
        %v3547 = vpop.permute.xlu0 %3546
        %s3549 = sor.u32 256, 56
        %3550 = vbcast.lane.b32.xlu0 %v3520, %s3549
        %v3551 = vpop.permute.xlu0 %3550
        %v3552 = vlaneseq
        %v3553 = vshrl.u32 %v3552, 7
        %v3554 = vsub.s32 3, %v3553
        %v3555 = vrot.slane %v3382, %v3554
        %3557 = vbcast.lane.b32.xlu0 %v3555, 256
        %v3558 = vpop.permute.xlu0 %3557
        %s3560 = sor.u32 256, 8
        %3561 = vbcast.lane.b32.xlu0 %v3555, %s3560
        %v3562 = vpop.permute.xlu0 %3561
        %s3564 = sor.u32 256, 16
        %3565 = vbcast.lane.b32.xlu0 %v3555, %s3564
        %v3566 = vpop.permute.xlu0 %3565
        %s3568 = sor.u32 256, 24
        %3569 = vbcast.lane.b32.xlu0 %v3555, %s3568
        %v3570 = vpop.permute.xlu0 %3569
        %s3572 = sor.u32 256, 32
        %3573 = vbcast.lane.b32.xlu0 %v3555, %s3572
        %v3574 = vpop.permute.xlu0 %3573
        %s3576 = sor.u32 256, 40
        %3577 = vbcast.lane.b32.xlu0 %v3555, %s3576
        %v3578 = vpop.permute.xlu0 %3577
        %s3580 = sor.u32 256, 48
        %3581 = vbcast.lane.b32.xlu0 %v3555, %s3580
        %v3582 = vpop.permute.xlu0 %3581
        %s3584 = sor.u32 256, 56
        %3585 = vbcast.lane.b32.xlu0 %v3555, %s3584
        %v3586 = vpop.permute.xlu0 %3585
        %v3587 = vlaneseq
        %v3588 = vshrl.u32 %v3587, 7
        %v3589 = vsub.s32 4, %v3588
        %v3590 = vrot.slane %v3382, %v3589
        %3592 = vbcast.lane.b32.xlu0 %v3590, 256
        %v3593 = vpop.permute.xlu0 %3592
        %s3595 = sor.u32 256, 8
        %3596 = vbcast.lane.b32.xlu0 %v3590, %s3595
        %v3597 = vpop.permute.xlu0 %3596
        %s3599 = sor.u32 256, 16
        %3600 = vbcast.lane.b32.xlu0 %v3590, %s3599
        %v3601 = vpop.permute.xlu0 %3600
        %s3603 = sor.u32 256, 24
        %3604 = vbcast.lane.b32.xlu0 %v3590, %s3603
        %v3605 = vpop.permute.xlu0 %3604
        %s3607 = sor.u32 256, 32
        %3608 = vbcast.lane.b32.xlu0 %v3590, %s3607
        %v3609 = vpop.permute.xlu0 %3608
        %s3611 = sor.u32 256, 40
        %3612 = vbcast.lane.b32.xlu0 %v3590, %s3611
        %v3613 = vpop.permute.xlu0 %3612
        %s3615 = sor.u32 256, 48
        %3616 = vbcast.lane.b32.xlu0 %v3590, %s3615
        %v3617 = vpop.permute.xlu0 %3616
        %s3619 = sor.u32 256, 56
        %3620 = vbcast.lane.b32.xlu0 %v3590, %s3619
        %v3621 = vpop.permute.xlu0 %3620
        %v3622 = vlaneseq
        %v3623 = vshrl.u32 %v3622, 7
        %v3624 = vsub.s32 5, %v3623
        %v3625 = vrot.slane %v3382, %v3624
        %3627 = vbcast.lane.b32.xlu0 %v3625, 256
        %v3628 = vpop.permute.xlu0 %3627
        %s3630 = sor.u32 256, 8
        %3631 = vbcast.lane.b32.xlu0 %v3625, %s3630
        %v3632 = vpop.permute.xlu0 %3631
        %s3634 = sor.u32 256, 16
        %3635 = vbcast.lane.b32.xlu0 %v3625, %s3634
        %v3636 = vpop.permute.xlu0 %3635
        %s3638 = sor.u32 256, 24
        %3639 = vbcast.lane.b32.xlu0 %v3625, %s3638
        %v3640 = vpop.permute.xlu0 %3639
        %s3642 = sor.u32 256, 32
        %3643 = vbcast.lane.b32.xlu0 %v3625, %s3642
        %v3644 = vpop.permute.xlu0 %3643
        %s3646 = sor.u32 256, 40
        %3647 = vbcast.lane.b32.xlu0 %v3625, %s3646
        %v3648 = vpop.permute.xlu0 %3647
        %s3650 = sor.u32 256, 48
        %3651 = vbcast.lane.b32.xlu0 %v3625, %s3650
        %v3652 = vpop.permute.xlu0 %3651
        %s3654 = sor.u32 256, 56
        %3655 = vbcast.lane.b32.xlu0 %v3625, %s3654
        %v3656 = vpop.permute.xlu0 %3655
        %v3657 = vlaneseq
        %v3658 = vshrl.u32 %v3657, 7
        %v3659 = vsub.s32 6, %v3658
        %v3660 = vrot.slane %v3382, %v3659
        %3662 = vbcast.lane.b32.xlu0 %v3660, 256
        %v3663 = vpop.permute.xlu0 %3662
        %s3665 = sor.u32 256, 8
        %3666 = vbcast.lane.b32.xlu0 %v3660, %s3665
        %v3667 = vpop.permute.xlu0 %3666
        %s3669 = sor.u32 256, 16
        %3670 = vbcast.lane.b32.xlu0 %v3660, %s3669
        %v3671 = vpop.permute.xlu0 %3670
        %s3673 = sor.u32 256, 24
        %3674 = vbcast.lane.b32.xlu0 %v3660, %s3673
        %v3675 = vpop.permute.xlu0 %3674
        %s3677 = sor.u32 256, 32
        %3678 = vbcast.lane.b32.xlu0 %v3660, %s3677
        %v3679 = vpop.permute.xlu0 %3678
        %s3681 = sor.u32 256, 40
        %3682 = vbcast.lane.b32.xlu0 %v3660, %s3681
        %v3683 = vpop.permute.xlu0 %3682
        %s3685 = sor.u32 256, 48
        %3686 = vbcast.lane.b32.xlu0 %v3660, %s3685
        %v3687 = vpop.permute.xlu0 %3686
        %s3689 = sor.u32 256, 56
        %3690 = vbcast.lane.b32.xlu0 %v3660, %s3689
        %v3691 = vpop.permute.xlu0 %3690
        %v3692 = vlaneseq
        %v3693 = vshrl.u32 %v3692, 7
        %v3694 = vsub.s32 7, %v3693
        %v3695 = vrot.slane %v3382, %v3694
        %3697 = vbcast.lane.b32.xlu0 %v3695, 256
        %v3698 = vpop.permute.xlu0 %3697
        %s3700 = sor.u32 256, 8
        %3701 = vbcast.lane.b32.xlu0 %v3695, %s3700
        %v3702 = vpop.permute.xlu0 %3701
        %s3704 = sor.u32 256, 16
        %3705 = vbcast.lane.b32.xlu0 %v3695, %s3704
        %v3706 = vpop.permute.xlu0 %3705
        %s3708 = sor.u32 256, 24
        %3709 = vbcast.lane.b32.xlu0 %v3695, %s3708
        %v3710 = vpop.permute.xlu0 %3709
        %s3712 = sor.u32 256, 32
        %3713 = vbcast.lane.b32.xlu0 %v3695, %s3712
        %v3714 = vpop.permute.xlu0 %3713
        %s3716 = sor.u32 256, 40
        %3717 = vbcast.lane.b32.xlu0 %v3695, %s3716
        %v3718 = vpop.permute.xlu0 %3717
        %s3720 = sor.u32 256, 48
        %3721 = vbcast.lane.b32.xlu0 %v3695, %s3720
        %v3722 = vpop.permute.xlu0 %3721
        %s3724 = sor.u32 256, 56
        %3725 = vbcast.lane.b32.xlu0 %v3695, %s3724
        %v3726 = vpop.permute.xlu0 %3725
        %v3727 = vmul.f32 %v3383, %v3453
        %v3728 = vmul.f32 %v3384, %v3457
        %v3729 = vmul.f32 %v3385, %v3461
        %v3730 = vmul.f32 %v3386, %v3465
        %v3731 = vmul.f32 %v3387, %v3469
        %v3732 = vmul.f32 %v3388, %v3473
        %v3733 = vmul.f32 %v3389, %v3477
        %v3734 = vmul.f32 %v3390, %v3481
        %v3735 = vmul.f32 %v3391, %v3488
        %v3736 = vmul.f32 %v3392, %v3492
        %v3737 = vmul.f32 %v3393, %v3496
        %v3738 = vmul.f32 %v3394, %v3500
        %v3739 = vmul.f32 %v3395, %v3504
        %v3740 = vmul.f32 %v3396, %v3508
        %v3741 = vmul.f32 %v3397, %v3512
        %v3742 = vmul.f32 %v3398, %v3516
        %v3743 = vmul.f32 %v3399, %v3523
        %v3744 = vmul.f32 %v3400, %v3527
        %v3745 = vmul.f32 %v3401, %v3531
        %v3746 = vmul.f32 %v3402, %v3535
        %v3747 = vmul.f32 %v3403, %v3539
        %v3748 = vmul.f32 %v3404, %v3543
        %v3749 = vmul.f32 %v3405, %v3547
        %v3750 = vmul.f32 %v3406, %v3551
        %v3751 = vmul.f32 %v3407, %v3558
        %v3752 = vmul.f32 %v3408, %v3562
        %v3753 = vmul.f32 %v3409, %v3566
        %v3754 = vmul.f32 %v3410, %v3570
        %v3755 = vmul.f32 %v3411, %v3574
        %v3756 = vmul.f32 %v3412, %v3578
        %v3757 = vmul.f32 %v3413, %v3582
        %v3758 = vmul.f32 %v3414, %v3586
        %v3759 = vmul.f32 %v3415, %v3593
        %v3760 = vmul.f32 %v3416, %v3597
        %v3761 = vmul.f32 %v3417, %v3601
        %v3762 = vmul.f32 %v3418, %v3605
        %v3763 = vmul.f32 %v3419, %v3609
        %v3764 = vmul.f32 %v3420, %v3613
        %v3765 = vmul.f32 %v3421, %v3617
        %v3766 = vmul.f32 %v3422, %v3621
        %v3767 = vmul.f32 %v3423, %v3628
        %v3768 = vmul.f32 %v3424, %v3632
        %v3769 = vmul.f32 %v3425, %v3636
        %v3770 = vmul.f32 %v3426, %v3640
        %v3771 = vmul.f32 %v3427, %v3644
        %v3772 = vmul.f32 %v3428, %v3648
        %v3773 = vmul.f32 %v3429, %v3652
        %v3774 = vmul.f32 %v3430, %v3656
        %v3775 = vmul.f32 %v3431, %v3663
        %v3776 = vmul.f32 %v3432, %v3667
        %v3777 = vmul.f32 %v3433, %v3671
        %v3778 = vmul.f32 %v3434, %v3675
        %v3779 = vmul.f32 %v3435, %v3679
        %v3780 = vmul.f32 %v3436, %v3683
        %v3781 = vmul.f32 %v3437, %v3687
        %v3782 = vmul.f32 %v3438, %v3691
        %v3783 = vmul.f32 %v3439, %v3698
        %v3784 = vmul.f32 %v3440, %v3702
        %v3785 = vmul.f32 %v3441, %v3706
        %v3786 = vmul.f32 %v3442, %v3710
        %v3787 = vmul.f32 %v3443, %v3714
        %v3788 = vmul.f32 %v3444, %v3718
        %v3789 = vmul.f32 %v3445, %v3722
        %v3790 = vmul.f32 %v3446, %v3726
        %v3791 = vsel %vm1389, %v3727, 0.0
        %v3792 = vsel %vm1389, %v3728, 0.0
        %v3793 = vadd.f32 %v3791, %v3792
        %v3794 = vsel %vm1389, %v3729, 0.0
        %v3795 = vadd.f32 %v3793, %v3794
        %v3796 = vsel %vm1389, %v3730, 0.0
        %v3797 = vadd.f32 %v3795, %v3796
        %v3798 = vsel %vm1389, %v3731, 0.0
        %v3799 = vadd.f32 %v3797, %v3798
        %v3800 = vsel %vm1389, %v3732, 0.0
        %v3801 = vadd.f32 %v3799, %v3800
        %v3802 = vsel %vm1389, %v3733, 0.0
        %v3803 = vadd.f32 %v3801, %v3802
        %v3804 = vsel %vm1389, %v3734, 0.0
        %v3805 = vadd.f32 %v3803, %v3804
        %v3806 = vrot.slane %v3805, 4
        %v3807 = vadd.f32 %v3805, %v3806
        %v3808 = vrot.slane %v3807, 2
        %v3809 = vadd.f32 %v3807, %v3808
        %v3810 = vrot.slane %v3809, 1
        %v3811 = vadd.f32 %v3809, %v3810
        %v3812 = vsel %vm1389, %v3735, 0.0
        %v3813 = vsel %vm1389, %v3736, 0.0
        %v3814 = vadd.f32 %v3812, %v3813
        %v3815 = vsel %vm1389, %v3737, 0.0
        %v3816 = vadd.f32 %v3814, %v3815
        %v3817 = vsel %vm1389, %v3738, 0.0
        %v3818 = vadd.f32 %v3816, %v3817
        %v3819 = vsel %vm1389, %v3739, 0.0
        %v3820 = vadd.f32 %v3818, %v3819
        %v3821 = vsel %vm1389, %v3740, 0.0
        %v3822 = vadd.f32 %v3820, %v3821
        %v3823 = vsel %vm1389, %v3741, 0.0
        %v3824 = vadd.f32 %v3822, %v3823
        %v3825 = vsel %vm1389, %v3742, 0.0
        %v3826 = vadd.f32 %v3824, %v3825
        %v3827 = vrot.slane %v3826, 4
        %v3828 = vadd.f32 %v3826, %v3827
        %v3829 = vrot.slane %v3828, 2
        %v3830 = vadd.f32 %v3828, %v3829
        %v3831 = vrot.slane %v3830, 1
        %v3832 = vadd.f32 %v3830, %v3831
        %v3833 = vsel %vm1389, %v3743, 0.0
        %v3834 = vsel %vm1389, %v3744, 0.0
        %v3835 = vadd.f32 %v3833, %v3834
        %v3836 = vsel %vm1389, %v3745, 0.0
        %v3837 = vadd.f32 %v3835, %v3836
        %v3838 = vsel %vm1389, %v3746, 0.0
        %v3839 = vadd.f32 %v3837, %v3838
        %v3840 = vsel %vm1389, %v3747, 0.0
        %v3841 = vadd.f32 %v3839, %v3840
        %v3842 = vsel %vm1389, %v3748, 0.0
        %v3843 = vadd.f32 %v3841, %v3842
        %v3844 = vsel %vm1389, %v3749, 0.0
        %v3845 = vadd.f32 %v3843, %v3844
        %v3846 = vsel %vm1389, %v3750, 0.0
        %v3847 = vadd.f32 %v3845, %v3846
        %v3848 = vrot.slane %v3847, 4
        %v3849 = vadd.f32 %v3847, %v3848
        %v3850 = vrot.slane %v3849, 2
        %v3851 = vadd.f32 %v3849, %v3850
        %v3852 = vrot.slane %v3851, 1
        %v3853 = vadd.f32 %v3851, %v3852
        %v3854 = vsel %vm1389, %v3751, 0.0
        %v3855 = vsel %vm1389, %v3752, 0.0
        %v3856 = vadd.f32 %v3854, %v3855
        %v3857 = vsel %vm1389, %v3753, 0.0
        %v3858 = vadd.f32 %v3856, %v3857
        %v3859 = vsel %vm1389, %v3754, 0.0
        %v3860 = vadd.f32 %v3858, %v3859
        %v3861 = vsel %vm1389, %v3755, 0.0
        %v3862 = vadd.f32 %v3860, %v3861
        %v3863 = vsel %vm1389, %v3756, 0.0
        %v3864 = vadd.f32 %v3862, %v3863
        %v3865 = vsel %vm1389, %v3757, 0.0
        %v3866 = vadd.f32 %v3864, %v3865
        %v3867 = vsel %vm1389, %v3758, 0.0
        %v3868 = vadd.f32 %v3866, %v3867
        %v3869 = vrot.slane %v3868, 4
        %v3870 = vadd.f32 %v3868, %v3869
        %v3871 = vrot.slane %v3870, 2
        %v3872 = vadd.f32 %v3870, %v3871
        %v3873 = vrot.slane %v3872, 1
        %v3874 = vadd.f32 %v3872, %v3873
        %v3875 = vsel %vm1389, %v3759, 0.0
        %v3876 = vsel %vm1389, %v3760, 0.0
        %v3877 = vadd.f32 %v3875, %v3876
        %v3878 = vsel %vm1389, %v3761, 0.0
        %v3879 = vadd.f32 %v3877, %v3878
        %v3880 = vsel %vm1389, %v3762, 0.0
        %v3881 = vadd.f32 %v3879, %v3880
        %v3882 = vsel %vm1389, %v3763, 0.0
        %v3883 = vadd.f32 %v3881, %v3882
        %v3884 = vsel %vm1389, %v3764, 0.0
        %v3885 = vadd.f32 %v3883, %v3884
        %v3886 = vsel %vm1389, %v3765, 0.0
        %v3887 = vadd.f32 %v3885, %v3886
        %v3888 = vsel %vm1389, %v3766, 0.0
        %v3889 = vadd.f32 %v3887, %v3888
        %v3890 = vrot.slane %v3889, 4
        %v3891 = vadd.f32 %v3889, %v3890
        %v3892 = vrot.slane %v3891, 2
        %v3893 = vadd.f32 %v3891, %v3892
        %v3894 = vrot.slane %v3893, 1
        %v3895 = vadd.f32 %v3893, %v3894
        %v3896 = vsel %vm1389, %v3767, 0.0
        %v3897 = vsel %vm1389, %v3768, 0.0
        %v3898 = vadd.f32 %v3896, %v3897
        %v3899 = vsel %vm1389, %v3769, 0.0
        %v3900 = vadd.f32 %v3898, %v3899
        %v3901 = vsel %vm1389, %v3770, 0.0
        %v3902 = vadd.f32 %v3900, %v3901
        %v3903 = vsel %vm1389, %v3771, 0.0
        %v3904 = vadd.f32 %v3902, %v3903
        %v3905 = vsel %vm1389, %v3772, 0.0
        %v3906 = vadd.f32 %v3904, %v3905
        %v3907 = vsel %vm1389, %v3773, 0.0
        %v3908 = vadd.f32 %v3906, %v3907
        %v3909 = vsel %vm1389, %v3774, 0.0
        %v3910 = vadd.f32 %v3908, %v3909
        %v3911 = vrot.slane %v3910, 4
        %v3912 = vadd.f32 %v3910, %v3911
        %v3913 = vrot.slane %v3912, 2
        %v3914 = vadd.f32 %v3912, %v3913
        %v3915 = vrot.slane %v3914, 1
        %v3916 = vadd.f32 %v3914, %v3915
        %v3917 = vsel %vm1389, %v3775, 0.0
        %v3918 = vsel %vm1389, %v3776, 0.0
        %v3919 = vadd.f32 %v3917, %v3918
        %v3920 = vsel %vm1389, %v3777, 0.0
        %v3921 = vadd.f32 %v3919, %v3920
        %v3922 = vsel %vm1389, %v3778, 0.0
        %v3923 = vadd.f32 %v3921, %v3922
        %v3924 = vsel %vm1389, %v3779, 0.0
        %v3925 = vadd.f32 %v3923, %v3924
        %v3926 = vsel %vm1389, %v3780, 0.0
        %v3927 = vadd.f32 %v3925, %v3926
        %v3928 = vsel %vm1389, %v3781, 0.0
        %v3929 = vadd.f32 %v3927, %v3928
        %v3930 = vsel %vm1389, %v3782, 0.0
        %v3931 = vadd.f32 %v3929, %v3930
        %v3932 = vrot.slane %v3931, 4
        %v3933 = vadd.f32 %v3931, %v3932
        %v3934 = vrot.slane %v3933, 2
        %v3935 = vadd.f32 %v3933, %v3934
        %v3936 = vrot.slane %v3935, 1
        %v3937 = vadd.f32 %v3935, %v3936
        %v3938 = vsel %vm1389, %v3783, 0.0
        %v3939 = vsel %vm1389, %v3784, 0.0
        %v3940 = vadd.f32 %v3938, %v3939
        %v3941 = vsel %vm1389, %v3785, 0.0
        %v3942 = vadd.f32 %v3940, %v3941
        %v3943 = vsel %vm1389, %v3786, 0.0
        %v3944 = vadd.f32 %v3942, %v3943
        %v3945 = vsel %vm1389, %v3787, 0.0
        %v3946 = vadd.f32 %v3944, %v3945
        %v3947 = vsel %vm1389, %v3788, 0.0
        %v3948 = vadd.f32 %v3946, %v3947
        %v3949 = vsel %vm1389, %v3789, 0.0
        %v3950 = vadd.f32 %v3948, %v3949
        %v3951 = vsel %vm1389, %v3790, 0.0
        %v3952 = vadd.f32 %v3950, %v3951
        %v3953 = vrot.slane %v3952, 4
        %v3954 = vadd.f32 %v3952, %v3953
        %v3955 = vrot.slane %v3954, 2
        %v3956 = vadd.f32 %v3954, %v3955
        %v3957 = vrot.slane %v3956, 1
        %v3958 = vadd.f32 %v3956, %v3957
        %v3959 = vld [vmem:[%s477] sm:$0xff]
        %v3961 = vrot.slane %v3959, 1
        %v3962 = vrot.slane %v3959, 2
        %v3963 = vrot.slane %v3959, 3
        %v3964 = vrot.slane %v3959, 4
        %v3965 = vrot.slane %v3959, 5
        %v3966 = vrot.slane %v3959, 6
        %v3967 = vrot.slane %v3959, 7
        %v3976 = vmul.f32 %v3811, %v3959
        %v3977 = vmul.f32 %v3832, %v3961
        %v3978 = vmul.f32 %v3853, %v3962
        %v3979 = vmul.f32 %v3874, %v3963
        %v3980 = vmul.f32 %v3895, %v3964
        %v3981 = vmul.f32 %v3916, %v3965
        %v3982 = vmul.f32 %v3937, %v3966
        %v3983 = vmul.f32 %v3958, %v3967
        %v3992 = vrot.slane %v3977, 7
        %v3993 = vsel %vm1592, %v3992, %v3976
        %v3994 = vrot.slane %v3978, 6
        %v3995 = vsel %vm1595, %v3994, %v3993
        %v3996 = vrot.slane %v3979, 5
        %v3997 = vsel %vm1598, %v3996, %v3995
        %v3998 = vrot.slane %v3980, 4
        %v3999 = vsel %vm1601, %v3998, %v3997
        %v4000 = vrot.slane %v3981, 3
        %v4001 = vsel %vm1604, %v4000, %v3999
        %v4002 = vrot.slane %v3982, 2
        %v4003 = vsel %vm1607, %v4002, %v4001
        %v4004 = vrot.slane %v3983, 1
        %v4005 = vsel %vm1610, %v4004, %v4003
        %s4007 = scalar_lea.vmem %s462, 16 [#allocation6]
        %4008 = vst.msk [vmem:[%s4007] sm:$0xff] %vm1389, %v4005
        %v4009 = vld [vmem:[%s1] sm:$0xff]
        %v4010 = vld [vmem:[%s1 + $0x8] sm:$0xff]
        %v4011 = vld [vmem:[%s1 + $0x10] sm:$0xff]
        %v4012 = vld [vmem:[%s1 + $0x18] sm:$0xff]
        %v4013 = vld [vmem:[%s1 + $0x20] sm:$0xff]
        %v4014 = vld [vmem:[%s1 + $0x28] sm:$0xff]
        %v4015 = vld [vmem:[%s1 + $0x30] sm:$0xff]
        %v4016 = vld [vmem:[%s1 + $0x38] sm:$0xff]
        %v4018 = vsel %vm595, %v3382, 0
        %4020 = vmatprep.subr.mxu0 0.0
        %4021 = vmatpush1.msra.mxu0 %v4009
        %4022 = vmatprep.subr.mxu0 0.0
        %4023 = vmatpush1.msra.mxu0 %v4010
        %4024 = vmatprep.subr.mxu0 0.0
        %4025 = vmatpush1.msra.mxu0 %v4011
        %4026 = vmatprep.subr.mxu0 0.0
        %4027 = vmatpush1.msra.mxu0 %v4012
        %4028 = vmatprep.subr.mxu0 0.0
        %4029 = vmatpush1.msra.mxu0 %v4013
        %4030 = vmatprep.subr.mxu0 0.0
        %4031 = vmatpush1.msra.mxu0 %v4014
        %4032 = vmatprep.subr.mxu0 0.0
        %4033 = vmatpush1.msra.mxu0 %v4015
        %4034 = vmatprep.subr.mxu0 0.0
        %4035 = vmatpush1.msra.mxu0 %v4016
        %4036 = vmatprep.subr.mxu0 0.0
        %4037 = vmatpush1.msra.mxu0 0.0
        %4038 = vmatprep.subr.mxu0 0.0
        %4039 = vmatpush1.msra.mxu0 0.0
        %4040 = vmatprep.subr.mxu0 0.0
        %4041 = vmatpush1.msra.mxu0 0.0
        %4042 = vmatprep.subr.mxu0 0.0
        %4043 = vmatpush1.msra.mxu0 0.0
        %4044 = vmatprep.subr.mxu0 0.0
        %4045 = vmatpush1.msra.mxu0 0.0
        %4046 = vmatprep.subr.mxu0 0.0
        %4047 = vmatpush1.msra.mxu0 0.0
        %4048 = vmatprep.subr.mxu0 0.0
        %4049 = vmatpush1.msra.mxu0 0.0
        %4050 = vmatprep.subr.mxu0 0.0
        %4051 = vmatpush1.msra.mxu0 0.0
        %4052 = vmatprep.subr.mxu0 0.0
        %4053 = vmatpush1.msra.mxu0 0.0
        %4054 = vmatprep.subr.mxu0 0.0
        %4055 = vmatpush1.msra.mxu0 0.0
        %4056 = vmatprep.subr.mxu0 0.0
        %4057 = vmatpush1.msra.mxu0 0.0
        %4058 = vmatprep.subr.mxu0 0.0
        %4059 = vmatpush1.msra.mxu0 0.0
        %4060 = vmatprep.subr.mxu0 0.0
        %4061 = vmatpush1.msra.mxu0 0.0
        %4062 = vmatprep.subr.mxu0 0.0
        %4063 = vmatpush1.msra.mxu0 0.0
        %4064 = vmatprep.subr.mxu0 0.0
        %4065 = vmatpush1.msra.mxu0 0.0
        %4066 = vmatprep.subr.mxu0 0.0
        %4067 = vmatpush1.msra.mxu0 0.0
        %4068 = vmatprep.subr.mxu0 0.0
        %4069 = vmatpush1.msra.mxu0 0.0
        %4070 = vmatprep.subr.mxu0 0.0
        %4071 = vmatpush1.msra.mxu0 0.0
        %4072 = vmatprep.subr.mxu0 0.0
        %4073 = vmatpush1.msra.mxu0 0.0
        %4074 = vmatprep.subr.mxu0 0.0
        %4075 = vmatpush1.msra.mxu0 0.0
        %4076 = vmatprep.subr.mxu0 0.0
        %4077 = vmatpush1.msra.mxu0 0.0
        %4078 = vmatprep.subr.mxu0 0.0
        %4079 = vmatpush1.msra.mxu0 0.0
        %4080 = vmatprep.subr.mxu0 0.0
        %4081 = vmatpush1.msra.mxu0 0.0
        %4082 = vmatprep.subr.mxu0 0.0
        %4083 = vmatpush1.msra.mxu0 0.0
        %4084 = vmatprep.mubr.f32.mxu0 0.0
        %4085 = vmatmul.mubr.f32.gmra.mrb[0].mxu0 %v4018
        %v4086 = vpop.f32.mrb[0].mxu0
        %v4087 = vadd.f32 0.0, %v4086
        %v4088 = vpop.f32.mrb[0].mxu0
        %4089 = vdwg.mxu0
        %s4090 = scalar_lea.vmem %s455, 16 [#allocation4]
        %4091 = vst [vmem:[%s4090] sm:$0xff] %v4087
        %4092 = vmax.xlane.f32.xlu0 %v4087
        %v4093 = vpop.xlane.xlu0 %4092
        %vm4094 = vcmp.eq.f32.partialorder %v4087, %v4093
        %v4095 = vsel %vm4094, %v481, 128
        %v4096 = vand.u32 %v4095, 65535
        %v4097 = vshra.s32 %v4095, 16
        %v4098 = vcvt.s32.f32 %v4096
        %v4099 = vcvt.s32.f32 %v4097
        %4100 = vmin.xlane.f32.xlu0 %v4099
        %v4101 = vpop.xlane.xlu0 %4100
        %vm4102 = vcmp.eq.f32.partialorder %v4099, %v4101
        %v4103 = vsel %vm4102, %v4098, inf
        %4104 = vmin.xlane.f32.xlu0 %v4103
        %v4105 = vpop.xlane.xlu0 %4104
        %v4106 = vcvt.f32.s32 %v4105
        %v4107 = vcvt.f32.s32 %v4101
        %v4108 = vshll.u32 %v4107, 16
        %v4109 = vadd.s32 %v4108, %v4106
        %vm4110 = vcmp.eq.s32.totalorder %v481, %v4109
        %v4111 = vsel %vm4110, 1, 0
        %v4112 = vcvt.s32.f32 %v4111
        %v4113 = vld [vmem:[%s0] sm:$0xff]
        %v4114 = vld [vmem:[%s0 + $0x8] sm:$0xff]
        %v4115 = vld [vmem:[%s0 + $0x10] sm:$0xff]
        %v4116 = vld [vmem:[%s0 + $0x18] sm:$0xff]
        %v4117 = vld [vmem:[%s0 + $0x20] sm:$0xff]
        %v4118 = vld [vmem:[%s0 + $0x28] sm:$0xff]
        %v4119 = vld [vmem:[%s0 + $0x30] sm:$0xff]
        %v4120 = vld [vmem:[%s0 + $0x38] sm:$0xff]
        %v4121 = vld [vmem:[%s0 + $0x40] sm:$0xff]
        %v4122 = vld [vmem:[%s0 + $0x48] sm:$0xff]
        %v4123 = vld [vmem:[%s0 + $0x50] sm:$0xff]
        %v4124 = vld [vmem:[%s0 + $0x58] sm:$0xff]
        %v4125 = vld [vmem:[%s0 + $0x60] sm:$0xff]
        %v4126 = vld [vmem:[%s0 + $0x68] sm:$0xff]
        %v4127 = vld [vmem:[%s0 + $0x70] sm:$0xff]
        %v4128 = vld [vmem:[%s0 + $0x78] sm:$0xff]
        %4129 = vmatprep.subr.mxu0 0.0
        %4130 = vmatpush1.msra.mxu0 %v4113
        %4131 = vmatprep.subr.mxu0 0.0
        %4132 = vmatpush1.msra.mxu0 %v4114
        %4133 = vmatprep.subr.mxu0 0.0
        %4134 = vmatpush1.msra.mxu0 %v4115
        %4135 = vmatprep.subr.mxu0 0.0
        %4136 = vmatpush1.msra.mxu0 %v4116
        %4137 = vmatprep.subr.mxu0 0.0
        %4138 = vmatpush1.msra.mxu0 %v4117
        %4139 = vmatprep.subr.mxu0 0.0
        %4140 = vmatpush1.msra.mxu0 %v4118
        %4141 = vmatprep.subr.mxu0 0.0
        %4142 = vmatpush1.msra.mxu0 %v4119
        %4143 = vmatprep.subr.mxu0 0.0
        %4144 = vmatpush1.msra.mxu0 %v4120
        %4145 = vmatprep.subr.mxu0 0.0
        %4146 = vmatpush1.msra.mxu0 %v4121
        %4147 = vmatprep.subr.mxu0 0.0
        %4148 = vmatpush1.msra.mxu0 %v4122
        %4149 = vmatprep.subr.mxu0 0.0
        %4150 = vmatpush1.msra.mxu0 %v4123
        %4151 = vmatprep.subr.mxu0 0.0
        %4152 = vmatpush1.msra.mxu0 %v4124
        %4153 = vmatprep.subr.mxu0 0.0
        %4154 = vmatpush1.msra.mxu0 %v4125
        %4155 = vmatprep.subr.mxu0 0.0
        %4156 = vmatpush1.msra.mxu0 %v4126
        %4157 = vmatprep.subr.mxu0 0.0
        %4158 = vmatpush1.msra.mxu0 %v4127
        %4159 = vmatprep.subr.mxu0 0.0
        %4160 = vmatpush1.msra.mxu0 %v4128
        %4161 = vmatprep.subr.mxu0 0.0
        %4162 = vmatpush1.msra.mxu0 0.0
        %4163 = vmatprep.subr.mxu0 0.0
        %4164 = vmatpush1.msra.mxu0 0.0
        %4165 = vmatprep.subr.mxu0 0.0
        %4166 = vmatpush1.msra.mxu0 0.0
        %4167 = vmatprep.subr.mxu0 0.0
        %4168 = vmatpush1.msra.mxu0 0.0
        %4169 = vmatprep.subr.mxu0 0.0
        %4170 = vmatpush1.msra.mxu0 0.0
        %4171 = vmatprep.subr.mxu0 0.0
        %4172 = vmatpush1.msra.mxu0 0.0
        %4173 = vmatprep.subr.mxu0 0.0
        %4174 = vmatpush1.msra.mxu0 0.0
        %4175 = vmatprep.subr.mxu0 0.0
        %4176 = vmatpush1.msra.mxu0 0.0
        %4177 = vmatprep.subr.mxu0 0.0
        %4178 = vmatpush1.msra.mxu0 0.0
        %4179 = vmatprep.subr.mxu0 0.0
        %4180 = vmatpush1.msra.mxu0 0.0
        %4181 = vmatprep.subr.mxu0 0.0
        %4182 = vmatpush1.msra.mxu0 0.0
        %4183 = vmatprep.subr.mxu0 0.0
        %4184 = vmatpush1.msra.mxu0 0.0
        %4185 = vmatprep.subr.mxu0 0.0
        %4186 = vmatpush1.msra.mxu0 0.0
        %4187 = vmatprep.subr.mxu0 0.0
        %4188 = vmatpush1.msra.mxu0 0.0
        %4189 = vmatprep.subr.mxu0 0.0
        %4190 = vmatpush1.msra.mxu0 0.0
        %4191 = vmatprep.subr.mxu0 0.0
        %4192 = vmatpush1.msra.mxu0 0.0
        %4193 = vmatprep.mubr.f32.mxu0 0.0
        %4194 = vmatmul.mubr.f32.gmra.mrb[0].mxu0 %v4112
        %v4195 = vpop.f32.mrb[0].mxu0
        %v4196 = vadd.f32 0.0, %v4195
        %v4197 = vpop.f32.mrb[0].mxu0
        %4198 = vdwg.mxu0
        %4199 = vst.msk [vmem:[#allocation2] sm:$0xff] %vm595, %v4196
        %4200 = vst.msk [vmem:[#allocation3] sm:$0xff] %vm595, %v3382
        %s4201 = sand.u32 %s298, 1
        %s4202 = scalar_lea.sflag [#allocation5], %s4201
        %s4203 = sand.u32 %s298, 1
        %s4204 = smul.addr %s4203, 24
        %s4205 = scalar_lea.vmem [#allocation4], %s4204
        %s4206 = sand.u32 %s326, 1
        %s4207 = scalar_lea.sflag [#allocation7], %s4206
        %s4208 = sand.u32 %s326, 1
        %s4209 = smul.addr %s4208, 24
        %s4210 = scalar_lea.vmem [#allocation6], %s4209
        // Predicated region
        $region69: #{tpu_custom_call.1} parent=63 // pred_check
          %p4211 = pneg %p308
        $region70: #{tpu_custom_call.1} parent=63 // pred_check_branch
          %4213 = sbr.rel (%p4211) target = $region72
        $region71: #{tpu_custom_call.1} parent=63 // pred_region
          %s4214 = smul.u32 3, %s35
          %s4216 = ssub.s32 384, 384
          %4217 = vsyncadd %s4202, %s4216
          %s4218 = sadd.s32 %s34, %s4214
          %s4219 = smul.addr %s4218, 128
          %s4220 = scalar_lea.hbm %s11, %s4219
          %s4221 = sshll.u32 %s4205, 4
          %s4222 = int_to_ptr.vmem [resolvable:$true] %s4221
          %4227 = dma.vmem_to_hbm [thread:$0]  %s4222, 384, %s4220, %s4202, 128, 128, 8
        $region72: #{tpu_custom_call.1} parent=63 // pred_fallthru
          _
        // Predicated region
        $region73: #{tpu_custom_call.1} parent=63 // pred_check
          %p4228 = pneg %p336
        $region74: #{tpu_custom_call.1} parent=63 // pred_check_branch
          %4230 = sbr.rel (%p4228) target = $region76
        $region75: #{tpu_custom_call.1} parent=63 // pred_region
          %s4231 = smul.u32 3, %s35
          %s4233 = ssub.s32 384, 384
          %4234 = vsyncadd %s4207, %s4233
          %s4235 = sadd.s32 %s34, %s4231
          %s4236 = smul.addr %s4235, 128
          %s4237 = scalar_lea.hbm %s12, %s4236
          %s4238 = sshll.u32 %s4210, 4
          %s4239 = int_to_ptr.vmem [resolvable:$true] %s4238
          %4244 = dma.vmem_to_hbm [thread:$0]  %s4239, 384, %s4237, %s4207, 128, 128, 8
        $region76: #{tpu_custom_call.1} parent=63 // pred_fallthru
          _
      $region64: #{tpu_custom_call.1} parent=5 // pred_fallthru
        _
      %p4245 = scmp.le.s32.totalorder 2, %s25
      // Predicated region
      $region77: #{tpu_custom_call.1} parent=5 // pred_check
        %p4246 = pneg %p4245
      $region78: #{tpu_custom_call.1} parent=5 // pred_check_branch
        %4248 = sbr.rel (%p4246) target = $region80
      $region79: #{tpu_custom_call.1} parent=5 // pred_region
        %s4249 = ssub.s32 %s25, 2
        // Predicated region
        $region81: #{tpu_custom_call.1} parent=79 // pred_check
          %p4250 = pneg %p314
        $region82: #{tpu_custom_call.1} parent=79 // pred_check_branch
          %4252 = sbr.rel (%p4250) target = $region84
        $region83: #{tpu_custom_call.1} parent=79 // pred_region
          %s4253 = sand.u32 %s299, 1
          %s4254 = scalar_lea.sflag [#allocation5], %s4253
          %s4255 = sand.u32 %s299, 1
          %s4256 = smul.addr %s4255, 24
          %s4257 = scalar_lea.vmem [#allocation4], %s4256
          %4258 = dma.done %s4254, 384
        $region84: #{tpu_custom_call.1} parent=79 // pred_fallthru
          _
        // Predicated region
        $region85: #{tpu_custom_call.1} parent=79 // pred_check
          %p4259 = pneg %p342
        $region86: #{tpu_custom_call.1} parent=79 // pred_check_branch
          %4261 = sbr.rel (%p4259) target = $region88
        $region87: #{tpu_custom_call.1} parent=79 // pred_region
          %s4262 = sand.u32 %s327, 1
          %s4263 = scalar_lea.sflag [#allocation7], %s4262
          %s4264 = sand.u32 %s327, 1
          %s4265 = smul.addr %s4264, 24
          %s4266 = scalar_lea.vmem [#allocation6], %s4265
          %4267 = dma.done %s4263, 384
        $region88: #{tpu_custom_call.1} parent=79 // pred_fallthru
          _
      $region80: #{tpu_custom_call.1} parent=5 // pred_fallthru
        _
    $region6: #{tpu_custom_call.1} parent=1 // loop_footer
      %s29 = sadd.s32 1, %s25
    $region7: #{tpu_custom_call.1} parent=1 // loop_footer_branch
      %24 = sbr.rel target = $region3
    $region8: #{tpu_custom_call.1} parent=1 // loop_exit
      _
    %4268 = vsyncpa [#allocation5], 1
    %s4269 = scalar_lea.sflag [#allocation5], 1
    %4270 = vsyncpa %s4269, 1
    %4271 = vsyncpa [#allocation7], 1
    %s4272 = scalar_lea.sflag [#allocation7], 1
    %4273 = vsyncpa %s4272, 1

</llo_original>
